<compile_context>
chip_gen: v5e
topology: v5e:2x2
jax: 0.10.0
libtpu: 0.0.40
codegen_flags: <defaults>
</compile_context>

<pallas_src>
import functools

import jax
import jax.numpy as jnp
from jax.experimental import pallas as pl
from jax.experimental.pallas import tpu as pltpu

_LANE = 128


def _round_up(x, m):
    return (x + m - 1) // m * m


def _pick_row_tile(m, d_pad, k_pad):
    """Row tile: big (amortize grid-step overhead) but VMEM-safe and >=2 tiles."""
    budget = 24 * 1024 * 1024  # x+q double-buffered + (tm,Kp) intermediates
    tm = min(1024, _round_up(m, 8))
    while tm > 128 and 4 * tm * (4 * d_pad + 2 * k_pad) > budget:
        tm //= 2
    tm = max(8, _round_up(tm, 8))
    # Keep at least 2 grid steps: the grid axis is the only "parallel" axis and
    # v7x shards it across its 2 TensorCores (neutral on v5e/v6e).
    if _round_up(m, tm) == tm and m > 8:
        tm = _round_up((m + 1) // 2, 8)
    return tm


def _vq_kernel(x_ref, w_ref, w2h_ref, q_ref, idx_ref, part_ref, *,
               tm, valid_rows, use_bf16):
    i = pl.program_id(0)

    x = x_ref[...]            # (tm, Dp)  f32, zero-padded rows/cols
    w = w_ref[...]            # (Kp, Dp)  f32 codebook (padded code rows are 0)
    w2h = w2h_ref[...]        # (1, Kp)   0.5*||w_k||^2, +inf on padded codes
    kp = w_ref.shape[0]

    # Distance surrogate for argmin: the per-row ||x||^2 term is constant over
    # K and dropped; the -2 factor is folded into the precomputed 0.5*||w||^2:
    #   d_k  ∝  0.5*||w_k||^2 - x . w_k
    # Single codebook copy: contract the last dims (x @ w^T) on the MXU.
    if use_bf16:
        xw = jax.lax.dot_general(
            x.astype(jnp.bfloat16), w.astype(jnp.bfloat16),
            (((1,), (1,)), ((), ())), preferred_element_type=jnp.float32)
    else:
        xw = jax.lax.dot_general(
            x, w, (((1,), (1,)), ((), ())), preferred_element_type=jnp.float32)
    d = w2h - xw                                                   # (tm, Kp)

    # argmin along K with first-index tie-break (matches torch.argmin).
    d_min = jnp.min(d, axis=1, keepdims=True)                      # (tm, 1)
    col = jax.lax.broadcasted_iota(jnp.int32, (tm, kp), 1)
    idx = jnp.min(jnp.where(d == d_min, col, kp), axis=1, keepdims=True)

    # Rows >= valid_rows are wrapper padding.
    row = i * tm + jax.lax.broadcasted_iota(jnp.int32, (tm, 1), 0)
    valid = row < valid_rows                                       # (tm, 1)

    # One-hot (zeroed on padded rows); q = enc @ w in f32 so quantized rows are
    # exact codebook rows.
    enc = jnp.where((col == idx) & valid, 1.0, 0.0).astype(jnp.float32)
    q = jnp.dot(enc, w, preferred_element_type=jnp.float32)        # (tm, Dp)

    q_ref[...] = q
    # NOTE: idx kept as a (tm, 1) column; the lane-dense relayout is an XLU
    # transpose whose cost has not been verified in the bundle dump.
    idx_ref[...] = idx

    # Merged per-tile partial reductions (grid-indexed output, "parallel" grid):
    #   row 0          : per-code counts
    #   row 1, lane 0  : sum of squared error
    diff = q - x                                  # padded rows/cols: 0 - 0 = 0
    sqerr = jnp.sum(diff * diff)
    encsum = jnp.sum(enc, axis=0, keepdims=True)                   # (1, Kp)
    rows8 = jax.lax.broadcasted_iota(jnp.int32, (8, kp), 0)
    cols8 = jax.lax.broadcasted_iota(jnp.int32, (8, kp), 1)
    part = jnp.where(rows8 == 0, jnp.broadcast_to(encsum, (8, kp)), 0.0)
    part = jnp.where((rows8 == 1) & (cols8 == 0), sqerr, part)
    part_ref[...] = part


def _vq_pallas(flat_x, w, w2h, *, tm, valid_rows, use_bf16, single_buffer):
    m_pad, d_pad = flat_x.shape
    k_pad = w.shape[0]
    n_tiles = m_pad // tm

    def _const_spec(shape):
        # Grid-invariant operands: constant index_map; request a single VMEM
        # buffer (double-buffering them only doubles resident codebook bytes).
        if single_buffer:
            return pl.BlockSpec(shape, lambda i: (0, 0),
                                pipeline_mode=pl.Buffered(1))
        return pl.BlockSpec(shape, lambda i: (0, 0))

    out_shapes = (
        jax.ShapeDtypeStruct((m_pad, d_pad), jnp.float32),         # quantized rows
        jax.ShapeDtypeStruct((m_pad, 1), jnp.int32),               # code indices
        jax.ShapeDtypeStruct((n_tiles * 8, k_pad), jnp.float32),   # merged partials
    )

    flops = 4 * m_pad * k_pad * d_pad             # two matmuls per tile
    bytes_accessed = 4 * (2 * m_pad * d_pad + m_pad
                          + k_pad * d_pad + k_pad
                          + n_tiles * 8 * k_pad)

    kernel = functools.partial(_vq_kernel, tm=tm, valid_rows=valid_rows,
                               use_bf16=use_bf16)
    return pl.pallas_call(
        kernel,
        out_shape=out_shapes,
        grid_spec=pltpu.PrefetchScalarGridSpec(
            num_scalar_prefetch=0,
            grid=(n_tiles,),
            in_specs=[
                pl.BlockSpec((tm, d_pad), lambda i: (i, 0)),       # streamed x rows
                _const_spec((k_pad, d_pad)),                       # codebook (single copy)
                _const_spec((1, k_pad)),                           # 0.5*||w||^2
            ],
            out_specs=[
                pl.BlockSpec((tm, d_pad), lambda i: (i, 0)),
                pl.BlockSpec((tm, 1), lambda i: (i, 0)),
                pl.BlockSpec((8, k_pad), lambda i: (i, 0)),
            ],
        ),
        compiler_params=pltpu.CompilerParams(
            dimension_semantics=("parallel",),        # no cross-iteration carry
            vmem_limit_bytes=48 * 1024 * 1024,        # > 32 MiB default, <= v7x 64 MiB
        ),
        cost_estimate=pl.CostEstimate(
            flops=flops, transcendentals=0, bytes_accessed=bytes_accessed),
    )(flat_x, w, w2h)


@functools.partial(jax.jit, static_argnames=("commitment_cost",
                                             "use_bf16_distances",
                                             "single_buffer_codebook"))
def _forward_impl(x_nchw, embedding, commitment_cost, use_bf16_distances,
                  single_buffer_codebook):
    B, C, H, W = x_nchw.shape
    D = C
    K = embedding.shape[0]

    x_nhwc = jnp.transpose(x_nchw, (0, 2, 3, 1)).astype(jnp.float32)  # NCHW->NHWC
    flat = x_nhwc.reshape(-1, D)
    M = flat.shape[0]

    # Feature dim: only pad to 128 lanes when D is already >= 128.  For small D
    # pad just to the sublane multiple of 8 (legal: block last dim == full array
    # dim), avoiding a 128/D byte inflation on the dominant x read / q write.
    if D >= _LANE:
        d_pad = _round_up(D, _LANE)
    else:
        d_pad = _round_up(max(D, 1), 8)
    k_pad = _round_up(max(K, 1), _LANE)
    tm = _pick_row_tile(M, d_pad, k_pad)
    m_pad = _round_up(M, tm)

    # Zero-pad rows (M), feature dim (D) and codebook (K).
    flat_p = jnp.zeros((m_pad, d_pad), jnp.float32).at[:M, :D].set(flat)
    w_p = jnp.zeros((k_pad, d_pad), jnp.float32).at[:K, :D].set(
        embedding.astype(jnp.float32))
    # Hoisted 0.5*||w_k||^2 (the -2 factor of the expansion is folded in by
    # halving; the per-row ||x||^2 term is constant over K and dropped).
    # Padded codes get +inf so they can never win the argmin.
    w2h = 0.5 * jnp.sum(w_p * w_p, axis=1)
    w2h = jnp.where(jnp.arange(k_pad) < K, w2h, jnp.inf)[None, :]

    q_pad, idx_pad, part = _vq_pallas(
        flat_p, w_p, w2h, tm=tm, valid_rows=M,
        use_bf16=use_bf16_distances, single_buffer=single_buffer_codebook)

    # Reduce per-tile partials: row 0 of each 8-row block = counts, row 1 lane 0
    # = squared error.
    encsum = jnp.sum(part[0::8, :K], axis=0)
    sqerr = jnp.sum(part[1::8, 0])

    mse = sqerr / (M * D)
    e_latent_loss = mse                      # F.mse_loss(quantized.detach(), inputs)
    q_latent_loss = mse                      # F.mse_loss(quantized, inputs.detach())
    loss = q_latent_loss + commitment_cost * e_latent_loss

    quantized = q_pad[:M, :D].reshape(B, H, W, D)
    # straight-through estimator: forward value identical to `quantized`
    quantized = x_nhwc + jax.lax.stop_gradient(quantized - x_nhwc)

    avg_probs = encsum / M
    perplexity = jnp.exp(-jnp.sum(avg_probs * jnp.log(avg_probs + 1e-10)))

    # Reconstruct the (M, K) one-hot only here (module returns it); the kernel
    # never writes it to HBM.
    encodings = jax.nn.one_hot(idx_pad[:M, 0], K, dtype=jnp.float32)

    quantized_nchw = jnp.transpose(quantized, (0, 3, 1, 2))        # NHWC->NCHW
    return loss, quantized_nchw, perplexity, encodings


def vector_quantizer_forward(x_nchw, embedding, commitment_cost=0.25,
                             use_bf16_distances=False):
    """Matches VectorQuantizer.forward (forward values; STE only affects grads)."""
    try:
        # Preferred path: single-buffered grid-invariant codebook operands.
        return _forward_impl(x_nchw, embedding,
                             commitment_cost=commitment_cost,
                             use_bf16_distances=use_bf16_distances,
                             single_buffer_codebook=True)
    except Exception:
        # Fallback if this Pallas build rejects pipeline_mode=pl.Buffered(1);
        # identical semantics, default double-buffering.
        return _forward_impl(x_nchw, embedding,
                             commitment_cost=commitment_cost,
                             use_bf16_distances=use_bf16_distances,
                             single_buffer_codebook=False)


def _reference(x_nchw, embedding, commitment_cost):
    """Pure-JAX mirror of the PyTorch forward for a correctness check."""
    x_nhwc = jnp.transpose(x_nchw, (0, 2, 3, 1)).astype(jnp.float32)
    B, H, W, D = x_nhwc.shape
    K = embedding.shape[0]
    flat = x_nhwc.reshape(-1, D)
    w = embedding.astype(jnp.float32)
    d = (jnp.sum(flat ** 2, axis=1, keepdims=True) + jnp.sum(w ** 2, axis=1)
         - 2.0 * flat @ w.T)
    idx = jnp.argmin(d, axis=1)
    enc = jax.nn.one_hot(idx, K, dtype=jnp.float32)
    q = (enc @ w).reshape(B, H, W, D)
    mse = jnp.mean((q - x_nhwc) ** 2)
    loss = mse + commitment_cost * mse
    q = x_nhwc + jax.lax.stop_gradient(q - x_nhwc)
    avg = jnp.mean(enc, axis=0)
    perp = jnp.exp(-jnp.sum(avg * jnp.log(avg + 1e-10)))
    return loss, jnp.transpose(q, (0, 3, 1, 2)), perp, enc


if __name__ == "__main__":
    # Small shapes consistent with the module: B=2, C=embedding_dim=4, H=W=16.
    num_embeddings = 8
    embedding_dim = 4
    commitment_cost = 0.25

    key = jax.random.PRNGKey(0)
    k_x, k_w = jax.random.split(key)

    x = jax.random.normal(k_x, (2, embedding_dim, 16, 16), dtype=jnp.float32)
    # nn.Embedding weight init: uniform(-1/K, 1/K), deterministic.
    embedding = jax.random.uniform(
        k_w, (num_embeddings, embedding_dim), dtype=jnp.float32,
        minval=-1.0 / num_embeddings, maxval=1.0 / num_embeddings)

    outs = vector_quantizer_forward(x, embedding, commitment_cost=commitment_cost)
    jax.block_until_ready(outs)
    loss, quantized, perplexity, encodings = outs

    assert quantized.shape == x.shape
    assert encodings.shape == (2 * 16 * 16, num_embeddings)
    assert loss.shape == () and perplexity.shape == ()

    r_loss, r_q, r_perp, r_enc = _reference(x, embedding, commitment_cost)
    assert bool(jnp.allclose(loss, r_loss, rtol=1e-5, atol=1e-5))
    assert bool(jnp.allclose(quantized, r_q, rtol=1e-5, atol=1e-5))
    assert bool(jnp.allclose(perplexity, r_perp, rtol=1e-5, atol=1e-5))
    assert bool(jnp.allclose(encodings, r_enc))

    print("KERNEL_OK")
</pallas_src>

<mosaic_0001>
module attributes {stable_mosaic.version = 11 : i64} {
  func.func @_vq_kernel(%arg0: i32, %arg1: memref<256x8xf32, #tpu.memory_space<vmem>>, %arg2: memref<128x8xf32, #tpu.memory_space<vmem>>, %arg3: memref<1x128xf32, #tpu.memory_space<vmem>>, %arg4: memref<256x8xf32, #tpu.memory_space<vmem>>, %arg5: memref<256x1xi32, #tpu.memory_space<vmem>>, %arg6: memref<8x128xf32, #tpu.memory_space<vmem>>) attributes {dimension_semantics = [#tpu.dimension_semantics<parallel>], iteration_bounds = array<i64: 2>, scalar_prefetch = 0 : i64, scratch_operands = 0 : i64, tpu.core_type = #tpu.core_type<tc>, window_params = [{transform_indices = @transform_0, window_bounds = array<i64: 256, 8>}, {pipeline_mode = #tpu.pipeline_mode<synchronous>, transform_indices = @transform_1, window_bounds = array<i64: 128, 8>}, {pipeline_mode = #tpu.pipeline_mode<synchronous>, transform_indices = @transform_2, window_bounds = array<i64: 1, 128>}, {transform_indices = @transform_3, window_bounds = array<i64: 256, 8>}, {transform_indices = @transform_4, window_bounds = array<i64: 256, 1>}, {transform_indices = @transform_5, window_bounds = array<i64: 8, 128>}]} {
    %c0 = arith.constant 0 : index
    %c0_0 = arith.constant 0 : index
    %0 = vector.load %arg1[%c0, %c0_0] : memref<256x8xf32, #tpu.memory_space<vmem>>, vector<256x8xf32>
    %c0_1 = arith.constant 0 : index
    %c0_2 = arith.constant 0 : index
    %1 = vector.load %arg2[%c0_1, %c0_2] : memref<128x8xf32, #tpu.memory_space<vmem>>, vector<128x8xf32>
    %c0_3 = arith.constant 0 : index
    %c0_4 = arith.constant 0 : index
    %2 = vector.load %arg3[%c0_3, %c0_4] : memref<1x128xf32, #tpu.memory_space<vmem>>, vector<1x128xf32>
    %cst = arith.constant dense<0.000000e+00> : vector<256x128xf32>
    %3 = tpu.matmul %0, %1, %cst {dimension_numbers = #tpu.dot_dimension_numbers<[1], [1], [0], [0], [0, 0, 1, 0], [], []>} : vector<256x8xf32>, vector<128x8xf32>, vector<256x128xf32> -> vector<256x128xf32>
    %4 = vector.broadcast %2 : vector<1x128xf32> to vector<256x128xf32>
    %5 = arith.subf %4, %3 : vector<256x128xf32>
    %cst_5 = arith.constant dense<0x7F800000> : vector<256xf32>
    %6 = vector.multi_reduction <minimumf>, %5, %cst_5 [1] : vector<256x128xf32> to vector<256xf32>
    %7 = vector.shape_cast %6 : vector<256xf32> to vector<256x1xf32>
    %8 = tpu.iota {dimensions = array<i32: 1>} : vector<256x128xi32>
    %9 = vector.broadcast %7 : vector<256x1xf32> to vector<256x128xf32>
    %10 = arith.cmpf oeq, %5, %9 : vector<256x128xf32>
    %c128_i32 = arith.constant 128 : i32
    %11 = vector.broadcast %c128_i32 : i32 to vector<256x128xi32>
    %12 = arith.select %10, %8, %11 : vector<256x128xi1>, vector<256x128xi32>
    %cst_6 = arith.constant dense<2147483647> : vector<256xi32>
    %13 = vector.multi_reduction <minsi>, %12, %cst_6 [1] : vector<256x128xi32> to vector<256xi32>
    %14 = vector.shape_cast %13 : vector<256xi32> to vector<256x1xi32>
    %c256_i32 = arith.constant 256 : i32
    %15 = arith.muli %arg0, %c256_i32 : i32
    %16 = tpu.iota {dimensions = array<i32: 0>} : vector<256x1xi32>
    %17 = vector.broadcast %15 : i32 to vector<256x1xi32>
    %18 = arith.addi %17, %16 : vector<256x1xi32>
    %c512_i32 = arith.constant 512 : i32
    %19 = vector.broadcast %c512_i32 : i32 to vector<256x1xi32>
    %20 = arith.cmpi slt, %18, %19 : vector<256x1xi32>
    %21 = vector.broadcast %14 : vector<256x1xi32> to vector<256x128xi32>
    %22 = arith.cmpi eq, %8, %21 : vector<256x128xi32>
    %23 = vector.broadcast %20 : vector<256x1xi1> to vector<256x128xi1>
    %24 = arith.andi %22, %23 : vector<256x128xi1>
    %cst_7 = arith.constant 1.000000e+00 : f32
    %cst_8 = arith.constant 0.000000e+00 : f32
    %25 = vector.broadcast %cst_7 : f32 to vector<256x128xf32>
    %26 = vector.broadcast %cst_8 : f32 to vector<256x128xf32>
    %27 = arith.select %24, %25, %26 : vector<256x128xi1>, vector<256x128xf32>
    %cst_9 = arith.constant dense<0.000000e+00> : vector<256x8xf32>
    %28 = tpu.matmul %27, %1, %cst_9 {dimension_numbers = #tpu.dot_dimension_numbers<[1], [0], [0], [1], [0, 0, 1, 1], [], []>} : vector<256x128xf32>, vector<128x8xf32>, vector<256x8xf32> -> vector<256x8xf32>
    %c0_10 = arith.constant 0 : index
    %c0_11 = arith.constant 0 : index
    %29 = vector.load %arg4[%c0_10, %c0_11] : memref<256x8xf32, #tpu.memory_space<vmem>>, vector<256x8xf32>
    tpu.vector_store %arg4[%c0_10, %c0_11], %28 {strides = array<i32>} : memref<256x8xf32, #tpu.memory_space<vmem>>, vector<256x8xf32>,
    %c0_12 = arith.constant 0 : index
    %c0_13 = arith.constant 0 : index
    %30 = vector.load %arg5[%c0_12, %c0_13] : memref<256x1xi32, #tpu.memory_space<vmem>>, vector<256x1xi32>
    tpu.vector_store %arg5[%c0_12, %c0_13], %14 {strides = array<i32>} : memref<256x1xi32, #tpu.memory_space<vmem>>, vector<256x1xi32>,
    %31 = arith.subf %28, %0 : vector<256x8xf32>
    %32 = arith.mulf %31, %31 : vector<256x8xf32>
    %33 = vector.shape_cast %32 : vector<256x8xf32> to vector<1x256x8xf32>
    %cst_14 = arith.constant dense<0.000000e+00> : vector<1xf32>
    %34 = vector.multi_reduction <add>, %33, %cst_14 [1, 2] : vector<1x256x8xf32> to vector<1xf32>
    %35 = vector.shape_cast %34 : vector<1xf32> to vector<1x1x1xf32>
    %36 = vector.extract %35[0, 0, 0] : f32 from vector<1x1x1xf32>
    %cst_15 = arith.constant dense<0.000000e+00> : vector<128xf32>
    %37 = vector.multi_reduction <add>, %27, %cst_15 [0] : vector<256x128xf32> to vector<128xf32>
    %38 = vector.shape_cast %37 : vector<128xf32> to vector<1x128xf32>
    %39 = tpu.iota {dimensions = array<i32: 0>} : vector<8x128xi32>
    %40 = tpu.iota {dimensions = array<i32: 1>} : vector<8x128xi32>
    %c0_i32 = arith.constant 0 : i32
    %41 = vector.broadcast %c0_i32 : i32 to vector<8x128xi32>
    %42 = arith.cmpi eq, %39, %41 : vector<8x128xi32>
    %43 = vector.shape_cast %38 : vector<1x128xf32> to vector<1x128xf32>
    %44 = vector.broadcast %43 : vector<1x128xf32> to vector<8x128xf32>
    %cst_16 = arith.constant 0.000000e+00 : f32
    %45 = vector.broadcast %cst_16 : f32 to vector<8x128xf32>
    %46 = arith.select %42, %44, %45 : vector<8x128xi1>, vector<8x128xf32>
    %c1_i32 = arith.constant 1 : i32
    %47 = vector.broadcast %c1_i32 : i32 to vector<8x128xi32>
    %48 = arith.cmpi eq, %39, %47 : vector<8x128xi32>
    %c0_i32_17 = arith.constant 0 : i32
    %49 = vector.broadcast %c0_i32_17 : i32 to vector<8x128xi32>
    %50 = arith.cmpi eq, %40, %49 : vector<8x128xi32>
    %51 = arith.andi %48, %50 : vector<8x128xi1>
    %52 = vector.broadcast %36 : f32 to vector<8x128xf32>
    %53 = arith.select %51, %52, %46 : vector<8x128xi1>, vector<8x128xf32>
    %c0_18 = arith.constant 0 : index
    %c0_19 = arith.constant 0 : index
    %54 = vector.load %arg6[%c0_18, %c0_19] : memref<8x128xf32, #tpu.memory_space<vmem>>, vector<8x128xf32>
    tpu.vector_store %arg6[%c0_18, %c0_19], %53 {strides = array<i32>} : memref<8x128xf32, #tpu.memory_space<vmem>>, vector<8x128xf32>,
    return
  }
  func.func @transform_0(%arg0: i32) -> (i32, i32) {
    %c0_i32 = arith.constant 0 : i32
    %c0_i32_0 = arith.constant 0 : i32
    return %arg0, %c0_i32 : i32, i32
  }
  func.func @transform_1(%arg0: i32) -> (i32, i32) {
    %c0_i32 = arith.constant 0 : i32
    %c0_i32_0 = arith.constant 0 : i32
    %c0_i32_1 = arith.constant 0 : i32
    return %c0_i32, %c0_i32_0 : i32, i32
  }
  func.func @transform_2(%arg0: i32) -> (i32, i32) {
    %c0_i32 = arith.constant 0 : i32
    %c0_i32_0 = arith.constant 0 : i32
    %c0_i32_1 = arith.constant 0 : i32
    return %c0_i32, %c0_i32_0 : i32, i32
  }
  func.func @transform_3(%arg0: i32) -> (i32, i32) {
    %c0_i32 = arith.constant 0 : i32
    %c0_i32_0 = arith.constant 0 : i32
    return %arg0, %c0_i32 : i32, i32
  }
  func.func @transform_4(%arg0: i32) -> (i32, i32) {
    %c0_i32 = arith.constant 0 : i32
    %c0_i32_0 = arith.constant 0 : i32
    return %arg0, %c0_i32 : i32, i32
  }
  func.func @transform_5(%arg0: i32) -> (i32, i32) {
    %c0_i32 = arith.constant 0 : i32
    %c0_i32_0 = arith.constant 0 : i32
    return %arg0, %c0_i32 : i32, i32
  }
}

module attributes {stable_mosaic.version = 11 : i64} {
  func.func @_vq_kernel(%arg0: i32, %arg1: memref<256x8xf32, #tpu.memory_space<vmem>>, %arg2: memref<128x8xf32, #tpu.memory_space<vmem>>, %arg3: memref<1x128xf32, #tpu.memory_space<vmem>>, %arg4: memref<256x8xf32, #tpu.memory_space<vmem>>, %arg5: memref<256x1xi32, #tpu.memory_space<vmem>>, %arg6: memref<8x128xf32, #tpu.memory_space<vmem>>) attributes {dimension_semantics = [#tpu.dimension_semantics<parallel>], iteration_bounds = array<i64: 2>, scalar_prefetch = 0 : i64, scratch_operands = 0 : i64, tpu.core_type = #tpu.core_type<tc>, window_params = [{transform_indices = @transform_0, window_bounds = array<i64: 256, 8>}, {pipeline_mode = #tpu.pipeline_mode<synchronous>, transform_indices = @transform_1, window_bounds = array<i64: 128, 8>}, {pipeline_mode = #tpu.pipeline_mode<synchronous>, transform_indices = @transform_2, window_bounds = array<i64: 1, 128>}, {transform_indices = @transform_3, window_bounds = array<i64: 256, 8>}, {transform_indices = @transform_4, window_bounds = array<i64: 256, 1>}, {transform_indices = @transform_5, window_bounds = array<i64: 8, 128>}]} {
    %c0 = arith.constant 0 : index
    %c0_0 = arith.constant 0 : index
    %0 = vector.load %arg1[%c0, %c0_0] : memref<256x8xf32, #tpu.memory_space<vmem>>, vector<256x8xf32>
    %c0_1 = arith.constant 0 : index
    %c0_2 = arith.constant 0 : index
    %1 = vector.load %arg2[%c0_1, %c0_2] : memref<128x8xf32, #tpu.memory_space<vmem>>, vector<128x8xf32>
    %c0_3 = arith.constant 0 : index
    %c0_4 = arith.constant 0 : index
    %2 = vector.load %arg3[%c0_3, %c0_4] : memref<1x128xf32, #tpu.memory_space<vmem>>, vector<1x128xf32>
    %cst = arith.constant dense<0.000000e+00> : vector<256x128xf32>
    %3 = tpu.matmul %0, %1, %cst {dimension_numbers = #tpu.dot_dimension_numbers<[1], [1], [0], [0], [0, 0, 1, 0], [], []>} : vector<256x8xf32>, vector<128x8xf32>, vector<256x128xf32> -> vector<256x128xf32>
    %4 = vector.broadcast %2 : vector<1x128xf32> to vector<256x128xf32>
    %5 = arith.subf %4, %3 : vector<256x128xf32>
    %cst_5 = arith.constant dense<0x7F800000> : vector<256xf32>
    %6 = vector.multi_reduction <minimumf>, %5, %cst_5 [1] : vector<256x128xf32> to vector<256xf32>
    %7 = vector.shape_cast %6 : vector<256xf32> to vector<256x1xf32>
    %8 = tpu.iota {dimensions = array<i32: 1>} : vector<256x128xi32>
    %9 = vector.broadcast %7 : vector<256x1xf32> to vector<256x128xf32>
    %10 = arith.cmpf oeq, %5, %9 : vector<256x128xf32>
    %c128_i32 = arith.constant 128 : i32
    %11 = vector.broadcast %c128_i32 : i32 to vector<256x128xi32>
    %12 = arith.select %10, %8, %11 : vector<256x128xi1>, vector<256x128xi32>
    %cst_6 = arith.constant dense<2147483647> : vector<256xi32>
    %13 = vector.multi_reduction <minsi>, %12, %cst_6 [1] : vector<256x128xi32> to vector<256xi32>
    %14 = vector.shape_cast %13 : vector<256xi32> to vector<256x1xi32>
    %c256_i32 = arith.constant 256 : i32
    %15 = arith.muli %arg0, %c256_i32 : i32
    %16 = tpu.iota {dimensions = array<i32: 0>} : vector<256x1xi32>
    %17 = vector.broadcast %15 : i32 to vector<256x1xi32>
    %18 = arith.addi %17, %16 : vector<256x1xi32>
    %c512_i32 = arith.constant 512 : i32
    %19 = vector.broadcast %c512_i32 : i32 to vector<256x1xi32>
    %20 = arith.cmpi slt, %18, %19 : vector<256x1xi32>
    %21 = vector.broadcast %14 : vector<256x1xi32> to vector<256x128xi32>
    %22 = arith.cmpi eq, %8, %21 : vector<256x128xi32>
    %23 = vector.broadcast %20 : vector<256x1xi1> to vector<256x128xi1>
    %24 = arith.andi %22, %23 : vector<256x128xi1>
    %cst_7 = arith.constant 1.000000e+00 : f32
    %cst_8 = arith.constant 0.000000e+00 : f32
    %25 = vector.broadcast %cst_7 : f32 to vector<256x128xf32>
    %26 = vector.broadcast %cst_8 : f32 to vector<256x128xf32>
    %27 = arith.select %24, %25, %26 : vector<256x128xi1>, vector<256x128xf32>
    %cst_9 = arith.constant dense<0.000000e+00> : vector<256x8xf32>
    %28 = tpu.matmul %27, %1, %cst_9 {dimension_numbers = #tpu.dot_dimension_numbers<[1], [0], [0], [1], [0, 0, 1, 1], [], []>} : vector<256x128xf32>, vector<128x8xf32>, vector<256x8xf32> -> vector<256x8xf32>
    %c0_10 = arith.constant 0 : index
    %c0_11 = arith.constant 0 : index
    %29 = vector.load %arg4[%c0_10, %c0_11] : memref<256x8xf32, #tpu.memory_space<vmem>>, vector<256x8xf32>
    tpu.vector_store %arg4[%c0_10, %c0_11], %28 {strides = array<i32>} : memref<256x8xf32, #tpu.memory_space<vmem>>, vector<256x8xf32>,
    %c0_12 = arith.constant 0 : index
    %c0_13 = arith.constant 0 : index
    %30 = vector.load %arg5[%c0_12, %c0_13] : memref<256x1xi32, #tpu.memory_space<vmem>>, vector<256x1xi32>
    tpu.vector_store %arg5[%c0_12, %c0_13], %14 {strides = array<i32>} : memref<256x1xi32, #tpu.memory_space<vmem>>, vector<256x1xi32>,
    %31 = arith.subf %28, %0 : vector<256x8xf32>
    %32 = arith.mulf %31, %31 : vector<256x8xf32>
    %33 = vector.shape_cast %32 : vector<256x8xf32> to vector<1x256x8xf32>
    %cst_14 = arith.constant dense<0.000000e+00> : vector<1xf32>
    %34 = vector.multi_reduction <add>, %33, %cst_14 [1, 2] : vector<1x256x8xf32> to vector<1xf32>
    %35 = vector.shape_cast %34 : vector<1xf32> to vector<1x1x1xf32>
    %36 = vector.extract %35[0, 0, 0] : f32 from vector<1x1x1xf32>
    %cst_15 = arith.constant dense<0.000000e+00> : vector<128xf32>
    %37 = vector.multi_reduction <add>, %27, %cst_15 [0] : vector<256x128xf32> to vector<128xf32>
    %38 = vector.shape_cast %37 : vector<128xf32> to vector<1x128xf32>
    %39 = tpu.iota {dimensions = array<i32: 0>} : vector<8x128xi32>
    %40 = tpu.iota {dimensions = array<i32: 1>} : vector<8x128xi32>
    %c0_i32 = arith.constant 0 : i32
    %41 = vector.broadcast %c0_i32 : i32 to vector<8x128xi32>
    %42 = arith.cmpi eq, %39, %41 : vector<8x128xi32>
    %43 = vector.shape_cast %38 : vector<1x128xf32> to vector<1x128xf32>
    %44 = vector.broadcast %43 : vector<1x128xf32> to vector<8x128xf32>
    %cst_16 = arith.constant 0.000000e+00 : f32
    %45 = vector.broadcast %cst_16 : f32 to vector<8x128xf32>
    %46 = arith.select %42, %44, %45 : vector<8x128xi1>, vector<8x128xf32>
    %c1_i32 = arith.constant 1 : i32
    %47 = vector.broadcast %c1_i32 : i32 to vector<8x128xi32>
    %48 = arith.cmpi eq, %39, %47 : vector<8x128xi32>
    %c0_i32_17 = arith.constant 0 : i32
    %49 = vector.broadcast %c0_i32_17 : i32 to vector<8x128xi32>
    %50 = arith.cmpi eq, %40, %49 : vector<8x128xi32>
    %51 = arith.andi %48, %50 : vector<8x128xi1>
    %52 = vector.broadcast %36 : f32 to vector<8x128xf32>
    %53 = arith.select %51, %52, %46 : vector<8x128xi1>, vector<8x128xf32>
    %c0_18 = arith.constant 0 : index
    %c0_19 = arith.constant 0 : index
    %54 = vector.load %arg6[%c0_18, %c0_19] : memref<8x128xf32, #tpu.memory_space<vmem>>, vector<8x128xf32>
    tpu.vector_store %arg6[%c0_18, %c0_19], %53 {strides = array<i32>} : memref<8x128xf32, #tpu.memory_space<vmem>>, vector<8x128xf32>,
    return
  }
  func.func @transform_0(%arg0: i32) -> (i32, i32) {
    %c0_i32 = arith.constant 0 : i32
    %c0_i32_0 = arith.constant 0 : i32
    return %arg0, %c0_i32 : i32, i32
  }
  func.func @transform_1(%arg0: i32) -> (i32, i32) {
    %c0_i32 = arith.constant 0 : i32
    %c0_i32_0 = arith.constant 0 : i32
    %c0_i32_1 = arith.constant 0 : i32
    return %c0_i32, %c0_i32_0 : i32, i32
  }
  func.func @transform_2(%arg0: i32) -> (i32, i32) {
    %c0_i32 = arith.constant 0 : i32
    %c0_i32_0 = arith.constant 0 : i32
    %c0_i32_1 = arith.constant 0 : i32
    return %c0_i32, %c0_i32_0 : i32, i32
  }
  func.func @transform_3(%arg0: i32) -> (i32, i32) {
    %c0_i32 = arith.constant 0 : i32
    %c0_i32_0 = arith.constant 0 : i32
    return %arg0, %c0_i32 : i32, i32
  }
  func.func @transform_4(%arg0: i32) -> (i32, i32) {
    %c0_i32 = arith.constant 0 : i32
    %c0_i32_0 = arith.constant 0 : i32
    return %arg0, %c0_i32 : i32, i32
  }
  func.func @transform_5(%arg0: i32) -> (i32, i32) {
    %c0_i32 = arith.constant 0 : i32
    %c0_i32_0 = arith.constant 0 : i32
    return %arg0, %c0_i32 : i32, i32
  }
}

</mosaic_0001>

<llo_original>
// kernel: _forward_impl.1
$region0: #{_forward_impl.1}
  #allocation0 [shape = 'u32[]', space=smem, size = 0x4, offset = 0x4, fixed_abs, tag = 'smem constant byte address 0x4 - core index']
  #allocation1 [shape = 'u32[72,128]{1,0:T(1,128)}', space=vmem, size = 0x9000, scoped, tag = 'internal scratch']
  %s0 = inlined_call_operand.vmem [shape: f32[512,8], index: 0, kind: input, shape index: {}]
  %s1 = inlined_call_operand.vmem [shape: f32[128,8], index: 1, kind: input, shape index: {}]
  %s2 = inlined_call_operand.vmem [shape: f32[1,128], index: 2, kind: input, shape index: {}]
  %s3 = inlined_call_operand.vmem [shape: f32[512,8], index: 3, kind: output, shape index: {0}]
  %s4 = inlined_call_operand.vmem [shape: s32[512,1], index: 4, kind: output, shape index: {1}]
  %s5 = inlined_call_operand.vmem [shape: f32[16,128], index: 5, kind: output, shape index: {2}]
  %6 = xla_tuple %s3, %s4, %s5
  %s7 = sld [smem:[#allocation0]]
  $region61: #{_forward_impl.1} parent=0
    _
  %s9 = ssub.s32 1, %s7
  %s10 = scalar_select 0, %s9, %s7
  loop: start=0, step=1, limit=4
  $region2: #{_forward_impl.1} parent=0 // loop_pre_header
    _
  $region3: #{_forward_impl.1} parent=0 // loop_header
    %s12 = sphi 0, %s16
    %p13 = scmp.ge.s32.totalorder %s12, 4
    %s22 = sphi 0, %s24
    %s25 = sphi 0, %s22
    %s26 = sphi 0, %s25
    %s42 = sphi 0, %s26
    %s46 = sphi 0, %s46
    %s48 = sphi 0, %s46
    %s49 = sphi 0, %s48
    %s63 = sphi 0, %s49
    %s67 = sphi 0, %s67
    %s69 = sphi 0, %s67
    %s70 = sphi 0, %s69
    %s84 = sphi 0, %s70
    %s90 = sphi 0, %s92
    %s93 = sphi 0, %s90
    %s94 = sphi 0, %s93
    %s110 = sphi 0, %s94
    %s116 = sphi 0, %s118
    %s119 = sphi 0, %s116
    %s120 = sphi 0, %s119
    %s136 = sphi 0, %s120
    %s142 = sphi 0, %s144
    %s145 = sphi 0, %s142
    %s146 = sphi 0, %s145
    %s162 = sphi 0, %s146
  $region4: #{_forward_impl.1} parent=0 // loop_header_branch
    %15 = sbr.rel (%p13) target = $region8
  $region5: #{_forward_impl.1} parent=0 // loop_body
    %s17 = ssub.s32 %s12, 1
    %s18 = ssub.s32 %s12, 2
    %s19 = sadd.s32 %s12, 1
    %s20 = ssub.s32 %s12, %s19
    %p21 = scmp.eq.s32.totalorder %s20, 0
    %s23 = sadd.s32 %s22, 1
    %s24 = scalar_select %p21, %s22, %s23
    %p27 = pneg %p21
    %p28 = scmp.eq.s32.totalorder %s12, 1
    %p29 = por %p27, %p28
    %p30 = scmp.ne.s32.totalorder %s22, %s25
    %p31 = scmp.eq.s32.totalorder %s12, 0
    %p32 = por %p30, %p31
    %p33 = scmp.ne.s32.totalorder %s22, %s25
    %p34 = scmp.eq.s32.totalorder %s17, 1
    %p35 = por %p33, %p34
    %p36 = scmp.ne.s32.totalorder %s25, %s26
    %p37 = scmp.eq.s32.totalorder %s17, 0
    %p38 = por %p36, %p37
    %p39 = scmp.ne.s32.totalorder %s25, %s26
    %p40 = scmp.eq.s32.totalorder %s18, 1
    %p41 = por %p39, %p40
    %p43 = scmp.ne.s32.totalorder %s26, %s42
    %p44 = scmp.eq.s32.totalorder %s18, 0
    %p45 = por %p43, %p44
    %s47 = sadd.s32 %s46, 1
    %p50 = scmp.eq.s32.totalorder %s12, 1
    %p51 = scmp.ne.s32.totalorder %s46, %s48
    %p52 = scmp.eq.s32.totalorder %s12, 0
    %p53 = por %p51, %p52
    %p54 = scmp.ne.s32.totalorder %s46, %s48
    %p55 = scmp.eq.s32.totalorder %s17, 1
    %p56 = por %p54, %p55
    %p57 = scmp.ne.s32.totalorder %s48, %s49
    %p58 = scmp.eq.s32.totalorder %s17, 0
    %p59 = por %p57, %p58
    %p60 = scmp.ne.s32.totalorder %s48, %s49
    %p61 = scmp.eq.s32.totalorder %s18, 1
    %p62 = por %p60, %p61
    %p64 = scmp.ne.s32.totalorder %s49, %s63
    %p65 = scmp.eq.s32.totalorder %s18, 0
    %p66 = por %p64, %p65
    %s68 = sadd.s32 %s67, 1
    %p71 = scmp.eq.s32.totalorder %s12, 1
    %p72 = scmp.ne.s32.totalorder %s67, %s69
    %p73 = scmp.eq.s32.totalorder %s12, 0
    %p74 = por %p72, %p73
    %p75 = scmp.ne.s32.totalorder %s67, %s69
    %p76 = scmp.eq.s32.totalorder %s17, 1
    %p77 = por %p75, %p76
    %p78 = scmp.ne.s32.totalorder %s69, %s70
    %p79 = scmp.eq.s32.totalorder %s17, 0
    %p80 = por %p78, %p79
    %p81 = scmp.ne.s32.totalorder %s69, %s70
    %p82 = scmp.eq.s32.totalorder %s18, 1
    %p83 = por %p81, %p82
    %p85 = scmp.ne.s32.totalorder %s70, %s84
    %p86 = scmp.eq.s32.totalorder %s18, 0
    %p87 = por %p85, %p86
    %s88 = ssub.s32 %s12, %s19
    %p89 = scmp.eq.s32.totalorder %s88, 0
    %s91 = sadd.s32 %s90, 1
    %s92 = scalar_select %p89, %s90, %s91
    %p95 = pneg %p89
    %p96 = scmp.eq.s32.totalorder %s12, 1
    %p97 = por %p95, %p96
    %p98 = scmp.ne.s32.totalorder %s90, %s93
    %p99 = scmp.eq.s32.totalorder %s12, 0
    %p100 = por %p98, %p99
    %p101 = scmp.ne.s32.totalorder %s90, %s93
    %p102 = scmp.eq.s32.totalorder %s17, 1
    %p103 = por %p101, %p102
    %p104 = scmp.ne.s32.totalorder %s93, %s94
    %p105 = scmp.eq.s32.totalorder %s17, 0
    %p106 = por %p104, %p105
    %p107 = scmp.ne.s32.totalorder %s93, %s94
    %p108 = scmp.eq.s32.totalorder %s18, 1
    %p109 = por %p107, %p108
    %p111 = scmp.ne.s32.totalorder %s94, %s110
    %p112 = scmp.eq.s32.totalorder %s18, 0
    %p113 = por %p111, %p112
    %s114 = ssub.s32 %s12, %s19
    %p115 = scmp.eq.s32.totalorder %s114, 0
    %s117 = sadd.s32 %s116, 1
    %s118 = scalar_select %p115, %s116, %s117
    %p121 = pneg %p115
    %p122 = scmp.eq.s32.totalorder %s12, 1
    %p123 = por %p121, %p122
    %p124 = scmp.ne.s32.totalorder %s116, %s119
    %p125 = scmp.eq.s32.totalorder %s12, 0
    %p126 = por %p124, %p125
    %p127 = scmp.ne.s32.totalorder %s116, %s119
    %p128 = scmp.eq.s32.totalorder %s17, 1
    %p129 = por %p127, %p128
    %p130 = scmp.ne.s32.totalorder %s119, %s120
    %p131 = scmp.eq.s32.totalorder %s17, 0
    %p132 = por %p130, %p131
    %p133 = scmp.ne.s32.totalorder %s119, %s120
    %p134 = scmp.eq.s32.totalorder %s18, 1
    %p135 = por %p133, %p134
    %p137 = scmp.ne.s32.totalorder %s120, %s136
    %p138 = scmp.eq.s32.totalorder %s18, 0
    %p139 = por %p137, %p138
    %s140 = ssub.s32 %s12, %s19
    %p141 = scmp.eq.s32.totalorder %s140, 0
    %s143 = sadd.s32 %s142, 1
    %s144 = scalar_select %p141, %s142, %s143
    %p147 = pneg %p141
    %p148 = scmp.eq.s32.totalorder %s12, 1
    %p149 = por %p147, %p148
    %p150 = scmp.ne.s32.totalorder %s142, %s145
    %p151 = scmp.eq.s32.totalorder %s12, 0
    %p152 = por %p150, %p151
    %p153 = scmp.ne.s32.totalorder %s142, %s145
    %p154 = scmp.eq.s32.totalorder %s17, 1
    %p155 = por %p153, %p154
    %p156 = scmp.ne.s32.totalorder %s145, %s146
    %p157 = scmp.eq.s32.totalorder %s17, 0
    %p158 = por %p156, %p157
    %p159 = scmp.ne.s32.totalorder %s145, %s146
    %p160 = scmp.eq.s32.totalorder %s18, 1
    %p161 = por %p159, %p160
    %p163 = scmp.ne.s32.totalorder %s146, %s162
    %p164 = scmp.eq.s32.totalorder %s18, 0
    %p165 = por %p163, %p164
    %p166 = scmp.le.s32.totalorder 1, %s12
    %p167 = scmp.lt.s32.totalorder %s12, 3
    %p168 = pnand %p166, %p167
    %p169 = pneg %p168
    // Predicated region
    $region9: #{_forward_impl.1} parent=5 // pred_check
      _
    $region10: #{_forward_impl.1} parent=5 // pred_check_branch
      %171 = sbr.rel (%p168) target = $region12
    $region11: #{_forward_impl.1} parent=5 // pred_region
      %s172 = ssub.s32 %s12, 1
      // Predicated region
      $region13: #{_forward_impl.1} parent=11 // pred_check
        %p173 = pneg %p59
      $region14: #{_forward_impl.1} parent=11 // pred_check_branch
        %175 = sbr.rel (%p173) target = $region16
      $region15: #{_forward_impl.1} parent=11 // pred_region
        _
      $region16: #{_forward_impl.1} parent=11 // pred_fallthru
        _
      // Predicated region
      $region17: #{_forward_impl.1} parent=11 // pred_check
        %p176 = pneg %p80
      $region18: #{_forward_impl.1} parent=11 // pred_check_branch
        %178 = sbr.rel (%p176) target = $region20
      $region19: #{_forward_impl.1} parent=11 // pred_region
        _
      $region20: #{_forward_impl.1} parent=11 // pred_fallthru
        _
    $region12: #{_forward_impl.1} parent=5 // pred_fallthru
      _
    %p179 = scmp.lt.s32.totalorder %s12, 2
    // Predicated region
    $region21: #{_forward_impl.1} parent=5 // pred_check
      %p180 = pneg %p179
    $region22: #{_forward_impl.1} parent=5 // pred_check_branch
      %182 = sbr.rel (%p180) target = $region24
    $region23: #{_forward_impl.1} parent=5 // pred_region
      // Predicated region
      $region25: #{_forward_impl.1} parent=23 // pred_check
        %p183 = pneg %p32
      $region26: #{_forward_impl.1} parent=23 // pred_check_branch
        %185 = sbr.rel (%p183) target = $region28
      $region27: #{_forward_impl.1} parent=23 // pred_region
        %s186 = smul.u32 32, %s12
        %p187 = scmp.lt.s32.totalorder %s186, 63
        %s188 = scalar_select %p187, %s186, 63
        %s189 = smul.addr %s188, 8
        %s190 = scalar_lea.vmem %s0, %s189
        %s191 = smul.u32 32, %s12
      $region28: #{_forward_impl.1} parent=23 // pred_fallthru
        _
    $region24: #{_forward_impl.1} parent=5 // pred_fallthru
      _
    %p192 = scmp.le.s32.totalorder 1, %s12
    %p193 = scmp.lt.s32.totalorder %s12, 3
    %p194 = pnand %p192, %p193
    %p195 = pneg %p194
    // Predicated region
    $region29: #{_forward_impl.1} parent=5 // pred_check
      _
    $region30: #{_forward_impl.1} parent=5 // pred_check_branch
      %197 = sbr.rel (%p194) target = $region32
    $region31: #{_forward_impl.1} parent=5 // pred_region
      %s198 = ssub.s32 %s12, 1
      %s199 = smul.u32 32, %s17
      %p200 = scmp.lt.s32.totalorder %s199, 63
      %s201 = scalar_select %p200, %s199, 63
      %s202 = smul.addr %s201, 8
      %s203 = scalar_lea.vmem %s0, %s202
      %p204 = pneg %p38
      %p205 = pneg %p35
      %p206 = pneg %p59
      %p207 = pneg %p56
      %p208 = pneg %p80
      %p209 = pneg %p77
      %p210 = pneg %p106
      %p211 = pneg %p103
      %s212 = smul.u32 32, %s17
      %p213 = scmp.lt.s32.totalorder %s212, 63
      %s214 = scalar_select %p213, %s212, 63
      %s215 = smul.addr %s214, 8
      %s216 = scalar_lea.vmem %s3, %s215
      %p217 = pneg %p132
      %p218 = pneg %p129
      %s219 = smul.u32 32, %s17
      %p220 = scmp.lt.s32.totalorder %s219, 63
      %s221 = scalar_select %p220, %s219, 63
      %s222 = smul.addr %s221, 8
      %s223 = scalar_lea.vmem %s4, %s222
      %p224 = pneg %p158
      %p225 = pneg %p155
      %p226 = scmp.lt.s32.totalorder %s17, 1
      %s227 = scalar_select %p226, %s17, 1
      %s228 = smul.addr %s227, 8
      %s229 = scalar_lea.vmem %s5, %s228
      %s230 = smul.u32 32, %s17
      %p231 = scmp.lt.s32.totalorder %s230, 63
      %s232 = scalar_select %p231, %s230, 63
      %s233 = smul.addr %s232, 8
      %s234 = scalar_lea.vmem %s0, %s233
      %s235 = smul.u32 32, %s17
      %s236 = smul.u32 32, %s17
      %p237 = scmp.lt.s32.totalorder %s236, 63
      %s238 = scalar_select %p237, %s236, 63
      %s239 = smul.addr %s238, 8
      %s240 = scalar_lea.vmem %s3, %s239
      %s241 = smul.u32 32, %s17
      %s242 = smul.u32 32, %s17
      %p243 = scmp.lt.s32.totalorder %s242, 63
      %s244 = scalar_select %p243, %s242, 63
      %s245 = smul.addr %s244, 8
      %s246 = scalar_lea.vmem %s4, %s245
      %s247 = smul.u32 32, %s17
      %p248 = scmp.lt.s32.totalorder %s17, 1
      %s249 = scalar_select %p248, %s17, 1
      %s250 = smul.addr %s249, 8
      %s251 = scalar_lea.vmem %s5, %s250
      %v252 = vld [vmem:[%s234] sm:$0xff]
      %v253 = vld [vmem:[%s234 + $0x8] sm:$0xff]
      %v254 = vld [vmem:[%s234 + $0x10] sm:$0xff]
      %v255 = vld [vmem:[%s234 + $0x18] sm:$0xff]
      %v256 = vld [vmem:[%s234 + $0x20] sm:$0xff]
      %v257 = vld [vmem:[%s234 + $0x28] sm:$0xff]
      %v258 = vld [vmem:[%s234 + $0x30] sm:$0xff]
      %v259 = vld [vmem:[%s234 + $0x38] sm:$0xff]
      %v260 = vld [vmem:[%s234 + $0x40] sm:$0xff]
      %v261 = vld [vmem:[%s234 + $0x48] sm:$0xff]
      %v262 = vld [vmem:[%s234 + $0x50] sm:$0xff]
      %v263 = vld [vmem:[%s234 + $0x58] sm:$0xff]
      %v264 = vld [vmem:[%s234 + $0x60] sm:$0xff]
      %v265 = vld [vmem:[%s234 + $0x68] sm:$0xff]
      %v266 = vld [vmem:[%s234 + $0x70] sm:$0xff]
      %v267 = vld [vmem:[%s234 + $0x78] sm:$0xff]
      %v268 = vld [vmem:[%s234 + $0x80] sm:$0xff]
      %v269 = vld [vmem:[%s234 + $0x88] sm:$0xff]
      %v270 = vld [vmem:[%s234 + $0x90] sm:$0xff]
      %v271 = vld [vmem:[%s234 + $0x98] sm:$0xff]
      %v272 = vld [vmem:[%s234 + $0xa0] sm:$0xff]
      %v273 = vld [vmem:[%s234 + $0xa8] sm:$0xff]
      %v274 = vld [vmem:[%s234 + $0xb0] sm:$0xff]
      %v275 = vld [vmem:[%s234 + $0xb8] sm:$0xff]
      %v276 = vld [vmem:[%s234 + $0xc0] sm:$0xff]
      %v277 = vld [vmem:[%s234 + $0xc8] sm:$0xff]
      %v278 = vld [vmem:[%s234 + $0xd0] sm:$0xff]
      %v279 = vld [vmem:[%s234 + $0xd8] sm:$0xff]
      %v280 = vld [vmem:[%s234 + $0xe0] sm:$0xff]
      %v281 = vld [vmem:[%s234 + $0xe8] sm:$0xff]
      %v282 = vld [vmem:[%s234 + $0xf0] sm:$0xff]
      %v283 = vld [vmem:[%s234 + $0xf8] sm:$0xff]
      %v284 = vld [vmem:[%s1] sm:$0xff]
      %v285 = vld [vmem:[%s1 + $0x8] sm:$0xff]
      %v286 = vld [vmem:[%s1 + $0x10] sm:$0xff]
      %v287 = vld [vmem:[%s1 + $0x18] sm:$0xff]
      %v288 = vld [vmem:[%s1 + $0x20] sm:$0xff]
      %v289 = vld [vmem:[%s1 + $0x28] sm:$0xff]
      %v290 = vld [vmem:[%s1 + $0x30] sm:$0xff]
      %v291 = vld [vmem:[%s1 + $0x38] sm:$0xff]
      %v292 = vld [vmem:[%s1 + $0x40] sm:$0xff]
      %v293 = vld [vmem:[%s1 + $0x48] sm:$0xff]
      %v294 = vld [vmem:[%s1 + $0x50] sm:$0xff]
      %v295 = vld [vmem:[%s1 + $0x58] sm:$0xff]
      %v296 = vld [vmem:[%s1 + $0x60] sm:$0xff]
      %v297 = vld [vmem:[%s1 + $0x68] sm:$0xff]
      %v298 = vld [vmem:[%s1 + $0x70] sm:$0xff]
      %v299 = vld [vmem:[%s1 + $0x78] sm:$0xff]
      %v300 = vld [vmem:[%s2] sm:$0x1]
      %vm301 = vcmask 64512
      %v303 = vsel %vm301, %v252, 0
      %v306 = vsel %vm301, %v253, 0
      %v309 = vsel %vm301, %v254, 0
      %v312 = vsel %vm301, %v255, 0
      %v315 = vsel %vm301, %v256, 0
      %v318 = vsel %vm301, %v257, 0
      %v321 = vsel %vm301, %v258, 0
      %v324 = vsel %vm301, %v259, 0
      %v327 = vsel %vm301, %v260, 0
      %v330 = vsel %vm301, %v261, 0
      %v333 = vsel %vm301, %v262, 0
      %v336 = vsel %vm301, %v263, 0
      %v339 = vsel %vm301, %v264, 0
      %v342 = vsel %vm301, %v265, 0
      %v345 = vsel %vm301, %v266, 0
      %v348 = vsel %vm301, %v267, 0
      %v351 = vsel %vm301, %v268, 0
      %v354 = vsel %vm301, %v269, 0
      %v357 = vsel %vm301, %v270, 0
      %v360 = vsel %vm301, %v271, 0
      %v363 = vsel %vm301, %v272, 0
      %v366 = vsel %vm301, %v273, 0
      %v369 = vsel %vm301, %v274, 0
      %v372 = vsel %vm301, %v275, 0
      %v375 = vsel %vm301, %v276, 0
      %v378 = vsel %vm301, %v277, 0
      %v381 = vsel %vm301, %v278, 0
      %v384 = vsel %vm301, %v279, 0
      %v387 = vsel %vm301, %v280, 0
      %v390 = vsel %vm301, %v281, 0
      %v393 = vsel %vm301, %v282, 0
      %v396 = vsel %vm301, %v283, 0
      %v399 = vsel %vm301, %v284, 0
      %v402 = vsel %vm301, %v285, 0
      %v405 = vsel %vm301, %v286, 0
      %v408 = vsel %vm301, %v287, 0
      %v411 = vsel %vm301, %v288, 0
      %v414 = vsel %vm301, %v289, 0
      %v417 = vsel %vm301, %v290, 0
      %v420 = vsel %vm301, %v291, 0
      %v423 = vsel %vm301, %v292, 0
      %v426 = vsel %vm301, %v293, 0
      %v429 = vsel %vm301, %v294, 0
      %v432 = vsel %vm301, %v295, 0
      %v435 = vsel %vm301, %v296, 0
      %v438 = vsel %vm301, %v297, 0
      %v441 = vsel %vm301, %v298, 0
      %v444 = vsel %vm301, %v299, 0
      %446 = vmatpush.xpose.msra.mxu0 %v444
      %447 = vmatpush.xpose.msra.mxu0 %v441
      %448 = vmatpush.xpose.msra.mxu0 %v438
      %449 = vmatpush.xpose.msra.mxu0 %v435
      %450 = vmatpush.xpose.msra.mxu0 %v432
      %451 = vmatpush.xpose.msra.mxu0 %v429
      %452 = vmatpush.xpose.msra.mxu0 %v426
      %453 = vmatpush.xpose.msra.mxu0 %v423
      %454 = vmatpush.xpose.msra.mxu0 %v420
      %455 = vmatpush.xpose.msra.mxu0 %v417
      %456 = vmatpush.xpose.msra.mxu0 %v414
      %457 = vmatpush.xpose.msra.mxu0 %v411
      %458 = vmatpush.xpose.msra.mxu0 %v408
      %459 = vmatpush.xpose.msra.mxu0 %v405
      %460 = vmatpush.xpose.msra.mxu0 %v402
      %461 = vmatpush.xpose.msra.mxu0 %v399
      %462 = vmatmul.f32.gmra.mxu0 %v303
      %v463 = vpop.f32.mrf.mxu0
      %v464 = vadd.f32 0.0, %v463
      %465 = vmatmul.f32.gmra.mxu0 %v306
      %v466 = vpop.f32.mrf.mxu0
      %v467 = vadd.f32 0.0, %v466
      %468 = vmatmul.f32.gmra.mxu0 %v309
      %v469 = vpop.f32.mrf.mxu0
      %v470 = vadd.f32 0.0, %v469
      %471 = vmatmul.f32.gmra.mxu0 %v312
      %v472 = vpop.f32.mrf.mxu0
      %v473 = vadd.f32 0.0, %v472
      %474 = vmatmul.f32.gmra.mxu0 %v315
      %v475 = vpop.f32.mrf.mxu0
      %v476 = vadd.f32 0.0, %v475
      %477 = vmatmul.f32.gmra.mxu0 %v318
      %v478 = vpop.f32.mrf.mxu0
      %v479 = vadd.f32 0.0, %v478
      %480 = vmatmul.f32.gmra.mxu0 %v321
      %v481 = vpop.f32.mrf.mxu0
      %v482 = vadd.f32 0.0, %v481
      %483 = vmatmul.f32.gmra.mxu0 %v324
      %v484 = vpop.f32.mrf.mxu0
      %v485 = vadd.f32 0.0, %v484
      %486 = vmatmul.f32.gmra.mxu0 %v327
      %v487 = vpop.f32.mrf.mxu0
      %v488 = vadd.f32 0.0, %v487
      %489 = vmatmul.f32.gmra.mxu0 %v330
      %v490 = vpop.f32.mrf.mxu0
      %v491 = vadd.f32 0.0, %v490
      %492 = vmatmul.f32.gmra.mxu0 %v333
      %v493 = vpop.f32.mrf.mxu0
      %v494 = vadd.f32 0.0, %v493
      %495 = vmatmul.f32.gmra.mxu0 %v336
      %v496 = vpop.f32.mrf.mxu0
      %v497 = vadd.f32 0.0, %v496
      %498 = vmatmul.f32.gmra.mxu0 %v339
      %v499 = vpop.f32.mrf.mxu0
      %v500 = vadd.f32 0.0, %v499
      %501 = vmatmul.f32.gmra.mxu0 %v342
      %v502 = vpop.f32.mrf.mxu0
      %v503 = vadd.f32 0.0, %v502
      %504 = vmatmul.f32.gmra.mxu0 %v345
      %v505 = vpop.f32.mrf.mxu0
      %v506 = vadd.f32 0.0, %v505
      %507 = vmatmul.f32.gmra.mxu0 %v348
      %v508 = vpop.f32.mrf.mxu0
      %v509 = vadd.f32 0.0, %v508
      %510 = vmatmul.f32.gmra.mxu0 %v351
      %v511 = vpop.f32.mrf.mxu0
      %v512 = vadd.f32 0.0, %v511
      %513 = vmatmul.f32.gmra.mxu0 %v354
      %v514 = vpop.f32.mrf.mxu0
      %v515 = vadd.f32 0.0, %v514
      %516 = vmatmul.f32.gmra.mxu0 %v357
      %v517 = vpop.f32.mrf.mxu0
      %v518 = vadd.f32 0.0, %v517
      %519 = vmatmul.f32.gmra.mxu0 %v360
      %v520 = vpop.f32.mrf.mxu0
      %v521 = vadd.f32 0.0, %v520
      %522 = vmatmul.f32.gmra.mxu0 %v363
      %v523 = vpop.f32.mrf.mxu0
      %v524 = vadd.f32 0.0, %v523
      %525 = vmatmul.f32.gmra.mxu0 %v366
      %v526 = vpop.f32.mrf.mxu0
      %v527 = vadd.f32 0.0, %v526
      %528 = vmatmul.f32.gmra.mxu0 %v369
      %v529 = vpop.f32.mrf.mxu0
      %v530 = vadd.f32 0.0, %v529
      %531 = vmatmul.f32.gmra.mxu0 %v372
      %v532 = vpop.f32.mrf.mxu0
      %v533 = vadd.f32 0.0, %v532
      %534 = vmatmul.f32.gmra.mxu0 %v375
      %v535 = vpop.f32.mrf.mxu0
      %v536 = vadd.f32 0.0, %v535
      %537 = vmatmul.f32.gmra.mxu0 %v378
      %v538 = vpop.f32.mrf.mxu0
      %v539 = vadd.f32 0.0, %v538
      %540 = vmatmul.f32.gmra.mxu0 %v381
      %v541 = vpop.f32.mrf.mxu0
      %v542 = vadd.f32 0.0, %v541
      %543 = vmatmul.f32.gmra.mxu0 %v384
      %v544 = vpop.f32.mrf.mxu0
      %v545 = vadd.f32 0.0, %v544
      %546 = vmatmul.f32.gmra.mxu0 %v387
      %v547 = vpop.f32.mrf.mxu0
      %v548 = vadd.f32 0.0, %v547
      %549 = vmatmul.f32.gmra.mxu0 %v390
      %v550 = vpop.f32.mrf.mxu0
      %v551 = vadd.f32 0.0, %v550
      %552 = vmatmul.f32.gmra.mxu0 %v393
      %v553 = vpop.f32.mrf.mxu0
      %v554 = vadd.f32 0.0, %v553
      %555 = vmatmul.f32.gmra.mxu0 %v396
      %v556 = vpop.f32.mrf.mxu0
      %v557 = vadd.f32 0.0, %v556
      %558 = vdwg.mxu0
      %v560 = vperm.slane %v300, 0
      %v562 = vsub.f32 %v560, %v464
      %v563 = vsub.f32 %v560, %v467
      %v564 = vsub.f32 %v560, %v470
      %v565 = vsub.f32 %v560, %v473
      %v566 = vsub.f32 %v560, %v476
      %v567 = vsub.f32 %v560, %v479
      %v568 = vsub.f32 %v560, %v482
      %v569 = vsub.f32 %v560, %v485
      %v570 = vsub.f32 %v560, %v488
      %v571 = vsub.f32 %v560, %v491
      %v572 = vsub.f32 %v560, %v494
      %v573 = vsub.f32 %v560, %v497
      %v574 = vsub.f32 %v560, %v500
      %v575 = vsub.f32 %v560, %v503
      %v576 = vsub.f32 %v560, %v506
      %v577 = vsub.f32 %v560, %v509
      %v578 = vsub.f32 %v560, %v512
      %v579 = vsub.f32 %v560, %v515
      %v580 = vsub.f32 %v560, %v518
      %v581 = vsub.f32 %v560, %v521
      %v582 = vsub.f32 %v560, %v524
      %v583 = vsub.f32 %v560, %v527
      %v584 = vsub.f32 %v560, %v530
      %v585 = vsub.f32 %v560, %v533
      %v586 = vsub.f32 %v560, %v536
      %v587 = vsub.f32 %v560, %v539
      %v588 = vsub.f32 %v560, %v542
      %v589 = vsub.f32 %v560, %v545
      %v590 = vsub.f32 %v560, %v548
      %v591 = vsub.f32 %v560, %v551
      %v592 = vsub.f32 %v560, %v554
      %v593 = vsub.f32 %v560, %v557
      %594 = vmin.xlane.f32.xlu0 %v562
      %v595 = vpop.xlane.xlu0 %594
      %596 = vmin.xlane.f32.xlu0 %v563
      %v597 = vpop.xlane.xlu0 %596
      %598 = vmin.xlane.f32.xlu0 %v564
      %v599 = vpop.xlane.xlu0 %598
      %600 = vmin.xlane.f32.xlu0 %v565
      %v601 = vpop.xlane.xlu0 %600
      %602 = vmin.xlane.f32.xlu0 %v566
      %v603 = vpop.xlane.xlu0 %602
      %604 = vmin.xlane.f32.xlu0 %v567
      %v605 = vpop.xlane.xlu0 %604
      %606 = vmin.xlane.f32.xlu0 %v568
      %v607 = vpop.xlane.xlu0 %606
      %608 = vmin.xlane.f32.xlu0 %v569
      %v609 = vpop.xlane.xlu0 %608
      %610 = vmin.xlane.f32.xlu0 %v570
      %v611 = vpop.xlane.xlu0 %610
      %612 = vmin.xlane.f32.xlu0 %v571
      %v613 = vpop.xlane.xlu0 %612
      %614 = vmin.xlane.f32.xlu0 %v572
      %v615 = vpop.xlane.xlu0 %614
      %616 = vmin.xlane.f32.xlu0 %v573
      %v617 = vpop.xlane.xlu0 %616
      %618 = vmin.xlane.f32.xlu0 %v574
      %v619 = vpop.xlane.xlu0 %618
      %620 = vmin.xlane.f32.xlu0 %v575
      %v621 = vpop.xlane.xlu0 %620
      %622 = vmin.xlane.f32.xlu0 %v576
      %v623 = vpop.xlane.xlu0 %622
      %624 = vmin.xlane.f32.xlu0 %v577
      %v625 = vpop.xlane.xlu0 %624
      %626 = vmin.xlane.f32.xlu0 %v578
      %v627 = vpop.xlane.xlu0 %626
      %628 = vmin.xlane.f32.xlu0 %v579
      %v629 = vpop.xlane.xlu0 %628
      %630 = vmin.xlane.f32.xlu0 %v580
      %v631 = vpop.xlane.xlu0 %630
      %632 = vmin.xlane.f32.xlu0 %v581
      %v633 = vpop.xlane.xlu0 %632
      %634 = vmin.xlane.f32.xlu0 %v582
      %v635 = vpop.xlane.xlu0 %634
      %636 = vmin.xlane.f32.xlu0 %v583
      %v637 = vpop.xlane.xlu0 %636
      %638 = vmin.xlane.f32.xlu0 %v584
      %v639 = vpop.xlane.xlu0 %638
      %640 = vmin.xlane.f32.xlu0 %v585
      %v641 = vpop.xlane.xlu0 %640
      %642 = vmin.xlane.f32.xlu0 %v586
      %v643 = vpop.xlane.xlu0 %642
      %644 = vmin.xlane.f32.xlu0 %v587
      %v645 = vpop.xlane.xlu0 %644
      %646 = vmin.xlane.f32.xlu0 %v588
      %v647 = vpop.xlane.xlu0 %646
      %648 = vmin.xlane.f32.xlu0 %v589
      %v649 = vpop.xlane.xlu0 %648
      %650 = vmin.xlane.f32.xlu0 %v590
      %v651 = vpop.xlane.xlu0 %650
      %652 = vmin.xlane.f32.xlu0 %v591
      %v653 = vpop.xlane.xlu0 %652
      %654 = vmin.xlane.f32.xlu0 %v592
      %v655 = vpop.xlane.xlu0 %654
      %656 = vmin.xlane.f32.xlu0 %v593
      %v657 = vpop.xlane.xlu0 %656
      %v658 = vlaneseq
      %v659 = vand.u32 %v658, 127
      %vm660 = vcmp.eq.f32.partialorder %v562, %v595
      %vm661 = vcmp.eq.f32.partialorder %v563, %v597
      %vm662 = vcmp.eq.f32.partialorder %v564, %v599
      %vm663 = vcmp.eq.f32.partialorder %v565, %v601
      %vm664 = vcmp.eq.f32.partialorder %v566, %v603
      %vm665 = vcmp.eq.f32.partialorder %v567, %v605
      %vm666 = vcmp.eq.f32.partialorder %v568, %v607
      %vm667 = vcmp.eq.f32.partialorder %v569, %v609
      %vm668 = vcmp.eq.f32.partialorder %v570, %v611
      %vm669 = vcmp.eq.f32.partialorder %v571, %v613
      %vm670 = vcmp.eq.f32.partialorder %v572, %v615
      %vm671 = vcmp.eq.f32.partialorder %v573, %v617
      %vm672 = vcmp.eq.f32.partialorder %v574, %v619
      %vm673 = vcmp.eq.f32.partialorder %v575, %v621
      %vm674 = vcmp.eq.f32.partialorder %v576, %v623
      %vm675 = vcmp.eq.f32.partialorder %v577, %v625
      %vm676 = vcmp.eq.f32.partialorder %v578, %v627
      %vm677 = vcmp.eq.f32.partialorder %v579, %v629
      %vm678 = vcmp.eq.f32.partialorder %v580, %v631
      %vm679 = vcmp.eq.f32.partialorder %v581, %v633
      %vm680 = vcmp.eq.f32.partialorder %v582, %v635
      %vm681 = vcmp.eq.f32.partialorder %v583, %v637
      %vm682 = vcmp.eq.f32.partialorder %v584, %v639
      %vm683 = vcmp.eq.f32.partialorder %v585, %v641
      %vm684 = vcmp.eq.f32.partialorder %v586, %v643
      %vm685 = vcmp.eq.f32.partialorder %v587, %v645
      %vm686 = vcmp.eq.f32.partialorder %v588, %v647
      %vm687 = vcmp.eq.f32.partialorder %v589, %v649
      %vm688 = vcmp.eq.f32.partialorder %v590, %v651
      %vm689 = vcmp.eq.f32.partialorder %v591, %v653
      %vm690 = vcmp.eq.f32.partialorder %v592, %v655
      %vm691 = vcmp.eq.f32.partialorder %v593, %v657
      %v692 = vsel %vm660, %v659, 128
      %v693 = vsel %vm661, %v659, 128
      %v694 = vsel %vm662, %v659, 128
      %v695 = vsel %vm663, %v659, 128
      %v696 = vsel %vm664, %v659, 128
      %v697 = vsel %vm665, %v659, 128
      %v698 = vsel %vm666, %v659, 128
      %v699 = vsel %vm667, %v659, 128
      %v700 = vsel %vm668, %v659, 128
      %v701 = vsel %vm669, %v659, 128
      %v702 = vsel %vm670, %v659, 128
      %v703 = vsel %vm671, %v659, 128
      %v704 = vsel %vm672, %v659, 128
      %v705 = vsel %vm673, %v659, 128
      %v706 = vsel %vm674, %v659, 128
      %v707 = vsel %vm675, %v659, 128
      %v708 = vsel %vm676, %v659, 128
      %v709 = vsel %vm677, %v659, 128
      %v710 = vsel %vm678, %v659, 128
      %v711 = vsel %vm679, %v659, 128
      %v712 = vsel %vm680, %v659, 128
      %v713 = vsel %vm681, %v659, 128
      %v714 = vsel %vm682, %v659, 128
      %v715 = vsel %vm683, %v659, 128
      %v716 = vsel %vm684, %v659, 128
      %v717 = vsel %vm685, %v659, 128
      %v718 = vsel %vm686, %v659, 128
      %v719 = vsel %vm687, %v659, 128
      %v720 = vsel %vm688, %v659, 128
      %v721 = vsel %vm689, %v659, 128
      %v722 = vsel %vm690, %v659, 128
      %v723 = vsel %vm691, %v659, 128
      %v724 = vand.u32 %v692, 65535
      %v725 = vshra.s32 %v692, 16
      %v726 = vcvt.s32.f32 %v724
      %v727 = vcvt.s32.f32 %v725
      %728 = vmin.xlane.f32.xlu0 %v727
      %v729 = vpop.xlane.xlu0 %728
      %vm730 = vcmp.eq.f32.partialorder %v727, %v729
      %v731 = vsel %vm730, %v726, inf
      %732 = vmin.xlane.f32.xlu0 %v731
      %v733 = vpop.xlane.xlu0 %732
      %v734 = vcvt.f32.s32 %v733
      %v735 = vcvt.f32.s32 %v729
      %v736 = vshll.u32 %v735, 16
      %v737 = vadd.s32 %v736, %v734
      %v738 = vand.u32 %v693, 65535
      %v739 = vshra.s32 %v693, 16
      %v740 = vcvt.s32.f32 %v738
      %v741 = vcvt.s32.f32 %v739
      %742 = vmin.xlane.f32.xlu0 %v741
      %v743 = vpop.xlane.xlu0 %742
      %vm744 = vcmp.eq.f32.partialorder %v741, %v743
      %v745 = vsel %vm744, %v740, inf
      %746 = vmin.xlane.f32.xlu0 %v745
      %v747 = vpop.xlane.xlu0 %746
      %v748 = vcvt.f32.s32 %v747
      %v749 = vcvt.f32.s32 %v743
      %v750 = vshll.u32 %v749, 16
      %v751 = vadd.s32 %v750, %v748
      %v752 = vand.u32 %v694, 65535
      %v753 = vshra.s32 %v694, 16
      %v754 = vcvt.s32.f32 %v752
      %v755 = vcvt.s32.f32 %v753
      %756 = vmin.xlane.f32.xlu0 %v755
      %v757 = vpop.xlane.xlu0 %756
      %vm758 = vcmp.eq.f32.partialorder %v755, %v757
      %v759 = vsel %vm758, %v754, inf
      %760 = vmin.xlane.f32.xlu0 %v759
      %v761 = vpop.xlane.xlu0 %760
      %v762 = vcvt.f32.s32 %v761
      %v763 = vcvt.f32.s32 %v757
      %v764 = vshll.u32 %v763, 16
      %v765 = vadd.s32 %v764, %v762
      %v766 = vand.u32 %v695, 65535
      %v767 = vshra.s32 %v695, 16
      %v768 = vcvt.s32.f32 %v766
      %v769 = vcvt.s32.f32 %v767
      %770 = vmin.xlane.f32.xlu0 %v769
      %v771 = vpop.xlane.xlu0 %770
      %vm772 = vcmp.eq.f32.partialorder %v769, %v771
      %v773 = vsel %vm772, %v768, inf
      %774 = vmin.xlane.f32.xlu0 %v773
      %v775 = vpop.xlane.xlu0 %774
      %v776 = vcvt.f32.s32 %v775
      %v777 = vcvt.f32.s32 %v771
      %v778 = vshll.u32 %v777, 16
      %v779 = vadd.s32 %v778, %v776
      %v780 = vand.u32 %v696, 65535
      %v781 = vshra.s32 %v696, 16
      %v782 = vcvt.s32.f32 %v780
      %v783 = vcvt.s32.f32 %v781
      %784 = vmin.xlane.f32.xlu0 %v783
      %v785 = vpop.xlane.xlu0 %784
      %vm786 = vcmp.eq.f32.partialorder %v783, %v785
      %v787 = vsel %vm786, %v782, inf
      %788 = vmin.xlane.f32.xlu0 %v787
      %v789 = vpop.xlane.xlu0 %788
      %v790 = vcvt.f32.s32 %v789
      %v791 = vcvt.f32.s32 %v785
      %v792 = vshll.u32 %v791, 16
      %v793 = vadd.s32 %v792, %v790
      %v794 = vand.u32 %v697, 65535
      %v795 = vshra.s32 %v697, 16
      %v796 = vcvt.s32.f32 %v794
      %v797 = vcvt.s32.f32 %v795
      %798 = vmin.xlane.f32.xlu0 %v797
      %v799 = vpop.xlane.xlu0 %798
      %vm800 = vcmp.eq.f32.partialorder %v797, %v799
      %v801 = vsel %vm800, %v796, inf
      %802 = vmin.xlane.f32.xlu0 %v801
      %v803 = vpop.xlane.xlu0 %802
      %v804 = vcvt.f32.s32 %v803
      %v805 = vcvt.f32.s32 %v799
      %v806 = vshll.u32 %v805, 16
      %v807 = vadd.s32 %v806, %v804
      %v808 = vand.u32 %v698, 65535
      %v809 = vshra.s32 %v698, 16
      %v810 = vcvt.s32.f32 %v808
      %v811 = vcvt.s32.f32 %v809
      %812 = vmin.xlane.f32.xlu0 %v811
      %v813 = vpop.xlane.xlu0 %812
      %vm814 = vcmp.eq.f32.partialorder %v811, %v813
      %v815 = vsel %vm814, %v810, inf
      %816 = vmin.xlane.f32.xlu0 %v815
      %v817 = vpop.xlane.xlu0 %816
      %v818 = vcvt.f32.s32 %v817
      %v819 = vcvt.f32.s32 %v813
      %v820 = vshll.u32 %v819, 16
      %v821 = vadd.s32 %v820, %v818
      %v822 = vand.u32 %v699, 65535
      %v823 = vshra.s32 %v699, 16
      %v824 = vcvt.s32.f32 %v822
      %v825 = vcvt.s32.f32 %v823
      %826 = vmin.xlane.f32.xlu0 %v825
      %v827 = vpop.xlane.xlu0 %826
      %vm828 = vcmp.eq.f32.partialorder %v825, %v827
      %v829 = vsel %vm828, %v824, inf
      %830 = vmin.xlane.f32.xlu0 %v829
      %v831 = vpop.xlane.xlu0 %830
      %v832 = vcvt.f32.s32 %v831
      %v833 = vcvt.f32.s32 %v827
      %v834 = vshll.u32 %v833, 16
      %v835 = vadd.s32 %v834, %v832
      %v836 = vand.u32 %v700, 65535
      %v837 = vshra.s32 %v700, 16
      %v838 = vcvt.s32.f32 %v836
      %v839 = vcvt.s32.f32 %v837
      %840 = vmin.xlane.f32.xlu0 %v839
      %v841 = vpop.xlane.xlu0 %840
      %vm842 = vcmp.eq.f32.partialorder %v839, %v841
      %v843 = vsel %vm842, %v838, inf
      %844 = vmin.xlane.f32.xlu0 %v843
      %v845 = vpop.xlane.xlu0 %844
      %v846 = vcvt.f32.s32 %v845
      %v847 = vcvt.f32.s32 %v841
      %v848 = vshll.u32 %v847, 16
      %v849 = vadd.s32 %v848, %v846
      %v850 = vand.u32 %v701, 65535
      %v851 = vshra.s32 %v701, 16
      %v852 = vcvt.s32.f32 %v850
      %v853 = vcvt.s32.f32 %v851
      %854 = vmin.xlane.f32.xlu0 %v853
      %v855 = vpop.xlane.xlu0 %854
      %vm856 = vcmp.eq.f32.partialorder %v853, %v855
      %v857 = vsel %vm856, %v852, inf
      %858 = vmin.xlane.f32.xlu0 %v857
      %v859 = vpop.xlane.xlu0 %858
      %v860 = vcvt.f32.s32 %v859
      %v861 = vcvt.f32.s32 %v855
      %v862 = vshll.u32 %v861, 16
      %v863 = vadd.s32 %v862, %v860
      %v864 = vand.u32 %v702, 65535
      %v865 = vshra.s32 %v702, 16
      %v866 = vcvt.s32.f32 %v864
      %v867 = vcvt.s32.f32 %v865
      %868 = vmin.xlane.f32.xlu0 %v867
      %v869 = vpop.xlane.xlu0 %868
      %vm870 = vcmp.eq.f32.partialorder %v867, %v869
      %v871 = vsel %vm870, %v866, inf
      %872 = vmin.xlane.f32.xlu0 %v871
      %v873 = vpop.xlane.xlu0 %872
      %v874 = vcvt.f32.s32 %v873
      %v875 = vcvt.f32.s32 %v869
      %v876 = vshll.u32 %v875, 16
      %v877 = vadd.s32 %v876, %v874
      %v878 = vand.u32 %v703, 65535
      %v879 = vshra.s32 %v703, 16
      %v880 = vcvt.s32.f32 %v878
      %v881 = vcvt.s32.f32 %v879
      %882 = vmin.xlane.f32.xlu0 %v881
      %v883 = vpop.xlane.xlu0 %882
      %vm884 = vcmp.eq.f32.partialorder %v881, %v883
      %v885 = vsel %vm884, %v880, inf
      %886 = vmin.xlane.f32.xlu0 %v885
      %v887 = vpop.xlane.xlu0 %886
      %v888 = vcvt.f32.s32 %v887
      %v889 = vcvt.f32.s32 %v883
      %v890 = vshll.u32 %v889, 16
      %v891 = vadd.s32 %v890, %v888
      %v892 = vand.u32 %v704, 65535
      %v893 = vshra.s32 %v704, 16
      %v894 = vcvt.s32.f32 %v892
      %v895 = vcvt.s32.f32 %v893
      %896 = vmin.xlane.f32.xlu0 %v895
      %v897 = vpop.xlane.xlu0 %896
      %vm898 = vcmp.eq.f32.partialorder %v895, %v897
      %v899 = vsel %vm898, %v894, inf
      %900 = vmin.xlane.f32.xlu0 %v899
      %v901 = vpop.xlane.xlu0 %900
      %v902 = vcvt.f32.s32 %v901
      %v903 = vcvt.f32.s32 %v897
      %v904 = vshll.u32 %v903, 16
      %v905 = vadd.s32 %v904, %v902
      %v906 = vand.u32 %v705, 65535
      %v907 = vshra.s32 %v705, 16
      %v908 = vcvt.s32.f32 %v906
      %v909 = vcvt.s32.f32 %v907
      %910 = vmin.xlane.f32.xlu0 %v909
      %v911 = vpop.xlane.xlu0 %910
      %vm912 = vcmp.eq.f32.partialorder %v909, %v911
      %v913 = vsel %vm912, %v908, inf
      %914 = vmin.xlane.f32.xlu0 %v913
      %v915 = vpop.xlane.xlu0 %914
      %v916 = vcvt.f32.s32 %v915
      %v917 = vcvt.f32.s32 %v911
      %v918 = vshll.u32 %v917, 16
      %v919 = vadd.s32 %v918, %v916
      %v920 = vand.u32 %v706, 65535
      %v921 = vshra.s32 %v706, 16
      %v922 = vcvt.s32.f32 %v920
      %v923 = vcvt.s32.f32 %v921
      %924 = vmin.xlane.f32.xlu0 %v923
      %v925 = vpop.xlane.xlu0 %924
      %vm926 = vcmp.eq.f32.partialorder %v923, %v925
      %v927 = vsel %vm926, %v922, inf
      %928 = vmin.xlane.f32.xlu0 %v927
      %v929 = vpop.xlane.xlu0 %928
      %v930 = vcvt.f32.s32 %v929
      %v931 = vcvt.f32.s32 %v925
      %v932 = vshll.u32 %v931, 16
      %v933 = vadd.s32 %v932, %v930
      %v934 = vand.u32 %v707, 65535
      %v935 = vshra.s32 %v707, 16
      %v936 = vcvt.s32.f32 %v934
      %v937 = vcvt.s32.f32 %v935
      %938 = vmin.xlane.f32.xlu0 %v937
      %v939 = vpop.xlane.xlu0 %938
      %vm940 = vcmp.eq.f32.partialorder %v937, %v939
      %v941 = vsel %vm940, %v936, inf
      %942 = vmin.xlane.f32.xlu0 %v941
      %v943 = vpop.xlane.xlu0 %942
      %v944 = vcvt.f32.s32 %v943
      %v945 = vcvt.f32.s32 %v939
      %v946 = vshll.u32 %v945, 16
      %v947 = vadd.s32 %v946, %v944
      %v948 = vand.u32 %v708, 65535
      %v949 = vshra.s32 %v708, 16
      %v950 = vcvt.s32.f32 %v948
      %v951 = vcvt.s32.f32 %v949
      %952 = vmin.xlane.f32.xlu0 %v951
      %v953 = vpop.xlane.xlu0 %952
      %vm954 = vcmp.eq.f32.partialorder %v951, %v953
      %v955 = vsel %vm954, %v950, inf
      %956 = vmin.xlane.f32.xlu0 %v955
      %v957 = vpop.xlane.xlu0 %956
      %v958 = vcvt.f32.s32 %v957
      %v959 = vcvt.f32.s32 %v953
      %v960 = vshll.u32 %v959, 16
      %v961 = vadd.s32 %v960, %v958
      %v962 = vand.u32 %v709, 65535
      %v963 = vshra.s32 %v709, 16
      %v964 = vcvt.s32.f32 %v962
      %v965 = vcvt.s32.f32 %v963
      %966 = vmin.xlane.f32.xlu0 %v965
      %v967 = vpop.xlane.xlu0 %966
      %vm968 = vcmp.eq.f32.partialorder %v965, %v967
      %v969 = vsel %vm968, %v964, inf
      %970 = vmin.xlane.f32.xlu0 %v969
      %v971 = vpop.xlane.xlu0 %970
      %v972 = vcvt.f32.s32 %v971
      %v973 = vcvt.f32.s32 %v967
      %v974 = vshll.u32 %v973, 16
      %v975 = vadd.s32 %v974, %v972
      %v976 = vand.u32 %v710, 65535
      %v977 = vshra.s32 %v710, 16
      %v978 = vcvt.s32.f32 %v976
      %v979 = vcvt.s32.f32 %v977
      %980 = vmin.xlane.f32.xlu0 %v979
      %v981 = vpop.xlane.xlu0 %980
      %vm982 = vcmp.eq.f32.partialorder %v979, %v981
      %v983 = vsel %vm982, %v978, inf
      %984 = vmin.xlane.f32.xlu0 %v983
      %v985 = vpop.xlane.xlu0 %984
      %v986 = vcvt.f32.s32 %v985
      %v987 = vcvt.f32.s32 %v981
      %v988 = vshll.u32 %v987, 16
      %v989 = vadd.s32 %v988, %v986
      %v990 = vand.u32 %v711, 65535
      %v991 = vshra.s32 %v711, 16
      %v992 = vcvt.s32.f32 %v990
      %v993 = vcvt.s32.f32 %v991
      %994 = vmin.xlane.f32.xlu0 %v993
      %v995 = vpop.xlane.xlu0 %994
      %vm996 = vcmp.eq.f32.partialorder %v993, %v995
      %v997 = vsel %vm996, %v992, inf
      %998 = vmin.xlane.f32.xlu0 %v997
      %v999 = vpop.xlane.xlu0 %998
      %v1000 = vcvt.f32.s32 %v999
      %v1001 = vcvt.f32.s32 %v995
      %v1002 = vshll.u32 %v1001, 16
      %v1003 = vadd.s32 %v1002, %v1000
      %v1004 = vand.u32 %v712, 65535
      %v1005 = vshra.s32 %v712, 16
      %v1006 = vcvt.s32.f32 %v1004
      %v1007 = vcvt.s32.f32 %v1005
      %1008 = vmin.xlane.f32.xlu0 %v1007
      %v1009 = vpop.xlane.xlu0 %1008
      %vm1010 = vcmp.eq.f32.partialorder %v1007, %v1009
      %v1011 = vsel %vm1010, %v1006, inf
      %1012 = vmin.xlane.f32.xlu0 %v1011
      %v1013 = vpop.xlane.xlu0 %1012
      %v1014 = vcvt.f32.s32 %v1013
      %v1015 = vcvt.f32.s32 %v1009
      %v1016 = vshll.u32 %v1015, 16
      %v1017 = vadd.s32 %v1016, %v1014
      %v1018 = vand.u32 %v713, 65535
      %v1019 = vshra.s32 %v713, 16
      %v1020 = vcvt.s32.f32 %v1018
      %v1021 = vcvt.s32.f32 %v1019
      %1022 = vmin.xlane.f32.xlu0 %v1021
      %v1023 = vpop.xlane.xlu0 %1022
      %vm1024 = vcmp.eq.f32.partialorder %v1021, %v1023
      %v1025 = vsel %vm1024, %v1020, inf
      %1026 = vmin.xlane.f32.xlu0 %v1025
      %v1027 = vpop.xlane.xlu0 %1026
      %v1028 = vcvt.f32.s32 %v1027
      %v1029 = vcvt.f32.s32 %v1023
      %v1030 = vshll.u32 %v1029, 16
      %v1031 = vadd.s32 %v1030, %v1028
      %v1032 = vand.u32 %v714, 65535
      %v1033 = vshra.s32 %v714, 16
      %v1034 = vcvt.s32.f32 %v1032
      %v1035 = vcvt.s32.f32 %v1033
      %1036 = vmin.xlane.f32.xlu0 %v1035
      %v1037 = vpop.xlane.xlu0 %1036
      %vm1038 = vcmp.eq.f32.partialorder %v1035, %v1037
      %v1039 = vsel %vm1038, %v1034, inf
      %1040 = vmin.xlane.f32.xlu0 %v1039
      %v1041 = vpop.xlane.xlu0 %1040
      %v1042 = vcvt.f32.s32 %v1041
      %v1043 = vcvt.f32.s32 %v1037
      %v1044 = vshll.u32 %v1043, 16
      %v1045 = vadd.s32 %v1044, %v1042
      %v1046 = vand.u32 %v715, 65535
      %v1047 = vshra.s32 %v715, 16
      %v1048 = vcvt.s32.f32 %v1046
      %v1049 = vcvt.s32.f32 %v1047
      %1050 = vmin.xlane.f32.xlu0 %v1049
      %v1051 = vpop.xlane.xlu0 %1050
      %vm1052 = vcmp.eq.f32.partialorder %v1049, %v1051
      %v1053 = vsel %vm1052, %v1048, inf
      %1054 = vmin.xlane.f32.xlu0 %v1053
      %v1055 = vpop.xlane.xlu0 %1054
      %v1056 = vcvt.f32.s32 %v1055
      %v1057 = vcvt.f32.s32 %v1051
      %v1058 = vshll.u32 %v1057, 16
      %v1059 = vadd.s32 %v1058, %v1056
      %v1060 = vand.u32 %v716, 65535
      %v1061 = vshra.s32 %v716, 16
      %v1062 = vcvt.s32.f32 %v1060
      %v1063 = vcvt.s32.f32 %v1061
      %1064 = vmin.xlane.f32.xlu0 %v1063
      %v1065 = vpop.xlane.xlu0 %1064
      %vm1066 = vcmp.eq.f32.partialorder %v1063, %v1065
      %v1067 = vsel %vm1066, %v1062, inf
      %1068 = vmin.xlane.f32.xlu0 %v1067
      %v1069 = vpop.xlane.xlu0 %1068
      %v1070 = vcvt.f32.s32 %v1069
      %v1071 = vcvt.f32.s32 %v1065
      %v1072 = vshll.u32 %v1071, 16
      %v1073 = vadd.s32 %v1072, %v1070
      %v1074 = vand.u32 %v717, 65535
      %v1075 = vshra.s32 %v717, 16
      %v1076 = vcvt.s32.f32 %v1074
      %v1077 = vcvt.s32.f32 %v1075
      %1078 = vmin.xlane.f32.xlu0 %v1077
      %v1079 = vpop.xlane.xlu0 %1078
      %vm1080 = vcmp.eq.f32.partialorder %v1077, %v1079
      %v1081 = vsel %vm1080, %v1076, inf
      %1082 = vmin.xlane.f32.xlu0 %v1081
      %v1083 = vpop.xlane.xlu0 %1082
      %v1084 = vcvt.f32.s32 %v1083
      %v1085 = vcvt.f32.s32 %v1079
      %v1086 = vshll.u32 %v1085, 16
      %v1087 = vadd.s32 %v1086, %v1084
      %v1088 = vand.u32 %v718, 65535
      %v1089 = vshra.s32 %v718, 16
      %v1090 = vcvt.s32.f32 %v1088
      %v1091 = vcvt.s32.f32 %v1089
      %1092 = vmin.xlane.f32.xlu0 %v1091
      %v1093 = vpop.xlane.xlu0 %1092
      %vm1094 = vcmp.eq.f32.partialorder %v1091, %v1093
      %v1095 = vsel %vm1094, %v1090, inf
      %1096 = vmin.xlane.f32.xlu0 %v1095
      %v1097 = vpop.xlane.xlu0 %1096
      %v1098 = vcvt.f32.s32 %v1097
      %v1099 = vcvt.f32.s32 %v1093
      %v1100 = vshll.u32 %v1099, 16
      %v1101 = vadd.s32 %v1100, %v1098
      %v1102 = vand.u32 %v719, 65535
      %v1103 = vshra.s32 %v719, 16
      %v1104 = vcvt.s32.f32 %v1102
      %v1105 = vcvt.s32.f32 %v1103
      %1106 = vmin.xlane.f32.xlu0 %v1105
      %v1107 = vpop.xlane.xlu0 %1106
      %vm1108 = vcmp.eq.f32.partialorder %v1105, %v1107
      %v1109 = vsel %vm1108, %v1104, inf
      %1110 = vmin.xlane.f32.xlu0 %v1109
      %v1111 = vpop.xlane.xlu0 %1110
      %v1112 = vcvt.f32.s32 %v1111
      %v1113 = vcvt.f32.s32 %v1107
      %v1114 = vshll.u32 %v1113, 16
      %v1115 = vadd.s32 %v1114, %v1112
      %v1116 = vand.u32 %v720, 65535
      %v1117 = vshra.s32 %v720, 16
      %v1118 = vcvt.s32.f32 %v1116
      %v1119 = vcvt.s32.f32 %v1117
      %1120 = vmin.xlane.f32.xlu0 %v1119
      %v1121 = vpop.xlane.xlu0 %1120
      %vm1122 = vcmp.eq.f32.partialorder %v1119, %v1121
      %v1123 = vsel %vm1122, %v1118, inf
      %1124 = vmin.xlane.f32.xlu0 %v1123
      %v1125 = vpop.xlane.xlu0 %1124
      %v1126 = vcvt.f32.s32 %v1125
      %v1127 = vcvt.f32.s32 %v1121
      %v1128 = vshll.u32 %v1127, 16
      %v1129 = vadd.s32 %v1128, %v1126
      %v1130 = vand.u32 %v721, 65535
      %v1131 = vshra.s32 %v721, 16
      %v1132 = vcvt.s32.f32 %v1130
      %v1133 = vcvt.s32.f32 %v1131
      %1134 = vmin.xlane.f32.xlu0 %v1133
      %v1135 = vpop.xlane.xlu0 %1134
      %vm1136 = vcmp.eq.f32.partialorder %v1133, %v1135
      %v1137 = vsel %vm1136, %v1132, inf
      %1138 = vmin.xlane.f32.xlu0 %v1137
      %v1139 = vpop.xlane.xlu0 %1138
      %v1140 = vcvt.f32.s32 %v1139
      %v1141 = vcvt.f32.s32 %v1135
      %v1142 = vshll.u32 %v1141, 16
      %v1143 = vadd.s32 %v1142, %v1140
      %v1144 = vand.u32 %v722, 65535
      %v1145 = vshra.s32 %v722, 16
      %v1146 = vcvt.s32.f32 %v1144
      %v1147 = vcvt.s32.f32 %v1145
      %1148 = vmin.xlane.f32.xlu0 %v1147
      %v1149 = vpop.xlane.xlu0 %1148
      %vm1150 = vcmp.eq.f32.partialorder %v1147, %v1149
      %v1151 = vsel %vm1150, %v1146, inf
      %1152 = vmin.xlane.f32.xlu0 %v1151
      %v1153 = vpop.xlane.xlu0 %1152
      %v1154 = vcvt.f32.s32 %v1153
      %v1155 = vcvt.f32.s32 %v1149
      %v1156 = vshll.u32 %v1155, 16
      %v1157 = vadd.s32 %v1156, %v1154
      %v1158 = vand.u32 %v723, 65535
      %v1159 = vshra.s32 %v723, 16
      %v1160 = vcvt.s32.f32 %v1158
      %v1161 = vcvt.s32.f32 %v1159
      %1162 = vmin.xlane.f32.xlu0 %v1161
      %v1163 = vpop.xlane.xlu0 %1162
      %vm1164 = vcmp.eq.f32.partialorder %v1161, %v1163
      %v1165 = vsel %vm1164, %v1160, inf
      %1166 = vmin.xlane.f32.xlu0 %v1165
      %v1167 = vpop.xlane.xlu0 %1166
      %v1168 = vcvt.f32.s32 %v1167
      %v1169 = vcvt.f32.s32 %v1163
      %v1170 = vshll.u32 %v1169, 16
      %v1171 = vadd.s32 %v1170, %v1168
      %s1172 = smul.u32 %s17, 256
      %v1173 = vlaneseq
      %v1174 = vshrl.u32 %v1173, 7
      %v1175 = vadd.s32 %v1174, 8
      %v1176 = vadd.s32 %v1174, 16
      %v1177 = vadd.s32 %v1174, 24
      %v1178 = vadd.s32 %v1174, 32
      %v1179 = vadd.s32 %v1174, 40
      %v1180 = vadd.s32 %v1174, 48
      %v1181 = vadd.s32 %v1174, 56
      %v1182 = vadd.s32 %v1174, 64
      %v1183 = vadd.s32 %v1174, 72
      %v1184 = vadd.s32 %v1174, 80
      %v1185 = vadd.s32 %v1174, 88
      %v1186 = vadd.s32 %v1174, 96
      %v1187 = vadd.s32 %v1174, 104
      %v1188 = vadd.s32 %v1174, 112
      %v1189 = vadd.s32 %v1174, 120
      %v1190 = vadd.s32 %v1174, 128
      %v1191 = vadd.s32 %v1174, 136
      %v1192 = vadd.s32 %v1174, 144
      %v1193 = vadd.s32 %v1174, 152
      %v1194 = vadd.s32 %v1174, 160
      %v1195 = vadd.s32 %v1174, 168
      %v1196 = vadd.s32 %v1174, 176
      %v1197 = vadd.s32 %v1174, 184
      %v1198 = vadd.s32 %v1174, 192
      %v1199 = vadd.s32 %v1174, 200
      %v1200 = vadd.s32 %v1174, 208
      %v1201 = vadd.s32 %v1174, 216
      %v1202 = vadd.s32 %v1174, 224
      %v1203 = vadd.s32 %v1174, 232
      %v1204 = vadd.s32 %v1174, 240
      %v1205 = vadd.s32 %v1174, 248
      %v1206 = vstv %s1172
      %v1207 = vadd.s32 %v1206, %v1174
      %v1208 = vadd.s32 %v1206, %v1175
      %v1209 = vadd.s32 %v1206, %v1176
      %v1210 = vadd.s32 %v1206, %v1177
      %v1211 = vadd.s32 %v1206, %v1178
      %v1212 = vadd.s32 %v1206, %v1179
      %v1213 = vadd.s32 %v1206, %v1180
      %v1214 = vadd.s32 %v1206, %v1181
      %v1215 = vadd.s32 %v1206, %v1182
      %v1216 = vadd.s32 %v1206, %v1183
      %v1217 = vadd.s32 %v1206, %v1184
      %v1218 = vadd.s32 %v1206, %v1185
      %v1219 = vadd.s32 %v1206, %v1186
      %v1220 = vadd.s32 %v1206, %v1187
      %v1221 = vadd.s32 %v1206, %v1188
      %v1222 = vadd.s32 %v1206, %v1189
      %v1223 = vadd.s32 %v1206, %v1190
      %v1224 = vadd.s32 %v1206, %v1191
      %v1225 = vadd.s32 %v1206, %v1192
      %v1226 = vadd.s32 %v1206, %v1193
      %v1227 = vadd.s32 %v1206, %v1194
      %v1228 = vadd.s32 %v1206, %v1195
      %v1229 = vadd.s32 %v1206, %v1196
      %v1230 = vadd.s32 %v1206, %v1197
      %v1231 = vadd.s32 %v1206, %v1198
      %v1232 = vadd.s32 %v1206, %v1199
      %v1233 = vadd.s32 %v1206, %v1200
      %v1234 = vadd.s32 %v1206, %v1201
      %v1235 = vadd.s32 %v1206, %v1202
      %v1236 = vadd.s32 %v1206, %v1203
      %v1237 = vadd.s32 %v1206, %v1204
      %v1238 = vadd.s32 %v1206, %v1205
      %vm1239 = vcmp.lt.s32.totalorder %v1207, 512
      %vm1240 = vcmp.lt.s32.totalorder %v1208, 512
      %vm1241 = vcmp.lt.s32.totalorder %v1209, 512
      %vm1242 = vcmp.lt.s32.totalorder %v1210, 512
      %vm1243 = vcmp.lt.s32.totalorder %v1211, 512
      %vm1244 = vcmp.lt.s32.totalorder %v1212, 512
      %vm1245 = vcmp.lt.s32.totalorder %v1213, 512
      %vm1246 = vcmp.lt.s32.totalorder %v1214, 512
      %vm1247 = vcmp.lt.s32.totalorder %v1215, 512
      %vm1248 = vcmp.lt.s32.totalorder %v1216, 512
      %vm1249 = vcmp.lt.s32.totalorder %v1217, 512
      %vm1250 = vcmp.lt.s32.totalorder %v1218, 512
      %vm1251 = vcmp.lt.s32.totalorder %v1219, 512
      %vm1252 = vcmp.lt.s32.totalorder %v1220, 512
      %vm1253 = vcmp.lt.s32.totalorder %v1221, 512
      %vm1254 = vcmp.lt.s32.totalorder %v1222, 512
      %vm1255 = vcmp.lt.s32.totalorder %v1223, 512
      %vm1256 = vcmp.lt.s32.totalorder %v1224, 512
      %vm1257 = vcmp.lt.s32.totalorder %v1225, 512
      %vm1258 = vcmp.lt.s32.totalorder %v1226, 512
      %vm1259 = vcmp.lt.s32.totalorder %v1227, 512
      %vm1260 = vcmp.lt.s32.totalorder %v1228, 512
      %vm1261 = vcmp.lt.s32.totalorder %v1229, 512
      %vm1262 = vcmp.lt.s32.totalorder %v1230, 512
      %vm1263 = vcmp.lt.s32.totalorder %v1231, 512
      %vm1264 = vcmp.lt.s32.totalorder %v1232, 512
      %vm1265 = vcmp.lt.s32.totalorder %v1233, 512
      %vm1266 = vcmp.lt.s32.totalorder %v1234, 512
      %vm1267 = vcmp.lt.s32.totalorder %v1235, 512
      %vm1268 = vcmp.lt.s32.totalorder %v1236, 512
      %vm1269 = vcmp.lt.s32.totalorder %v1237, 512
      %vm1270 = vcmp.lt.s32.totalorder %v1238, 512
      %vm1271 = vcmp.eq.s32.totalorder %v659, %v737
      %vm1272 = vcmp.eq.s32.totalorder %v659, %v751
      %vm1273 = vcmp.eq.s32.totalorder %v659, %v765
      %vm1274 = vcmp.eq.s32.totalorder %v659, %v779
      %vm1275 = vcmp.eq.s32.totalorder %v659, %v793
      %vm1276 = vcmp.eq.s32.totalorder %v659, %v807
      %vm1277 = vcmp.eq.s32.totalorder %v659, %v821
      %vm1278 = vcmp.eq.s32.totalorder %v659, %v835
      %vm1279 = vcmp.eq.s32.totalorder %v659, %v849
      %vm1280 = vcmp.eq.s32.totalorder %v659, %v863
      %vm1281 = vcmp.eq.s32.totalorder %v659, %v877
      %vm1282 = vcmp.eq.s32.totalorder %v659, %v891
      %vm1283 = vcmp.eq.s32.totalorder %v659, %v905
      %vm1284 = vcmp.eq.s32.totalorder %v659, %v919
      %vm1285 = vcmp.eq.s32.totalorder %v659, %v933
      %vm1286 = vcmp.eq.s32.totalorder %v659, %v947
      %vm1287 = vcmp.eq.s32.totalorder %v659, %v961
      %vm1288 = vcmp.eq.s32.totalorder %v659, %v975
      %vm1289 = vcmp.eq.s32.totalorder %v659, %v989
      %vm1290 = vcmp.eq.s32.totalorder %v659, %v1003
      %vm1291 = vcmp.eq.s32.totalorder %v659, %v1017
      %vm1292 = vcmp.eq.s32.totalorder %v659, %v1031
      %vm1293 = vcmp.eq.s32.totalorder %v659, %v1045
      %vm1294 = vcmp.eq.s32.totalorder %v659, %v1059
      %vm1295 = vcmp.eq.s32.totalorder %v659, %v1073
      %vm1296 = vcmp.eq.s32.totalorder %v659, %v1087
      %vm1297 = vcmp.eq.s32.totalorder %v659, %v1101
      %vm1298 = vcmp.eq.s32.totalorder %v659, %v1115
      %vm1299 = vcmp.eq.s32.totalorder %v659, %v1129
      %vm1300 = vcmp.eq.s32.totalorder %v659, %v1143
      %vm1301 = vcmp.eq.s32.totalorder %v659, %v1157
      %vm1302 = vcmp.eq.s32.totalorder %v659, %v1171
      %v1303 = vsel %vm1239, 1, 0
      %v1304 = vsel %vm1240, 1, 0
      %v1305 = vsel %vm1241, 1, 0
      %v1306 = vsel %vm1242, 1, 0
      %v1307 = vsel %vm1243, 1, 0
      %v1308 = vsel %vm1244, 1, 0
      %v1309 = vsel %vm1245, 1, 0
      %v1310 = vsel %vm1246, 1, 0
      %v1311 = vsel %vm1247, 1, 0
      %v1312 = vsel %vm1248, 1, 0
      %v1313 = vsel %vm1249, 1, 0
      %v1314 = vsel %vm1250, 1, 0
      %v1315 = vsel %vm1251, 1, 0
      %v1316 = vsel %vm1252, 1, 0
      %v1317 = vsel %vm1253, 1, 0
      %v1318 = vsel %vm1254, 1, 0
      %v1319 = vsel %vm1255, 1, 0
      %v1320 = vsel %vm1256, 1, 0
      %v1321 = vsel %vm1257, 1, 0
      %v1322 = vsel %vm1258, 1, 0
      %v1323 = vsel %vm1259, 1, 0
      %v1324 = vsel %vm1260, 1, 0
      %v1325 = vsel %vm1261, 1, 0
      %v1326 = vsel %vm1262, 1, 0
      %v1327 = vsel %vm1263, 1, 0
      %v1328 = vsel %vm1264, 1, 0
      %v1329 = vsel %vm1265, 1, 0
      %v1330 = vsel %vm1266, 1, 0
      %v1331 = vsel %vm1267, 1, 0
      %v1332 = vsel %vm1268, 1, 0
      %v1333 = vsel %vm1269, 1, 0
      %v1334 = vsel %vm1270, 1, 0
      %vm1335 = vcmp.eq.s32.totalorder %v1303, 1
      %vm1336 = vcmp.eq.s32.totalorder %v1304, 1
      %vm1337 = vcmp.eq.s32.totalorder %v1305, 1
      %vm1338 = vcmp.eq.s32.totalorder %v1306, 1
      %vm1339 = vcmp.eq.s32.totalorder %v1307, 1
      %vm1340 = vcmp.eq.s32.totalorder %v1308, 1
      %vm1341 = vcmp.eq.s32.totalorder %v1309, 1
      %vm1342 = vcmp.eq.s32.totalorder %v1310, 1
      %vm1343 = vcmp.eq.s32.totalorder %v1311, 1
      %vm1344 = vcmp.eq.s32.totalorder %v1312, 1
      %vm1345 = vcmp.eq.s32.totalorder %v1313, 1
      %vm1346 = vcmp.eq.s32.totalorder %v1314, 1
      %vm1347 = vcmp.eq.s32.totalorder %v1315, 1
      %vm1348 = vcmp.eq.s32.totalorder %v1316, 1
      %vm1349 = vcmp.eq.s32.totalorder %v1317, 1
      %vm1350 = vcmp.eq.s32.totalorder %v1318, 1
      %vm1351 = vcmp.eq.s32.totalorder %v1319, 1
      %vm1352 = vcmp.eq.s32.totalorder %v1320, 1
      %vm1353 = vcmp.eq.s32.totalorder %v1321, 1
      %vm1354 = vcmp.eq.s32.totalorder %v1322, 1
      %vm1355 = vcmp.eq.s32.totalorder %v1323, 1
      %vm1356 = vcmp.eq.s32.totalorder %v1324, 1
      %vm1357 = vcmp.eq.s32.totalorder %v1325, 1
      %vm1358 = vcmp.eq.s32.totalorder %v1326, 1
      %vm1359 = vcmp.eq.s32.totalorder %v1327, 1
      %vm1360 = vcmp.eq.s32.totalorder %v1328, 1
      %vm1361 = vcmp.eq.s32.totalorder %v1329, 1
      %vm1362 = vcmp.eq.s32.totalorder %v1330, 1
      %vm1363 = vcmp.eq.s32.totalorder %v1331, 1
      %vm1364 = vcmp.eq.s32.totalorder %v1332, 1
      %vm1365 = vcmp.eq.s32.totalorder %v1333, 1
      %vm1366 = vcmp.eq.s32.totalorder %v1334, 1
      %vm1367 = vmand %vm1271, %vm1335
      %vm1368 = vmand %vm1272, %vm1336
      %vm1369 = vmand %vm1273, %vm1337
      %vm1370 = vmand %vm1274, %vm1338
      %vm1371 = vmand %vm1275, %vm1339
      %vm1372 = vmand %vm1276, %vm1340
      %vm1373 = vmand %vm1277, %vm1341
      %vm1374 = vmand %vm1278, %vm1342
      %vm1375 = vmand %vm1279, %vm1343
      %vm1376 = vmand %vm1280, %vm1344
      %vm1377 = vmand %vm1281, %vm1345
      %vm1378 = vmand %vm1282, %vm1346
      %vm1379 = vmand %vm1283, %vm1347
      %vm1380 = vmand %vm1284, %vm1348
      %vm1381 = vmand %vm1285, %vm1349
      %vm1382 = vmand %vm1286, %vm1350
      %vm1383 = vmand %vm1287, %vm1351
      %vm1384 = vmand %vm1288, %vm1352
      %vm1385 = vmand %vm1289, %vm1353
      %vm1386 = vmand %vm1290, %vm1354
      %vm1387 = vmand %vm1291, %vm1355
      %vm1388 = vmand %vm1292, %vm1356
      %vm1389 = vmand %vm1293, %vm1357
      %vm1390 = vmand %vm1294, %vm1358
      %vm1391 = vmand %vm1295, %vm1359
      %vm1392 = vmand %vm1296, %vm1360
      %vm1393 = vmand %vm1297, %vm1361
      %vm1394 = vmand %vm1298, %vm1362
      %vm1395 = vmand %vm1299, %vm1363
      %vm1396 = vmand %vm1300, %vm1364
      %vm1397 = vmand %vm1301, %vm1365
      %vm1398 = vmand %vm1302, %vm1366
      %v1399 = vsel %vm1367, 1.0, 0.0
      %v1400 = vsel %vm1368, 1.0, 0.0
      %v1401 = vsel %vm1369, 1.0, 0.0
      %v1402 = vsel %vm1370, 1.0, 0.0
      %v1403 = vsel %vm1371, 1.0, 0.0
      %v1404 = vsel %vm1372, 1.0, 0.0
      %v1405 = vsel %vm1373, 1.0, 0.0
      %v1406 = vsel %vm1374, 1.0, 0.0
      %v1407 = vsel %vm1375, 1.0, 0.0
      %v1408 = vsel %vm1376, 1.0, 0.0
      %v1409 = vsel %vm1377, 1.0, 0.0
      %v1410 = vsel %vm1378, 1.0, 0.0
      %v1411 = vsel %vm1379, 1.0, 0.0
      %v1412 = vsel %vm1380, 1.0, 0.0
      %v1413 = vsel %vm1381, 1.0, 0.0
      %v1414 = vsel %vm1382, 1.0, 0.0
      %v1415 = vsel %vm1383, 1.0, 0.0
      %v1416 = vsel %vm1384, 1.0, 0.0
      %v1417 = vsel %vm1385, 1.0, 0.0
      %v1418 = vsel %vm1386, 1.0, 0.0
      %v1419 = vsel %vm1387, 1.0, 0.0
      %v1420 = vsel %vm1388, 1.0, 0.0
      %v1421 = vsel %vm1389, 1.0, 0.0
      %v1422 = vsel %vm1390, 1.0, 0.0
      %v1423 = vsel %vm1391, 1.0, 0.0
      %v1424 = vsel %vm1392, 1.0, 0.0
      %v1425 = vsel %vm1393, 1.0, 0.0
      %v1426 = vsel %vm1394, 1.0, 0.0
      %v1427 = vsel %vm1395, 1.0, 0.0
      %v1428 = vsel %vm1396, 1.0, 0.0
      %v1429 = vsel %vm1397, 1.0, 0.0
      %v1430 = vsel %vm1398, 1.0, 0.0
      %1431 = vmatpush.msra.mxu0 %v299
      %1432 = vmatpush.msra.mxu0 %v298
      %1433 = vmatpush.msra.mxu0 %v297
      %1434 = vmatpush.msra.mxu0 %v296
      %1435 = vmatpush.msra.mxu0 %v295
      %1436 = vmatpush.msra.mxu0 %v294
      %1437 = vmatpush.msra.mxu0 %v293
      %1438 = vmatpush.msra.mxu0 %v292
      %1439 = vmatpush.msra.mxu0 %v291
      %1440 = vmatpush.msra.mxu0 %v290
      %1441 = vmatpush.msra.mxu0 %v289
      %1442 = vmatpush.msra.mxu0 %v288
      %1443 = vmatpush.msra.mxu0 %v287
      %1444 = vmatpush.msra.mxu0 %v286
      %1445 = vmatpush.msra.mxu0 %v285
      %1446 = vmatpush.msra.mxu0 %v284
      %1447 = vmatmul.f32.gmra.mxu0 %v1399
      %v1448 = vpop.f32.mrf.mxu0
      %v1449 = vadd.f32 0.0, %v1448
      %1450 = vmatmul.f32.gmra.mxu0 %v1400
      %v1451 = vpop.f32.mrf.mxu0
      %v1452 = vadd.f32 0.0, %v1451
      %1453 = vmatmul.f32.gmra.mxu0 %v1401
      %v1454 = vpop.f32.mrf.mxu0
      %v1455 = vadd.f32 0.0, %v1454
      %1456 = vmatmul.f32.gmra.mxu0 %v1402
      %v1457 = vpop.f32.mrf.mxu0
      %v1458 = vadd.f32 0.0, %v1457
      %1459 = vmatmul.f32.gmra.mxu0 %v1403
      %v1460 = vpop.f32.mrf.mxu0
      %v1461 = vadd.f32 0.0, %v1460
      %1462 = vmatmul.f32.gmra.mxu0 %v1404
      %v1463 = vpop.f32.mrf.mxu0
      %v1464 = vadd.f32 0.0, %v1463
      %1465 = vmatmul.f32.gmra.mxu0 %v1405
      %v1466 = vpop.f32.mrf.mxu0
      %v1467 = vadd.f32 0.0, %v1466
      %1468 = vmatmul.f32.gmra.mxu0 %v1406
      %v1469 = vpop.f32.mrf.mxu0
      %v1470 = vadd.f32 0.0, %v1469
      %1471 = vmatmul.f32.gmra.mxu0 %v1407
      %v1472 = vpop.f32.mrf.mxu0
      %v1473 = vadd.f32 0.0, %v1472
      %1474 = vmatmul.f32.gmra.mxu0 %v1408
      %v1475 = vpop.f32.mrf.mxu0
      %v1476 = vadd.f32 0.0, %v1475
      %1477 = vmatmul.f32.gmra.mxu0 %v1409
      %v1478 = vpop.f32.mrf.mxu0
      %v1479 = vadd.f32 0.0, %v1478
      %1480 = vmatmul.f32.gmra.mxu0 %v1410
      %v1481 = vpop.f32.mrf.mxu0
      %v1482 = vadd.f32 0.0, %v1481
      %1483 = vmatmul.f32.gmra.mxu0 %v1411
      %v1484 = vpop.f32.mrf.mxu0
      %v1485 = vadd.f32 0.0, %v1484
      %1486 = vmatmul.f32.gmra.mxu0 %v1412
      %v1487 = vpop.f32.mrf.mxu0
      %v1488 = vadd.f32 0.0, %v1487
      %1489 = vmatmul.f32.gmra.mxu0 %v1413
      %v1490 = vpop.f32.mrf.mxu0
      %v1491 = vadd.f32 0.0, %v1490
      %1492 = vmatmul.f32.gmra.mxu0 %v1414
      %v1493 = vpop.f32.mrf.mxu0
      %v1494 = vadd.f32 0.0, %v1493
      %1495 = vmatmul.f32.gmra.mxu0 %v1415
      %v1496 = vpop.f32.mrf.mxu0
      %v1497 = vadd.f32 0.0, %v1496
      %1498 = vmatmul.f32.gmra.mxu0 %v1416
      %v1499 = vpop.f32.mrf.mxu0
      %v1500 = vadd.f32 0.0, %v1499
      %1501 = vmatmul.f32.gmra.mxu0 %v1417
      %v1502 = vpop.f32.mrf.mxu0
      %v1503 = vadd.f32 0.0, %v1502
      %1504 = vmatmul.f32.gmra.mxu0 %v1418
      %v1505 = vpop.f32.mrf.mxu0
      %v1506 = vadd.f32 0.0, %v1505
      %1507 = vmatmul.f32.gmra.mxu0 %v1419
      %v1508 = vpop.f32.mrf.mxu0
      %v1509 = vadd.f32 0.0, %v1508
      %1510 = vmatmul.f32.gmra.mxu0 %v1420
      %v1511 = vpop.f32.mrf.mxu0
      %v1512 = vadd.f32 0.0, %v1511
      %1513 = vmatmul.f32.gmra.mxu0 %v1421
      %v1514 = vpop.f32.mrf.mxu0
      %v1515 = vadd.f32 0.0, %v1514
      %1516 = vmatmul.f32.gmra.mxu0 %v1422
      %v1517 = vpop.f32.mrf.mxu0
      %v1518 = vadd.f32 0.0, %v1517
      %1519 = vmatmul.f32.gmra.mxu0 %v1423
      %v1520 = vpop.f32.mrf.mxu0
      %v1521 = vadd.f32 0.0, %v1520
      %1522 = vmatmul.f32.gmra.mxu0 %v1424
      %v1523 = vpop.f32.mrf.mxu0
      %v1524 = vadd.f32 0.0, %v1523
      %1525 = vmatmul.f32.gmra.mxu0 %v1425
      %v1526 = vpop.f32.mrf.mxu0
      %v1527 = vadd.f32 0.0, %v1526
      %1528 = vmatmul.f32.gmra.mxu0 %v1426
      %v1529 = vpop.f32.mrf.mxu0
      %v1530 = vadd.f32 0.0, %v1529
      %1531 = vmatmul.f32.gmra.mxu0 %v1427
      %v1532 = vpop.f32.mrf.mxu0
      %v1533 = vadd.f32 0.0, %v1532
      %1534 = vmatmul.f32.gmra.mxu0 %v1428
      %v1535 = vpop.f32.mrf.mxu0
      %v1536 = vadd.f32 0.0, %v1535
      %1537 = vmatmul.f32.gmra.mxu0 %v1429
      %v1538 = vpop.f32.mrf.mxu0
      %v1539 = vadd.f32 0.0, %v1538
      %1540 = vmatmul.f32.gmra.mxu0 %v1430
      %v1541 = vpop.f32.mrf.mxu0
      %v1542 = vadd.f32 0.0, %v1541
      %1543 = vdwg.mxu0
      %1544 = vst.msk [vmem:[%s240] sm:$0xff] %vm301, %v1449
      %1545 = vst.msk [vmem:[%s240 + $0x8] sm:$0xff] %vm301, %v1452
      %1546 = vst.msk [vmem:[%s240 + $0x10] sm:$0xff] %vm301, %v1455
      %1547 = vst.msk [vmem:[%s240 + $0x18] sm:$0xff] %vm301, %v1458
      %1548 = vst.msk [vmem:[%s240 + $0x20] sm:$0xff] %vm301, %v1461
      %1549 = vst.msk [vmem:[%s240 + $0x28] sm:$0xff] %vm301, %v1464
      %1550 = vst.msk [vmem:[%s240 + $0x30] sm:$0xff] %vm301, %v1467
      %1551 = vst.msk [vmem:[%s240 + $0x38] sm:$0xff] %vm301, %v1470
      %1552 = vst.msk [vmem:[%s240 + $0x40] sm:$0xff] %vm301, %v1473
      %1553 = vst.msk [vmem:[%s240 + $0x48] sm:$0xff] %vm301, %v1476
      %1554 = vst.msk [vmem:[%s240 + $0x50] sm:$0xff] %vm301, %v1479
      %1555 = vst.msk [vmem:[%s240 + $0x58] sm:$0xff] %vm301, %v1482
      %1556 = vst.msk [vmem:[%s240 + $0x60] sm:$0xff] %vm301, %v1485
      %1557 = vst.msk [vmem:[%s240 + $0x68] sm:$0xff] %vm301, %v1488
      %1558 = vst.msk [vmem:[%s240 + $0x70] sm:$0xff] %vm301, %v1491
      %1559 = vst.msk [vmem:[%s240 + $0x78] sm:$0xff] %vm301, %v1494
      %1560 = vst.msk [vmem:[%s240 + $0x80] sm:$0xff] %vm301, %v1497
      %1561 = vst.msk [vmem:[%s240 + $0x88] sm:$0xff] %vm301, %v1500
      %1562 = vst.msk [vmem:[%s240 + $0x90] sm:$0xff] %vm301, %v1503
      %1563 = vst.msk [vmem:[%s240 + $0x98] sm:$0xff] %vm301, %v1506
      %1564 = vst.msk [vmem:[%s240 + $0xa0] sm:$0xff] %vm301, %v1509
      %1565 = vst.msk [vmem:[%s240 + $0xa8] sm:$0xff] %vm301, %v1512
      %1566 = vst.msk [vmem:[%s240 + $0xb0] sm:$0xff] %vm301, %v1515
      %1567 = vst.msk [vmem:[%s240 + $0xb8] sm:$0xff] %vm301, %v1518
      %1568 = vst.msk [vmem:[%s240 + $0xc0] sm:$0xff] %vm301, %v1521
      %1569 = vst.msk [vmem:[%s240 + $0xc8] sm:$0xff] %vm301, %v1524
      %1570 = vst.msk [vmem:[%s240 + $0xd0] sm:$0xff] %vm301, %v1527
      %1571 = vst.msk [vmem:[%s240 + $0xd8] sm:$0xff] %vm301, %v1530
      %1572 = vst.msk [vmem:[%s240 + $0xe0] sm:$0xff] %vm301, %v1533
      %1573 = vst.msk [vmem:[%s240 + $0xe8] sm:$0xff] %vm301, %v1536
      %1574 = vst.msk [vmem:[%s240 + $0xf0] sm:$0xff] %vm301, %v1539
      %1575 = vst.msk [vmem:[%s240 + $0xf8] sm:$0xff] %vm301, %v1542
      %vm1576 = vcmask 7168
      %1577 = vst.msk [vmem:[%s246] sm:$0xff] %vm1576, %v737
      %1578 = vst.msk [vmem:[%s246 + $0x8] sm:$0xff] %vm1576, %v751
      %1579 = vst.msk [vmem:[%s246 + $0x10] sm:$0xff] %vm1576, %v765
      %1580 = vst.msk [vmem:[%s246 + $0x18] sm:$0xff] %vm1576, %v779
      %1581 = vst.msk [vmem:[%s246 + $0x20] sm:$0xff] %vm1576, %v793
      %1582 = vst.msk [vmem:[%s246 + $0x28] sm:$0xff] %vm1576, %v807
      %1583 = vst.msk [vmem:[%s246 + $0x30] sm:$0xff] %vm1576, %v821
      %1584 = vst.msk [vmem:[%s246 + $0x38] sm:$0xff] %vm1576, %v835
      %1585 = vst.msk [vmem:[%s246 + $0x40] sm:$0xff] %vm1576, %v849
      %1586 = vst.msk [vmem:[%s246 + $0x48] sm:$0xff] %vm1576, %v863
      %1587 = vst.msk [vmem:[%s246 + $0x50] sm:$0xff] %vm1576, %v877
      %1588 = vst.msk [vmem:[%s246 + $0x58] sm:$0xff] %vm1576, %v891
      %1589 = vst.msk [vmem:[%s246 + $0x60] sm:$0xff] %vm1576, %v905
      %1590 = vst.msk [vmem:[%s246 + $0x68] sm:$0xff] %vm1576, %v919
      %1591 = vst.msk [vmem:[%s246 + $0x70] sm:$0xff] %vm1576, %v933
      %1592 = vst.msk [vmem:[%s246 + $0x78] sm:$0xff] %vm1576, %v947
      %1593 = vst.msk [vmem:[%s246 + $0x80] sm:$0xff] %vm1576, %v961
      %1594 = vst.msk [vmem:[%s246 + $0x88] sm:$0xff] %vm1576, %v975
      %1595 = vst.msk [vmem:[%s246 + $0x90] sm:$0xff] %vm1576, %v989
      %1596 = vst.msk [vmem:[%s246 + $0x98] sm:$0xff] %vm1576, %v1003
      %1597 = vst.msk [vmem:[%s246 + $0xa0] sm:$0xff] %vm1576, %v1017
      %1598 = vst.msk [vmem:[%s246 + $0xa8] sm:$0xff] %vm1576, %v1031
      %1599 = vst.msk [vmem:[%s246 + $0xb0] sm:$0xff] %vm1576, %v1045
      %1600 = vst.msk [vmem:[%s246 + $0xb8] sm:$0xff] %vm1576, %v1059
      %1601 = vst.msk [vmem:[%s246 + $0xc0] sm:$0xff] %vm1576, %v1073
      %1602 = vst.msk [vmem:[%s246 + $0xc8] sm:$0xff] %vm1576, %v1087
      %1603 = vst.msk [vmem:[%s246 + $0xd0] sm:$0xff] %vm1576, %v1101
      %1604 = vst.msk [vmem:[%s246 + $0xd8] sm:$0xff] %vm1576, %v1115
      %1605 = vst.msk [vmem:[%s246 + $0xe0] sm:$0xff] %vm1576, %v1129
      %1606 = vst.msk [vmem:[%s246 + $0xe8] sm:$0xff] %vm1576, %v1143
      %1607 = vst.msk [vmem:[%s246 + $0xf0] sm:$0xff] %vm1576, %v1157
      %1608 = vst.msk [vmem:[%s246 + $0xf8] sm:$0xff] %vm1576, %v1171
      %v1609 = vsub.f32 %v1449, %v252
      %v1610 = vsub.f32 %v1452, %v253
      %v1611 = vsub.f32 %v1455, %v254
      %v1612 = vsub.f32 %v1458, %v255
      %v1613 = vsub.f32 %v1461, %v256
      %v1614 = vsub.f32 %v1464, %v257
      %v1615 = vsub.f32 %v1467, %v258
      %v1616 = vsub.f32 %v1470, %v259
      %v1617 = vsub.f32 %v1473, %v260
      %v1618 = vsub.f32 %v1476, %v261
      %v1619 = vsub.f32 %v1479, %v262
      %v1620 = vsub.f32 %v1482, %v263
      %v1621 = vsub.f32 %v1485, %v264
      %v1622 = vsub.f32 %v1488, %v265
      %v1623 = vsub.f32 %v1491, %v266
      %v1624 = vsub.f32 %v1494, %v267
      %v1625 = vsub.f32 %v1497, %v268
      %v1626 = vsub.f32 %v1500, %v269
      %v1627 = vsub.f32 %v1503, %v270
      %v1628 = vsub.f32 %v1506, %v271
      %v1629 = vsub.f32 %v1509, %v272
      %v1630 = vsub.f32 %v1512, %v273
      %v1631 = vsub.f32 %v1515, %v274
      %v1632 = vsub.f32 %v1518, %v275
      %v1633 = vsub.f32 %v1521, %v276
      %v1634 = vsub.f32 %v1524, %v277
      %v1635 = vsub.f32 %v1527, %v278
      %v1636 = vsub.f32 %v1530, %v279
      %v1637 = vsub.f32 %v1533, %v280
      %v1638 = vsub.f32 %v1536, %v281
      %v1639 = vsub.f32 %v1539, %v282
      %v1640 = vsub.f32 %v1542, %v283
      %v1641 = vmul.f32 %v1609, %v1609
      %v1642 = vmul.f32 %v1610, %v1610
      %v1643 = vmul.f32 %v1611, %v1611
      %v1644 = vmul.f32 %v1612, %v1612
      %v1645 = vmul.f32 %v1613, %v1613
      %v1646 = vmul.f32 %v1614, %v1614
      %v1647 = vmul.f32 %v1615, %v1615
      %v1648 = vmul.f32 %v1616, %v1616
      %v1649 = vmul.f32 %v1617, %v1617
      %v1650 = vmul.f32 %v1618, %v1618
      %v1651 = vmul.f32 %v1619, %v1619
      %v1652 = vmul.f32 %v1620, %v1620
      %v1653 = vmul.f32 %v1621, %v1621
      %v1654 = vmul.f32 %v1622, %v1622
      %v1655 = vmul.f32 %v1623, %v1623
      %v1656 = vmul.f32 %v1624, %v1624
      %v1657 = vmul.f32 %v1625, %v1625
      %v1658 = vmul.f32 %v1626, %v1626
      %v1659 = vmul.f32 %v1627, %v1627
      %v1660 = vmul.f32 %v1628, %v1628
      %v1661 = vmul.f32 %v1629, %v1629
      %v1662 = vmul.f32 %v1630, %v1630
      %v1663 = vmul.f32 %v1631, %v1631
      %v1664 = vmul.f32 %v1632, %v1632
      %v1665 = vmul.f32 %v1633, %v1633
      %v1666 = vmul.f32 %v1634, %v1634
      %v1667 = vmul.f32 %v1635, %v1635
      %v1668 = vmul.f32 %v1636, %v1636
      %v1669 = vmul.f32 %v1637, %v1637
      %v1670 = vmul.f32 %v1638, %v1638
      %v1671 = vmul.f32 %v1639, %v1639
      %v1672 = vmul.f32 %v1640, %v1640
      %v1673 = vsel %vm301, %v1641, 0.0
      %v1674 = vsel %vm301, %v1642, 0.0
      %v1675 = vadd.f32 %v1673, %v1674
      %v1676 = vsel %vm301, %v1643, 0.0
      %v1677 = vadd.f32 %v1675, %v1676
      %v1678 = vsel %vm301, %v1644, 0.0
      %v1679 = vadd.f32 %v1677, %v1678
      %v1680 = vsel %vm301, %v1645, 0.0
      %v1681 = vadd.f32 %v1679, %v1680
      %v1682 = vsel %vm301, %v1646, 0.0
      %v1683 = vadd.f32 %v1681, %v1682
      %v1684 = vsel %vm301, %v1647, 0.0
      %v1685 = vadd.f32 %v1683, %v1684
      %v1686 = vsel %vm301, %v1648, 0.0
      %v1687 = vadd.f32 %v1685, %v1686
      %v1688 = vsel %vm301, %v1649, 0.0
      %v1689 = vadd.f32 %v1687, %v1688
      %v1690 = vsel %vm301, %v1650, 0.0
      %v1691 = vadd.f32 %v1689, %v1690
      %v1692 = vsel %vm301, %v1651, 0.0
      %v1693 = vadd.f32 %v1691, %v1692
      %v1694 = vsel %vm301, %v1652, 0.0
      %v1695 = vadd.f32 %v1693, %v1694
      %v1696 = vsel %vm301, %v1653, 0.0
      %v1697 = vadd.f32 %v1695, %v1696
      %v1698 = vsel %vm301, %v1654, 0.0
      %v1699 = vadd.f32 %v1697, %v1698
      %v1700 = vsel %vm301, %v1655, 0.0
      %v1701 = vadd.f32 %v1699, %v1700
      %v1702 = vsel %vm301, %v1656, 0.0
      %v1703 = vadd.f32 %v1701, %v1702
      %v1704 = vsel %vm301, %v1657, 0.0
      %v1705 = vadd.f32 %v1703, %v1704
      %v1706 = vsel %vm301, %v1658, 0.0
      %v1707 = vadd.f32 %v1705, %v1706
      %v1708 = vsel %vm301, %v1659, 0.0
      %v1709 = vadd.f32 %v1707, %v1708
      %v1710 = vsel %vm301, %v1660, 0.0
      %v1711 = vadd.f32 %v1709, %v1710
      %v1712 = vsel %vm301, %v1661, 0.0
      %v1713 = vadd.f32 %v1711, %v1712
      %v1714 = vsel %vm301, %v1662, 0.0
      %v1715 = vadd.f32 %v1713, %v1714
      %v1716 = vsel %vm301, %v1663, 0.0
      %v1717 = vadd.f32 %v1715, %v1716
      %v1718 = vsel %vm301, %v1664, 0.0
      %v1719 = vadd.f32 %v1717, %v1718
      %v1720 = vsel %vm301, %v1665, 0.0
      %v1721 = vadd.f32 %v1719, %v1720
      %v1722 = vsel %vm301, %v1666, 0.0
      %v1723 = vadd.f32 %v1721, %v1722
      %v1724 = vsel %vm301, %v1667, 0.0
      %v1725 = vadd.f32 %v1723, %v1724
      %v1726 = vsel %vm301, %v1668, 0.0
      %v1727 = vadd.f32 %v1725, %v1726
      %v1728 = vsel %vm301, %v1669, 0.0
      %v1729 = vadd.f32 %v1727, %v1728
      %v1730 = vsel %vm301, %v1670, 0.0
      %v1731 = vadd.f32 %v1729, %v1730
      %v1732 = vsel %vm301, %v1671, 0.0
      %v1733 = vadd.f32 %v1731, %v1732
      %v1734 = vsel %vm301, %v1672, 0.0
      %v1735 = vadd.f32 %v1733, %v1734
      %1736 = vadd.xlane.f32.xlu0 %v1735
      %v1737 = vpop.xlane.xlu0 %1736
      %v1738 = vrot.slane %v1737, 4
      %v1739 = vadd.f32 %v1737, %v1738
      %v1740 = vrot.slane %v1739, 2
      %v1741 = vadd.f32 %v1739, %v1740
      %v1742 = vrot.slane %v1741, 1
      %v1743 = vadd.f32 %v1741, %v1742
      %s1744 = vtos %v1743
      %v1745 = vadd.f32 %v1399, %v1400
      %v1746 = vadd.f32 %v1745, %v1401
      %v1747 = vadd.f32 %v1746, %v1402
      %v1748 = vadd.f32 %v1747, %v1403
      %v1749 = vadd.f32 %v1748, %v1404
      %v1750 = vadd.f32 %v1749, %v1405
      %v1751 = vadd.f32 %v1750, %v1406
      %v1752 = vadd.f32 %v1751, %v1407
      %v1753 = vadd.f32 %v1752, %v1408
      %v1754 = vadd.f32 %v1753, %v1409
      %v1755 = vadd.f32 %v1754, %v1410
      %v1756 = vadd.f32 %v1755, %v1411
      %v1757 = vadd.f32 %v1756, %v1412
      %v1758 = vadd.f32 %v1757, %v1413
      %v1759 = vadd.f32 %v1758, %v1414
      %v1760 = vadd.f32 %v1759, %v1415
      %v1761 = vadd.f32 %v1760, %v1416
      %v1762 = vadd.f32 %v1761, %v1417
      %v1763 = vadd.f32 %v1762, %v1418
      %v1764 = vadd.f32 %v1763, %v1419
      %v1765 = vadd.f32 %v1764, %v1420
      %v1766 = vadd.f32 %v1765, %v1421
      %v1767 = vadd.f32 %v1766, %v1422
      %v1768 = vadd.f32 %v1767, %v1423
      %v1769 = vadd.f32 %v1768, %v1424
      %v1770 = vadd.f32 %v1769, %v1425
      %v1771 = vadd.f32 %v1770, %v1426
      %v1772 = vadd.f32 %v1771, %v1427
      %v1773 = vadd.f32 %v1772, %v1428
      %v1774 = vadd.f32 %v1773, %v1429
      %v1775 = vadd.f32 %v1774, %v1430
      %v1776 = vrot.slane %v1775, 4
      %v1777 = vadd.f32 %v1775, %v1776
      %v1778 = vrot.slane %v1777, 2
      %v1779 = vadd.f32 %v1777, %v1778
      %v1780 = vrot.slane %v1779, 1
      %v1781 = vadd.f32 %v1779, %v1780
      %vm1782 = vcmp.eq.s32.totalorder %v1174, 0
      %v1783 = vsel %vm1782, %v1781, 0.0
      %vm1784 = vcmp.eq.s32.totalorder %v1174, 1
      %vm1785 = vcmp.eq.s32.totalorder %v659, 0
      %vm1786 = vmand %vm1784, %vm1785
      %v1787 = vstv %s1744
      %v1788 = vsel %vm1786, %v1787, %v1783
      %1789 = vst [vmem:[%s251] sm:$0xff] %v1788
      %s1790 = smul.u32 32, %s17
      %p1791 = scmp.lt.s32.totalorder %s1790, 63
      %s1792 = scalar_select %p1791, %s1790, 63
      %s1793 = smul.addr %s1792, 8
      %s1794 = scalar_lea.vmem %s3, %s1793
      %s1795 = smul.u32 32, %s17
      %p1796 = scmp.lt.s32.totalorder %s1795, 63
      %s1797 = scalar_select %p1796, %s1795, 63
      %s1798 = smul.addr %s1797, 8
      %s1799 = scalar_lea.vmem %s4, %s1798
      %p1800 = scmp.lt.s32.totalorder %s17, 1
      %s1801 = scalar_select %p1800, %s17, 1
      %s1802 = smul.addr %s1801, 8
      %s1803 = scalar_lea.vmem %s5, %s1802
      // Predicated region
      $region33: #{_forward_impl.1} parent=31 // pred_check
        %p1804 = pneg %p103
      $region34: #{_forward_impl.1} parent=31 // pred_check_branch
        %1806 = sbr.rel (%p1804) target = $region36
      $region35: #{_forward_impl.1} parent=31 // pred_region
        %s1807 = smul.u32 32, %s17
      $region36: #{_forward_impl.1} parent=31 // pred_fallthru
        _
      // Predicated region
      $region37: #{_forward_impl.1} parent=31 // pred_check
        %p1808 = pneg %p129
      $region38: #{_forward_impl.1} parent=31 // pred_check_branch
        %1810 = sbr.rel (%p1808) target = $region40
      $region39: #{_forward_impl.1} parent=31 // pred_region
        %s1811 = smul.u32 32, %s17
      $region40: #{_forward_impl.1} parent=31 // pred_fallthru
        _
      // Predicated region
      $region41: #{_forward_impl.1} parent=31 // pred_check
        %p1812 = pneg %p155
      $region42: #{_forward_impl.1} parent=31 // pred_check_branch
        %1814 = sbr.rel (%p1812) target = $region44
      $region43: #{_forward_impl.1} parent=31 // pred_region
        _
      $region44: #{_forward_impl.1} parent=31 // pred_fallthru
        _
    $region32: #{_forward_impl.1} parent=5 // pred_fallthru
      _
    %p1815 = scmp.le.s32.totalorder 2, %s12
    // Predicated region
    $region45: #{_forward_impl.1} parent=5 // pred_check
      %p1816 = pneg %p1815
    $region46: #{_forward_impl.1} parent=5 // pred_check_branch
      %1818 = sbr.rel (%p1816) target = $region48
    $region47: #{_forward_impl.1} parent=5 // pred_region
      %s1819 = ssub.s32 %s12, 2
      // Predicated region
      $region49: #{_forward_impl.1} parent=47 // pred_check
        %p1820 = pneg %p109
      $region50: #{_forward_impl.1} parent=47 // pred_check_branch
        %1822 = sbr.rel (%p1820) target = $region52
      $region51: #{_forward_impl.1} parent=47 // pred_region
        %s1823 = smul.u32 32, %s18
        %p1824 = scmp.lt.s32.totalorder %s1823, 63
        %s1825 = scalar_select %p1824, %s1823, 63
        %s1826 = smul.addr %s1825, 8
        %s1827 = scalar_lea.vmem %s3, %s1826
      $region52: #{_forward_impl.1} parent=47 // pred_fallthru
        _
      // Predicated region
      $region53: #{_forward_impl.1} parent=47 // pred_check
        %p1828 = pneg %p135
      $region54: #{_forward_impl.1} parent=47 // pred_check_branch
        %1830 = sbr.rel (%p1828) target = $region56
      $region55: #{_forward_impl.1} parent=47 // pred_region
        %s1831 = smul.u32 32, %s18
        %p1832 = scmp.lt.s32.totalorder %s1831, 63
        %s1833 = scalar_select %p1832, %s1831, 63
        %s1834 = smul.addr %s1833, 8
        %s1835 = scalar_lea.vmem %s4, %s1834
      $region56: #{_forward_impl.1} parent=47 // pred_fallthru
        _
      // Predicated region
      $region57: #{_forward_impl.1} parent=47 // pred_check
        %p1836 = pneg %p161
      $region58: #{_forward_impl.1} parent=47 // pred_check_branch
        %1838 = sbr.rel (%p1836) target = $region60
      $region59: #{_forward_impl.1} parent=47 // pred_region
        %p1839 = scmp.lt.s32.totalorder %s18, 1
        %s1840 = scalar_select %p1839, %s18, 1
        %s1841 = smul.addr %s1840, 8
        %s1842 = scalar_lea.vmem %s5, %s1841
      $region60: #{_forward_impl.1} parent=47 // pred_fallthru
        _
    $region48: #{_forward_impl.1} parent=5 // pred_fallthru
      _
  $region6: #{_forward_impl.1} parent=0 // loop_footer
    %s16 = sadd.s32 1, %s12
  $region7: #{_forward_impl.1} parent=0 // loop_footer_branch
    %11 = sbr.rel target = $region3
  $region8: #{_forward_impl.1} parent=0 // loop_exit
    _

// kernel: _forward_impl.1
$region0: #{_forward_impl.1}
  #allocation0 [shape = 'u32[]', space=smem, size = 0x4, offset = 0x4, fixed_abs, tag = 'smem constant byte address 0x4 - core index']
  #allocation1 [shape = 'u32[72,128]{1,0:T(1,128)}', space=vmem, size = 0x9000, scoped, tag = 'internal scratch']
  %s0 = inlined_call_operand.vmem [shape: f32[512,8], index: 0, kind: input, shape index: {}]
  %s1 = inlined_call_operand.vmem [shape: f32[128,8], index: 1, kind: input, shape index: {}]
  %s2 = inlined_call_operand.vmem [shape: f32[1,128], index: 2, kind: input, shape index: {}]
  %s3 = inlined_call_operand.vmem [shape: f32[512,8], index: 3, kind: output, shape index: {0}]
  %s4 = inlined_call_operand.vmem [shape: s32[512,1], index: 4, kind: output, shape index: {1}]
  %s5 = inlined_call_operand.vmem [shape: f32[16,128], index: 5, kind: output, shape index: {2}]
  %6 = xla_tuple %s3, %s4, %s5
  %s7 = sld [smem:[#allocation0]]
  $region61: #{_forward_impl.1} parent=0
    _
  %s9 = ssub.s32 1, %s7
  %s10 = scalar_select 0, %s9, %s7
  loop: start=0, step=1, limit=4
  $region2: #{_forward_impl.1} parent=0 // loop_pre_header
    _
  $region3: #{_forward_impl.1} parent=0 // loop_header
    %s12 = sphi 0, %s16
    %p13 = scmp.ge.s32.totalorder %s12, 4
    %s22 = sphi 0, %s24
    %s25 = sphi 0, %s22
    %s26 = sphi 0, %s25
    %s42 = sphi 0, %s26
    %s46 = sphi 0, %s46
    %s48 = sphi 0, %s46
    %s49 = sphi 0, %s48
    %s63 = sphi 0, %s49
    %s67 = sphi 0, %s67
    %s69 = sphi 0, %s67
    %s70 = sphi 0, %s69
    %s84 = sphi 0, %s70
    %s90 = sphi 0, %s92
    %s93 = sphi 0, %s90
    %s94 = sphi 0, %s93
    %s110 = sphi 0, %s94
    %s116 = sphi 0, %s118
    %s119 = sphi 0, %s116
    %s120 = sphi 0, %s119
    %s136 = sphi 0, %s120
    %s142 = sphi 0, %s144
    %s145 = sphi 0, %s142
    %s146 = sphi 0, %s145
    %s162 = sphi 0, %s146
  $region4: #{_forward_impl.1} parent=0 // loop_header_branch
    %15 = sbr.rel (%p13) target = $region8
  $region5: #{_forward_impl.1} parent=0 // loop_body
    %s17 = ssub.s32 %s12, 1
    %s18 = ssub.s32 %s12, 2
    %s19 = sadd.s32 %s12, 1
    %s20 = ssub.s32 %s12, %s19
    %p21 = scmp.eq.s32.totalorder %s20, 0
    %s23 = sadd.s32 %s22, 1
    %s24 = scalar_select %p21, %s22, %s23
    %p27 = pneg %p21
    %p28 = scmp.eq.s32.totalorder %s12, 1
    %p29 = por %p27, %p28
    %p30 = scmp.ne.s32.totalorder %s22, %s25
    %p31 = scmp.eq.s32.totalorder %s12, 0
    %p32 = por %p30, %p31
    %p33 = scmp.ne.s32.totalorder %s22, %s25
    %p34 = scmp.eq.s32.totalorder %s17, 1
    %p35 = por %p33, %p34
    %p36 = scmp.ne.s32.totalorder %s25, %s26
    %p37 = scmp.eq.s32.totalorder %s17, 0
    %p38 = por %p36, %p37
    %p39 = scmp.ne.s32.totalorder %s25, %s26
    %p40 = scmp.eq.s32.totalorder %s18, 1
    %p41 = por %p39, %p40
    %p43 = scmp.ne.s32.totalorder %s26, %s42
    %p44 = scmp.eq.s32.totalorder %s18, 0
    %p45 = por %p43, %p44
    %s47 = sadd.s32 %s46, 1
    %p50 = scmp.eq.s32.totalorder %s12, 1
    %p51 = scmp.ne.s32.totalorder %s46, %s48
    %p52 = scmp.eq.s32.totalorder %s12, 0
    %p53 = por %p51, %p52
    %p54 = scmp.ne.s32.totalorder %s46, %s48
    %p55 = scmp.eq.s32.totalorder %s17, 1
    %p56 = por %p54, %p55
    %p57 = scmp.ne.s32.totalorder %s48, %s49
    %p58 = scmp.eq.s32.totalorder %s17, 0
    %p59 = por %p57, %p58
    %p60 = scmp.ne.s32.totalorder %s48, %s49
    %p61 = scmp.eq.s32.totalorder %s18, 1
    %p62 = por %p60, %p61
    %p64 = scmp.ne.s32.totalorder %s49, %s63
    %p65 = scmp.eq.s32.totalorder %s18, 0
    %p66 = por %p64, %p65
    %s68 = sadd.s32 %s67, 1
    %p71 = scmp.eq.s32.totalorder %s12, 1
    %p72 = scmp.ne.s32.totalorder %s67, %s69
    %p73 = scmp.eq.s32.totalorder %s12, 0
    %p74 = por %p72, %p73
    %p75 = scmp.ne.s32.totalorder %s67, %s69
    %p76 = scmp.eq.s32.totalorder %s17, 1
    %p77 = por %p75, %p76
    %p78 = scmp.ne.s32.totalorder %s69, %s70
    %p79 = scmp.eq.s32.totalorder %s17, 0
    %p80 = por %p78, %p79
    %p81 = scmp.ne.s32.totalorder %s69, %s70
    %p82 = scmp.eq.s32.totalorder %s18, 1
    %p83 = por %p81, %p82
    %p85 = scmp.ne.s32.totalorder %s70, %s84
    %p86 = scmp.eq.s32.totalorder %s18, 0
    %p87 = por %p85, %p86
    %s88 = ssub.s32 %s12, %s19
    %p89 = scmp.eq.s32.totalorder %s88, 0
    %s91 = sadd.s32 %s90, 1
    %s92 = scalar_select %p89, %s90, %s91
    %p95 = pneg %p89
    %p96 = scmp.eq.s32.totalorder %s12, 1
    %p97 = por %p95, %p96
    %p98 = scmp.ne.s32.totalorder %s90, %s93
    %p99 = scmp.eq.s32.totalorder %s12, 0
    %p100 = por %p98, %p99
    %p101 = scmp.ne.s32.totalorder %s90, %s93
    %p102 = scmp.eq.s32.totalorder %s17, 1
    %p103 = por %p101, %p102
    %p104 = scmp.ne.s32.totalorder %s93, %s94
    %p105 = scmp.eq.s32.totalorder %s17, 0
    %p106 = por %p104, %p105
    %p107 = scmp.ne.s32.totalorder %s93, %s94
    %p108 = scmp.eq.s32.totalorder %s18, 1
    %p109 = por %p107, %p108
    %p111 = scmp.ne.s32.totalorder %s94, %s110
    %p112 = scmp.eq.s32.totalorder %s18, 0
    %p113 = por %p111, %p112
    %s114 = ssub.s32 %s12, %s19
    %p115 = scmp.eq.s32.totalorder %s114, 0
    %s117 = sadd.s32 %s116, 1
    %s118 = scalar_select %p115, %s116, %s117
    %p121 = pneg %p115
    %p122 = scmp.eq.s32.totalorder %s12, 1
    %p123 = por %p121, %p122
    %p124 = scmp.ne.s32.totalorder %s116, %s119
    %p125 = scmp.eq.s32.totalorder %s12, 0
    %p126 = por %p124, %p125
    %p127 = scmp.ne.s32.totalorder %s116, %s119
    %p128 = scmp.eq.s32.totalorder %s17, 1
    %p129 = por %p127, %p128
    %p130 = scmp.ne.s32.totalorder %s119, %s120
    %p131 = scmp.eq.s32.totalorder %s17, 0
    %p132 = por %p130, %p131
    %p133 = scmp.ne.s32.totalorder %s119, %s120
    %p134 = scmp.eq.s32.totalorder %s18, 1
    %p135 = por %p133, %p134
    %p137 = scmp.ne.s32.totalorder %s120, %s136
    %p138 = scmp.eq.s32.totalorder %s18, 0
    %p139 = por %p137, %p138
    %s140 = ssub.s32 %s12, %s19
    %p141 = scmp.eq.s32.totalorder %s140, 0
    %s143 = sadd.s32 %s142, 1
    %s144 = scalar_select %p141, %s142, %s143
    %p147 = pneg %p141
    %p148 = scmp.eq.s32.totalorder %s12, 1
    %p149 = por %p147, %p148
    %p150 = scmp.ne.s32.totalorder %s142, %s145
    %p151 = scmp.eq.s32.totalorder %s12, 0
    %p152 = por %p150, %p151
    %p153 = scmp.ne.s32.totalorder %s142, %s145
    %p154 = scmp.eq.s32.totalorder %s17, 1
    %p155 = por %p153, %p154
    %p156 = scmp.ne.s32.totalorder %s145, %s146
    %p157 = scmp.eq.s32.totalorder %s17, 0
    %p158 = por %p156, %p157
    %p159 = scmp.ne.s32.totalorder %s145, %s146
    %p160 = scmp.eq.s32.totalorder %s18, 1
    %p161 = por %p159, %p160
    %p163 = scmp.ne.s32.totalorder %s146, %s162
    %p164 = scmp.eq.s32.totalorder %s18, 0
    %p165 = por %p163, %p164
    %p166 = scmp.le.s32.totalorder 1, %s12
    %p167 = scmp.lt.s32.totalorder %s12, 3
    %p168 = pnand %p166, %p167
    %p169 = pneg %p168
    // Predicated region
    $region9: #{_forward_impl.1} parent=5 // pred_check
      _
    $region10: #{_forward_impl.1} parent=5 // pred_check_branch
      %171 = sbr.rel (%p168) target = $region12
    $region11: #{_forward_impl.1} parent=5 // pred_region
      %s172 = ssub.s32 %s12, 1
      // Predicated region
      $region13: #{_forward_impl.1} parent=11 // pred_check
        %p173 = pneg %p59
      $region14: #{_forward_impl.1} parent=11 // pred_check_branch
        %175 = sbr.rel (%p173) target = $region16
      $region15: #{_forward_impl.1} parent=11 // pred_region
        _
      $region16: #{_forward_impl.1} parent=11 // pred_fallthru
        _
      // Predicated region
      $region17: #{_forward_impl.1} parent=11 // pred_check
        %p176 = pneg %p80
      $region18: #{_forward_impl.1} parent=11 // pred_check_branch
        %178 = sbr.rel (%p176) target = $region20
      $region19: #{_forward_impl.1} parent=11 // pred_region
        _
      $region20: #{_forward_impl.1} parent=11 // pred_fallthru
        _
    $region12: #{_forward_impl.1} parent=5 // pred_fallthru
      _
    %p179 = scmp.lt.s32.totalorder %s12, 2
    // Predicated region
    $region21: #{_forward_impl.1} parent=5 // pred_check
      %p180 = pneg %p179
    $region22: #{_forward_impl.1} parent=5 // pred_check_branch
      %182 = sbr.rel (%p180) target = $region24
    $region23: #{_forward_impl.1} parent=5 // pred_region
      // Predicated region
      $region25: #{_forward_impl.1} parent=23 // pred_check
        %p183 = pneg %p32
      $region26: #{_forward_impl.1} parent=23 // pred_check_branch
        %185 = sbr.rel (%p183) target = $region28
      $region27: #{_forward_impl.1} parent=23 // pred_region
        %s186 = smul.u32 32, %s12
        %p187 = scmp.lt.s32.totalorder %s186, 63
        %s188 = scalar_select %p187, %s186, 63
        %s189 = smul.addr %s188, 8
        %s190 = scalar_lea.vmem %s0, %s189
        %s191 = smul.u32 32, %s12
      $region28: #{_forward_impl.1} parent=23 // pred_fallthru
        _
    $region24: #{_forward_impl.1} parent=5 // pred_fallthru
      _
    %p192 = scmp.le.s32.totalorder 1, %s12
    %p193 = scmp.lt.s32.totalorder %s12, 3
    %p194 = pnand %p192, %p193
    %p195 = pneg %p194
    // Predicated region
    $region29: #{_forward_impl.1} parent=5 // pred_check
      _
    $region30: #{_forward_impl.1} parent=5 // pred_check_branch
      %197 = sbr.rel (%p194) target = $region32
    $region31: #{_forward_impl.1} parent=5 // pred_region
      %s198 = ssub.s32 %s12, 1
      %s199 = smul.u32 32, %s17
      %p200 = scmp.lt.s32.totalorder %s199, 63
      %s201 = scalar_select %p200, %s199, 63
      %s202 = smul.addr %s201, 8
      %s203 = scalar_lea.vmem %s0, %s202
      %p204 = pneg %p38
      %p205 = pneg %p35
      %p206 = pneg %p59
      %p207 = pneg %p56
      %p208 = pneg %p80
      %p209 = pneg %p77
      %p210 = pneg %p106
      %p211 = pneg %p103
      %s212 = smul.u32 32, %s17
      %p213 = scmp.lt.s32.totalorder %s212, 63
      %s214 = scalar_select %p213, %s212, 63
      %s215 = smul.addr %s214, 8
      %s216 = scalar_lea.vmem %s3, %s215
      %p217 = pneg %p132
      %p218 = pneg %p129
      %s219 = smul.u32 32, %s17
      %p220 = scmp.lt.s32.totalorder %s219, 63
      %s221 = scalar_select %p220, %s219, 63
      %s222 = smul.addr %s221, 8
      %s223 = scalar_lea.vmem %s4, %s222
      %p224 = pneg %p158
      %p225 = pneg %p155
      %p226 = scmp.lt.s32.totalorder %s17, 1
      %s227 = scalar_select %p226, %s17, 1
      %s228 = smul.addr %s227, 8
      %s229 = scalar_lea.vmem %s5, %s228
      %s230 = smul.u32 32, %s17
      %p231 = scmp.lt.s32.totalorder %s230, 63
      %s232 = scalar_select %p231, %s230, 63
      %s233 = smul.addr %s232, 8
      %s234 = scalar_lea.vmem %s0, %s233
      %s235 = smul.u32 32, %s17
      %s236 = smul.u32 32, %s17
      %p237 = scmp.lt.s32.totalorder %s236, 63
      %s238 = scalar_select %p237, %s236, 63
      %s239 = smul.addr %s238, 8
      %s240 = scalar_lea.vmem %s3, %s239
      %s241 = smul.u32 32, %s17
      %s242 = smul.u32 32, %s17
      %p243 = scmp.lt.s32.totalorder %s242, 63
      %s244 = scalar_select %p243, %s242, 63
      %s245 = smul.addr %s244, 8
      %s246 = scalar_lea.vmem %s4, %s245
      %s247 = smul.u32 32, %s17
      %p248 = scmp.lt.s32.totalorder %s17, 1
      %s249 = scalar_select %p248, %s17, 1
      %s250 = smul.addr %s249, 8
      %s251 = scalar_lea.vmem %s5, %s250
      %v252 = vld [vmem:[%s234] sm:$0xff]
      %v253 = vld [vmem:[%s234 + $0x8] sm:$0xff]
      %v254 = vld [vmem:[%s234 + $0x10] sm:$0xff]
      %v255 = vld [vmem:[%s234 + $0x18] sm:$0xff]
      %v256 = vld [vmem:[%s234 + $0x20] sm:$0xff]
      %v257 = vld [vmem:[%s234 + $0x28] sm:$0xff]
      %v258 = vld [vmem:[%s234 + $0x30] sm:$0xff]
      %v259 = vld [vmem:[%s234 + $0x38] sm:$0xff]
      %v260 = vld [vmem:[%s234 + $0x40] sm:$0xff]
      %v261 = vld [vmem:[%s234 + $0x48] sm:$0xff]
      %v262 = vld [vmem:[%s234 + $0x50] sm:$0xff]
      %v263 = vld [vmem:[%s234 + $0x58] sm:$0xff]
      %v264 = vld [vmem:[%s234 + $0x60] sm:$0xff]
      %v265 = vld [vmem:[%s234 + $0x68] sm:$0xff]
      %v266 = vld [vmem:[%s234 + $0x70] sm:$0xff]
      %v267 = vld [vmem:[%s234 + $0x78] sm:$0xff]
      %v268 = vld [vmem:[%s234 + $0x80] sm:$0xff]
      %v269 = vld [vmem:[%s234 + $0x88] sm:$0xff]
      %v270 = vld [vmem:[%s234 + $0x90] sm:$0xff]
      %v271 = vld [vmem:[%s234 + $0x98] sm:$0xff]
      %v272 = vld [vmem:[%s234 + $0xa0] sm:$0xff]
      %v273 = vld [vmem:[%s234 + $0xa8] sm:$0xff]
      %v274 = vld [vmem:[%s234 + $0xb0] sm:$0xff]
      %v275 = vld [vmem:[%s234 + $0xb8] sm:$0xff]
      %v276 = vld [vmem:[%s234 + $0xc0] sm:$0xff]
      %v277 = vld [vmem:[%s234 + $0xc8] sm:$0xff]
      %v278 = vld [vmem:[%s234 + $0xd0] sm:$0xff]
      %v279 = vld [vmem:[%s234 + $0xd8] sm:$0xff]
      %v280 = vld [vmem:[%s234 + $0xe0] sm:$0xff]
      %v281 = vld [vmem:[%s234 + $0xe8] sm:$0xff]
      %v282 = vld [vmem:[%s234 + $0xf0] sm:$0xff]
      %v283 = vld [vmem:[%s234 + $0xf8] sm:$0xff]
      %v284 = vld [vmem:[%s1] sm:$0xff]
      %v285 = vld [vmem:[%s1 + $0x8] sm:$0xff]
      %v286 = vld [vmem:[%s1 + $0x10] sm:$0xff]
      %v287 = vld [vmem:[%s1 + $0x18] sm:$0xff]
      %v288 = vld [vmem:[%s1 + $0x20] sm:$0xff]
      %v289 = vld [vmem:[%s1 + $0x28] sm:$0xff]
      %v290 = vld [vmem:[%s1 + $0x30] sm:$0xff]
      %v291 = vld [vmem:[%s1 + $0x38] sm:$0xff]
      %v292 = vld [vmem:[%s1 + $0x40] sm:$0xff]
      %v293 = vld [vmem:[%s1 + $0x48] sm:$0xff]
      %v294 = vld [vmem:[%s1 + $0x50] sm:$0xff]
      %v295 = vld [vmem:[%s1 + $0x58] sm:$0xff]
      %v296 = vld [vmem:[%s1 + $0x60] sm:$0xff]
      %v297 = vld [vmem:[%s1 + $0x68] sm:$0xff]
      %v298 = vld [vmem:[%s1 + $0x70] sm:$0xff]
      %v299 = vld [vmem:[%s1 + $0x78] sm:$0xff]
      %v300 = vld [vmem:[%s2] sm:$0x1]
      %vm301 = vcmask 64512
      %v303 = vsel %vm301, %v252, 0
      %v306 = vsel %vm301, %v253, 0
      %v309 = vsel %vm301, %v254, 0
      %v312 = vsel %vm301, %v255, 0
      %v315 = vsel %vm301, %v256, 0
      %v318 = vsel %vm301, %v257, 0
      %v321 = vsel %vm301, %v258, 0
      %v324 = vsel %vm301, %v259, 0
      %v327 = vsel %vm301, %v260, 0
      %v330 = vsel %vm301, %v261, 0
      %v333 = vsel %vm301, %v262, 0
      %v336 = vsel %vm301, %v263, 0
      %v339 = vsel %vm301, %v264, 0
      %v342 = vsel %vm301, %v265, 0
      %v345 = vsel %vm301, %v266, 0
      %v348 = vsel %vm301, %v267, 0
      %v351 = vsel %vm301, %v268, 0
      %v354 = vsel %vm301, %v269, 0
      %v357 = vsel %vm301, %v270, 0
      %v360 = vsel %vm301, %v271, 0
      %v363 = vsel %vm301, %v272, 0
      %v366 = vsel %vm301, %v273, 0
      %v369 = vsel %vm301, %v274, 0
      %v372 = vsel %vm301, %v275, 0
      %v375 = vsel %vm301, %v276, 0
      %v378 = vsel %vm301, %v277, 0
      %v381 = vsel %vm301, %v278, 0
      %v384 = vsel %vm301, %v279, 0
      %v387 = vsel %vm301, %v280, 0
      %v390 = vsel %vm301, %v281, 0
      %v393 = vsel %vm301, %v282, 0
      %v396 = vsel %vm301, %v283, 0
      %v399 = vsel %vm301, %v284, 0
      %v402 = vsel %vm301, %v285, 0
      %v405 = vsel %vm301, %v286, 0
      %v408 = vsel %vm301, %v287, 0
      %v411 = vsel %vm301, %v288, 0
      %v414 = vsel %vm301, %v289, 0
      %v417 = vsel %vm301, %v290, 0
      %v420 = vsel %vm301, %v291, 0
      %v423 = vsel %vm301, %v292, 0
      %v426 = vsel %vm301, %v293, 0
      %v429 = vsel %vm301, %v294, 0
      %v432 = vsel %vm301, %v295, 0
      %v435 = vsel %vm301, %v296, 0
      %v438 = vsel %vm301, %v297, 0
      %v441 = vsel %vm301, %v298, 0
      %v444 = vsel %vm301, %v299, 0
      %446 = vmatpush.xpose.msra.mxu0 %v444
      %447 = vmatpush.xpose.msra.mxu0 %v441
      %448 = vmatpush.xpose.msra.mxu0 %v438
      %449 = vmatpush.xpose.msra.mxu0 %v435
      %450 = vmatpush.xpose.msra.mxu0 %v432
      %451 = vmatpush.xpose.msra.mxu0 %v429
      %452 = vmatpush.xpose.msra.mxu0 %v426
      %453 = vmatpush.xpose.msra.mxu0 %v423
      %454 = vmatpush.xpose.msra.mxu0 %v420
      %455 = vmatpush.xpose.msra.mxu0 %v417
      %456 = vmatpush.xpose.msra.mxu0 %v414
      %457 = vmatpush.xpose.msra.mxu0 %v411
      %458 = vmatpush.xpose.msra.mxu0 %v408
      %459 = vmatpush.xpose.msra.mxu0 %v405
      %460 = vmatpush.xpose.msra.mxu0 %v402
      %461 = vmatpush.xpose.msra.mxu0 %v399
      %462 = vmatmul.f32.gmra.mxu0 %v303
      %v463 = vpop.f32.mrf.mxu0
      %v464 = vadd.f32 0.0, %v463
      %465 = vmatmul.f32.gmra.mxu0 %v306
      %v466 = vpop.f32.mrf.mxu0
      %v467 = vadd.f32 0.0, %v466
      %468 = vmatmul.f32.gmra.mxu0 %v309
      %v469 = vpop.f32.mrf.mxu0
      %v470 = vadd.f32 0.0, %v469
      %471 = vmatmul.f32.gmra.mxu0 %v312
      %v472 = vpop.f32.mrf.mxu0
      %v473 = vadd.f32 0.0, %v472
      %474 = vmatmul.f32.gmra.mxu0 %v315
      %v475 = vpop.f32.mrf.mxu0
      %v476 = vadd.f32 0.0, %v475
      %477 = vmatmul.f32.gmra.mxu0 %v318
      %v478 = vpop.f32.mrf.mxu0
      %v479 = vadd.f32 0.0, %v478
      %480 = vmatmul.f32.gmra.mxu0 %v321
      %v481 = vpop.f32.mrf.mxu0
      %v482 = vadd.f32 0.0, %v481
      %483 = vmatmul.f32.gmra.mxu0 %v324
      %v484 = vpop.f32.mrf.mxu0
      %v485 = vadd.f32 0.0, %v484
      %486 = vmatmul.f32.gmra.mxu0 %v327
      %v487 = vpop.f32.mrf.mxu0
      %v488 = vadd.f32 0.0, %v487
      %489 = vmatmul.f32.gmra.mxu0 %v330
      %v490 = vpop.f32.mrf.mxu0
      %v491 = vadd.f32 0.0, %v490
      %492 = vmatmul.f32.gmra.mxu0 %v333
      %v493 = vpop.f32.mrf.mxu0
      %v494 = vadd.f32 0.0, %v493
      %495 = vmatmul.f32.gmra.mxu0 %v336
      %v496 = vpop.f32.mrf.mxu0
      %v497 = vadd.f32 0.0, %v496
      %498 = vmatmul.f32.gmra.mxu0 %v339
      %v499 = vpop.f32.mrf.mxu0
      %v500 = vadd.f32 0.0, %v499
      %501 = vmatmul.f32.gmra.mxu0 %v342
      %v502 = vpop.f32.mrf.mxu0
      %v503 = vadd.f32 0.0, %v502
      %504 = vmatmul.f32.gmra.mxu0 %v345
      %v505 = vpop.f32.mrf.mxu0
      %v506 = vadd.f32 0.0, %v505
      %507 = vmatmul.f32.gmra.mxu0 %v348
      %v508 = vpop.f32.mrf.mxu0
      %v509 = vadd.f32 0.0, %v508
      %510 = vmatmul.f32.gmra.mxu0 %v351
      %v511 = vpop.f32.mrf.mxu0
      %v512 = vadd.f32 0.0, %v511
      %513 = vmatmul.f32.gmra.mxu0 %v354
      %v514 = vpop.f32.mrf.mxu0
      %v515 = vadd.f32 0.0, %v514
      %516 = vmatmul.f32.gmra.mxu0 %v357
      %v517 = vpop.f32.mrf.mxu0
      %v518 = vadd.f32 0.0, %v517
      %519 = vmatmul.f32.gmra.mxu0 %v360
      %v520 = vpop.f32.mrf.mxu0
      %v521 = vadd.f32 0.0, %v520
      %522 = vmatmul.f32.gmra.mxu0 %v363
      %v523 = vpop.f32.mrf.mxu0
      %v524 = vadd.f32 0.0, %v523
      %525 = vmatmul.f32.gmra.mxu0 %v366
      %v526 = vpop.f32.mrf.mxu0
      %v527 = vadd.f32 0.0, %v526
      %528 = vmatmul.f32.gmra.mxu0 %v369
      %v529 = vpop.f32.mrf.mxu0
      %v530 = vadd.f32 0.0, %v529
      %531 = vmatmul.f32.gmra.mxu0 %v372
      %v532 = vpop.f32.mrf.mxu0
      %v533 = vadd.f32 0.0, %v532
      %534 = vmatmul.f32.gmra.mxu0 %v375
      %v535 = vpop.f32.mrf.mxu0
      %v536 = vadd.f32 0.0, %v535
      %537 = vmatmul.f32.gmra.mxu0 %v378
      %v538 = vpop.f32.mrf.mxu0
      %v539 = vadd.f32 0.0, %v538
      %540 = vmatmul.f32.gmra.mxu0 %v381
      %v541 = vpop.f32.mrf.mxu0
      %v542 = vadd.f32 0.0, %v541
      %543 = vmatmul.f32.gmra.mxu0 %v384
      %v544 = vpop.f32.mrf.mxu0
      %v545 = vadd.f32 0.0, %v544
      %546 = vmatmul.f32.gmra.mxu0 %v387
      %v547 = vpop.f32.mrf.mxu0
      %v548 = vadd.f32 0.0, %v547
      %549 = vmatmul.f32.gmra.mxu0 %v390
      %v550 = vpop.f32.mrf.mxu0
      %v551 = vadd.f32 0.0, %v550
      %552 = vmatmul.f32.gmra.mxu0 %v393
      %v553 = vpop.f32.mrf.mxu0
      %v554 = vadd.f32 0.0, %v553
      %555 = vmatmul.f32.gmra.mxu0 %v396
      %v556 = vpop.f32.mrf.mxu0
      %v557 = vadd.f32 0.0, %v556
      %558 = vdwg.mxu0
      %v560 = vperm.slane %v300, 0
      %v562 = vsub.f32 %v560, %v464
      %v563 = vsub.f32 %v560, %v467
      %v564 = vsub.f32 %v560, %v470
      %v565 = vsub.f32 %v560, %v473
      %v566 = vsub.f32 %v560, %v476
      %v567 = vsub.f32 %v560, %v479
      %v568 = vsub.f32 %v560, %v482
      %v569 = vsub.f32 %v560, %v485
      %v570 = vsub.f32 %v560, %v488
      %v571 = vsub.f32 %v560, %v491
      %v572 = vsub.f32 %v560, %v494
      %v573 = vsub.f32 %v560, %v497
      %v574 = vsub.f32 %v560, %v500
      %v575 = vsub.f32 %v560, %v503
      %v576 = vsub.f32 %v560, %v506
      %v577 = vsub.f32 %v560, %v509
      %v578 = vsub.f32 %v560, %v512
      %v579 = vsub.f32 %v560, %v515
      %v580 = vsub.f32 %v560, %v518
      %v581 = vsub.f32 %v560, %v521
      %v582 = vsub.f32 %v560, %v524
      %v583 = vsub.f32 %v560, %v527
      %v584 = vsub.f32 %v560, %v530
      %v585 = vsub.f32 %v560, %v533
      %v586 = vsub.f32 %v560, %v536
      %v587 = vsub.f32 %v560, %v539
      %v588 = vsub.f32 %v560, %v542
      %v589 = vsub.f32 %v560, %v545
      %v590 = vsub.f32 %v560, %v548
      %v591 = vsub.f32 %v560, %v551
      %v592 = vsub.f32 %v560, %v554
      %v593 = vsub.f32 %v560, %v557
      %594 = vmin.xlane.f32.xlu0 %v562
      %v595 = vpop.xlane.xlu0 %594
      %596 = vmin.xlane.f32.xlu0 %v563
      %v597 = vpop.xlane.xlu0 %596
      %598 = vmin.xlane.f32.xlu0 %v564
      %v599 = vpop.xlane.xlu0 %598
      %600 = vmin.xlane.f32.xlu0 %v565
      %v601 = vpop.xlane.xlu0 %600
      %602 = vmin.xlane.f32.xlu0 %v566
      %v603 = vpop.xlane.xlu0 %602
      %604 = vmin.xlane.f32.xlu0 %v567
      %v605 = vpop.xlane.xlu0 %604
      %606 = vmin.xlane.f32.xlu0 %v568
      %v607 = vpop.xlane.xlu0 %606
      %608 = vmin.xlane.f32.xlu0 %v569
      %v609 = vpop.xlane.xlu0 %608
      %610 = vmin.xlane.f32.xlu0 %v570
      %v611 = vpop.xlane.xlu0 %610
      %612 = vmin.xlane.f32.xlu0 %v571
      %v613 = vpop.xlane.xlu0 %612
      %614 = vmin.xlane.f32.xlu0 %v572
      %v615 = vpop.xlane.xlu0 %614
      %616 = vmin.xlane.f32.xlu0 %v573
      %v617 = vpop.xlane.xlu0 %616
      %618 = vmin.xlane.f32.xlu0 %v574
      %v619 = vpop.xlane.xlu0 %618
      %620 = vmin.xlane.f32.xlu0 %v575
      %v621 = vpop.xlane.xlu0 %620
      %622 = vmin.xlane.f32.xlu0 %v576
      %v623 = vpop.xlane.xlu0 %622
      %624 = vmin.xlane.f32.xlu0 %v577
      %v625 = vpop.xlane.xlu0 %624
      %626 = vmin.xlane.f32.xlu0 %v578
      %v627 = vpop.xlane.xlu0 %626
      %628 = vmin.xlane.f32.xlu0 %v579
      %v629 = vpop.xlane.xlu0 %628
      %630 = vmin.xlane.f32.xlu0 %v580
      %v631 = vpop.xlane.xlu0 %630
      %632 = vmin.xlane.f32.xlu0 %v581
      %v633 = vpop.xlane.xlu0 %632
      %634 = vmin.xlane.f32.xlu0 %v582
      %v635 = vpop.xlane.xlu0 %634
      %636 = vmin.xlane.f32.xlu0 %v583
      %v637 = vpop.xlane.xlu0 %636
      %638 = vmin.xlane.f32.xlu0 %v584
      %v639 = vpop.xlane.xlu0 %638
      %640 = vmin.xlane.f32.xlu0 %v585
      %v641 = vpop.xlane.xlu0 %640
      %642 = vmin.xlane.f32.xlu0 %v586
      %v643 = vpop.xlane.xlu0 %642
      %644 = vmin.xlane.f32.xlu0 %v587
      %v645 = vpop.xlane.xlu0 %644
      %646 = vmin.xlane.f32.xlu0 %v588
      %v647 = vpop.xlane.xlu0 %646
      %648 = vmin.xlane.f32.xlu0 %v589
      %v649 = vpop.xlane.xlu0 %648
      %650 = vmin.xlane.f32.xlu0 %v590
      %v651 = vpop.xlane.xlu0 %650
      %652 = vmin.xlane.f32.xlu0 %v591
      %v653 = vpop.xlane.xlu0 %652
      %654 = vmin.xlane.f32.xlu0 %v592
      %v655 = vpop.xlane.xlu0 %654
      %656 = vmin.xlane.f32.xlu0 %v593
      %v657 = vpop.xlane.xlu0 %656
      %v658 = vlaneseq
      %v659 = vand.u32 %v658, 127
      %vm660 = vcmp.eq.f32.partialorder %v562, %v595
      %vm661 = vcmp.eq.f32.partialorder %v563, %v597
      %vm662 = vcmp.eq.f32.partialorder %v564, %v599
      %vm663 = vcmp.eq.f32.partialorder %v565, %v601
      %vm664 = vcmp.eq.f32.partialorder %v566, %v603
      %vm665 = vcmp.eq.f32.partialorder %v567, %v605
      %vm666 = vcmp.eq.f32.partialorder %v568, %v607
      %vm667 = vcmp.eq.f32.partialorder %v569, %v609
      %vm668 = vcmp.eq.f32.partialorder %v570, %v611
      %vm669 = vcmp.eq.f32.partialorder %v571, %v613
      %vm670 = vcmp.eq.f32.partialorder %v572, %v615
      %vm671 = vcmp.eq.f32.partialorder %v573, %v617
      %vm672 = vcmp.eq.f32.partialorder %v574, %v619
      %vm673 = vcmp.eq.f32.partialorder %v575, %v621
      %vm674 = vcmp.eq.f32.partialorder %v576, %v623
      %vm675 = vcmp.eq.f32.partialorder %v577, %v625
      %vm676 = vcmp.eq.f32.partialorder %v578, %v627
      %vm677 = vcmp.eq.f32.partialorder %v579, %v629
      %vm678 = vcmp.eq.f32.partialorder %v580, %v631
      %vm679 = vcmp.eq.f32.partialorder %v581, %v633
      %vm680 = vcmp.eq.f32.partialorder %v582, %v635
      %vm681 = vcmp.eq.f32.partialorder %v583, %v637
      %vm682 = vcmp.eq.f32.partialorder %v584, %v639
      %vm683 = vcmp.eq.f32.partialorder %v585, %v641
      %vm684 = vcmp.eq.f32.partialorder %v586, %v643
      %vm685 = vcmp.eq.f32.partialorder %v587, %v645
      %vm686 = vcmp.eq.f32.partialorder %v588, %v647
      %vm687 = vcmp.eq.f32.partialorder %v589, %v649
      %vm688 = vcmp.eq.f32.partialorder %v590, %v651
      %vm689 = vcmp.eq.f32.partialorder %v591, %v653
      %vm690 = vcmp.eq.f32.partialorder %v592, %v655
      %vm691 = vcmp.eq.f32.partialorder %v593, %v657
      %v692 = vsel %vm660, %v659, 128
      %v693 = vsel %vm661, %v659, 128
      %v694 = vsel %vm662, %v659, 128
      %v695 = vsel %vm663, %v659, 128
      %v696 = vsel %vm664, %v659, 128
      %v697 = vsel %vm665, %v659, 128
      %v698 = vsel %vm666, %v659, 128
      %v699 = vsel %vm667, %v659, 128
      %v700 = vsel %vm668, %v659, 128
      %v701 = vsel %vm669, %v659, 128
      %v702 = vsel %vm670, %v659, 128
      %v703 = vsel %vm671, %v659, 128
      %v704 = vsel %vm672, %v659, 128
      %v705 = vsel %vm673, %v659, 128
      %v706 = vsel %vm674, %v659, 128
      %v707 = vsel %vm675, %v659, 128
      %v708 = vsel %vm676, %v659, 128
      %v709 = vsel %vm677, %v659, 128
      %v710 = vsel %vm678, %v659, 128
      %v711 = vsel %vm679, %v659, 128
      %v712 = vsel %vm680, %v659, 128
      %v713 = vsel %vm681, %v659, 128
      %v714 = vsel %vm682, %v659, 128
      %v715 = vsel %vm683, %v659, 128
      %v716 = vsel %vm684, %v659, 128
      %v717 = vsel %vm685, %v659, 128
      %v718 = vsel %vm686, %v659, 128
      %v719 = vsel %vm687, %v659, 128
      %v720 = vsel %vm688, %v659, 128
      %v721 = vsel %vm689, %v659, 128
      %v722 = vsel %vm690, %v659, 128
      %v723 = vsel %vm691, %v659, 128
      %v724 = vand.u32 %v692, 65535
      %v725 = vshra.s32 %v692, 16
      %v726 = vcvt.s32.f32 %v724
      %v727 = vcvt.s32.f32 %v725
      %728 = vmin.xlane.f32.xlu0 %v727
      %v729 = vpop.xlane.xlu0 %728
      %vm730 = vcmp.eq.f32.partialorder %v727, %v729
      %v731 = vsel %vm730, %v726, inf
      %732 = vmin.xlane.f32.xlu0 %v731
      %v733 = vpop.xlane.xlu0 %732
      %v734 = vcvt.f32.s32 %v733
      %v735 = vcvt.f32.s32 %v729
      %v736 = vshll.u32 %v735, 16
      %v737 = vadd.s32 %v736, %v734
      %v738 = vand.u32 %v693, 65535
      %v739 = vshra.s32 %v693, 16
      %v740 = vcvt.s32.f32 %v738
      %v741 = vcvt.s32.f32 %v739
      %742 = vmin.xlane.f32.xlu0 %v741
      %v743 = vpop.xlane.xlu0 %742
      %vm744 = vcmp.eq.f32.partialorder %v741, %v743
      %v745 = vsel %vm744, %v740, inf
      %746 = vmin.xlane.f32.xlu0 %v745
      %v747 = vpop.xlane.xlu0 %746
      %v748 = vcvt.f32.s32 %v747
      %v749 = vcvt.f32.s32 %v743
      %v750 = vshll.u32 %v749, 16
      %v751 = vadd.s32 %v750, %v748
      %v752 = vand.u32 %v694, 65535
      %v753 = vshra.s32 %v694, 16
      %v754 = vcvt.s32.f32 %v752
      %v755 = vcvt.s32.f32 %v753
      %756 = vmin.xlane.f32.xlu0 %v755
      %v757 = vpop.xlane.xlu0 %756
      %vm758 = vcmp.eq.f32.partialorder %v755, %v757
      %v759 = vsel %vm758, %v754, inf
      %760 = vmin.xlane.f32.xlu0 %v759
      %v761 = vpop.xlane.xlu0 %760
      %v762 = vcvt.f32.s32 %v761
      %v763 = vcvt.f32.s32 %v757
      %v764 = vshll.u32 %v763, 16
      %v765 = vadd.s32 %v764, %v762
      %v766 = vand.u32 %v695, 65535
      %v767 = vshra.s32 %v695, 16
      %v768 = vcvt.s32.f32 %v766
      %v769 = vcvt.s32.f32 %v767
      %770 = vmin.xlane.f32.xlu0 %v769
      %v771 = vpop.xlane.xlu0 %770
      %vm772 = vcmp.eq.f32.partialorder %v769, %v771
      %v773 = vsel %vm772, %v768, inf
      %774 = vmin.xlane.f32.xlu0 %v773
      %v775 = vpop.xlane.xlu0 %774
      %v776 = vcvt.f32.s32 %v775
      %v777 = vcvt.f32.s32 %v771
      %v778 = vshll.u32 %v777, 16
      %v779 = vadd.s32 %v778, %v776
      %v780 = vand.u32 %v696, 65535
      %v781 = vshra.s32 %v696, 16
      %v782 = vcvt.s32.f32 %v780
      %v783 = vcvt.s32.f32 %v781
      %784 = vmin.xlane.f32.xlu0 %v783
      %v785 = vpop.xlane.xlu0 %784
      %vm786 = vcmp.eq.f32.partialorder %v783, %v785
      %v787 = vsel %vm786, %v782, inf
      %788 = vmin.xlane.f32.xlu0 %v787
      %v789 = vpop.xlane.xlu0 %788
      %v790 = vcvt.f32.s32 %v789
      %v791 = vcvt.f32.s32 %v785
      %v792 = vshll.u32 %v791, 16
      %v793 = vadd.s32 %v792, %v790
      %v794 = vand.u32 %v697, 65535
      %v795 = vshra.s32 %v697, 16
      %v796 = vcvt.s32.f32 %v794
      %v797 = vcvt.s32.f32 %v795
      %798 = vmin.xlane.f32.xlu0 %v797
      %v799 = vpop.xlane.xlu0 %798
      %vm800 = vcmp.eq.f32.partialorder %v797, %v799
      %v801 = vsel %vm800, %v796, inf
      %802 = vmin.xlane.f32.xlu0 %v801
      %v803 = vpop.xlane.xlu0 %802
      %v804 = vcvt.f32.s32 %v803
      %v805 = vcvt.f32.s32 %v799
      %v806 = vshll.u32 %v805, 16
      %v807 = vadd.s32 %v806, %v804
      %v808 = vand.u32 %v698, 65535
      %v809 = vshra.s32 %v698, 16
      %v810 = vcvt.s32.f32 %v808
      %v811 = vcvt.s32.f32 %v809
      %812 = vmin.xlane.f32.xlu0 %v811
      %v813 = vpop.xlane.xlu0 %812
      %vm814 = vcmp.eq.f32.partialorder %v811, %v813
      %v815 = vsel %vm814, %v810, inf
      %816 = vmin.xlane.f32.xlu0 %v815
      %v817 = vpop.xlane.xlu0 %816
      %v818 = vcvt.f32.s32 %v817
      %v819 = vcvt.f32.s32 %v813
      %v820 = vshll.u32 %v819, 16
      %v821 = vadd.s32 %v820, %v818
      %v822 = vand.u32 %v699, 65535
      %v823 = vshra.s32 %v699, 16
      %v824 = vcvt.s32.f32 %v822
      %v825 = vcvt.s32.f32 %v823
      %826 = vmin.xlane.f32.xlu0 %v825
      %v827 = vpop.xlane.xlu0 %826
      %vm828 = vcmp.eq.f32.partialorder %v825, %v827
      %v829 = vsel %vm828, %v824, inf
      %830 = vmin.xlane.f32.xlu0 %v829
      %v831 = vpop.xlane.xlu0 %830
      %v832 = vcvt.f32.s32 %v831
      %v833 = vcvt.f32.s32 %v827
      %v834 = vshll.u32 %v833, 16
      %v835 = vadd.s32 %v834, %v832
      %v836 = vand.u32 %v700, 65535
      %v837 = vshra.s32 %v700, 16
      %v838 = vcvt.s32.f32 %v836
      %v839 = vcvt.s32.f32 %v837
      %840 = vmin.xlane.f32.xlu0 %v839
      %v841 = vpop.xlane.xlu0 %840
      %vm842 = vcmp.eq.f32.partialorder %v839, %v841
      %v843 = vsel %vm842, %v838, inf
      %844 = vmin.xlane.f32.xlu0 %v843
      %v845 = vpop.xlane.xlu0 %844
      %v846 = vcvt.f32.s32 %v845
      %v847 = vcvt.f32.s32 %v841
      %v848 = vshll.u32 %v847, 16
      %v849 = vadd.s32 %v848, %v846
      %v850 = vand.u32 %v701, 65535
      %v851 = vshra.s32 %v701, 16
      %v852 = vcvt.s32.f32 %v850
      %v853 = vcvt.s32.f32 %v851
      %854 = vmin.xlane.f32.xlu0 %v853
      %v855 = vpop.xlane.xlu0 %854
      %vm856 = vcmp.eq.f32.partialorder %v853, %v855
      %v857 = vsel %vm856, %v852, inf
      %858 = vmin.xlane.f32.xlu0 %v857
      %v859 = vpop.xlane.xlu0 %858
      %v860 = vcvt.f32.s32 %v859
      %v861 = vcvt.f32.s32 %v855
      %v862 = vshll.u32 %v861, 16
      %v863 = vadd.s32 %v862, %v860
      %v864 = vand.u32 %v702, 65535
      %v865 = vshra.s32 %v702, 16
      %v866 = vcvt.s32.f32 %v864
      %v867 = vcvt.s32.f32 %v865
      %868 = vmin.xlane.f32.xlu0 %v867
      %v869 = vpop.xlane.xlu0 %868
      %vm870 = vcmp.eq.f32.partialorder %v867, %v869
      %v871 = vsel %vm870, %v866, inf
      %872 = vmin.xlane.f32.xlu0 %v871
      %v873 = vpop.xlane.xlu0 %872
      %v874 = vcvt.f32.s32 %v873
      %v875 = vcvt.f32.s32 %v869
      %v876 = vshll.u32 %v875, 16
      %v877 = vadd.s32 %v876, %v874
      %v878 = vand.u32 %v703, 65535
      %v879 = vshra.s32 %v703, 16
      %v880 = vcvt.s32.f32 %v878
      %v881 = vcvt.s32.f32 %v879
      %882 = vmin.xlane.f32.xlu0 %v881
      %v883 = vpop.xlane.xlu0 %882
      %vm884 = vcmp.eq.f32.partialorder %v881, %v883
      %v885 = vsel %vm884, %v880, inf
      %886 = vmin.xlane.f32.xlu0 %v885
      %v887 = vpop.xlane.xlu0 %886
      %v888 = vcvt.f32.s32 %v887
      %v889 = vcvt.f32.s32 %v883
      %v890 = vshll.u32 %v889, 16
      %v891 = vadd.s32 %v890, %v888
      %v892 = vand.u32 %v704, 65535
      %v893 = vshra.s32 %v704, 16
      %v894 = vcvt.s32.f32 %v892
      %v895 = vcvt.s32.f32 %v893
      %896 = vmin.xlane.f32.xlu0 %v895
      %v897 = vpop.xlane.xlu0 %896
      %vm898 = vcmp.eq.f32.partialorder %v895, %v897
      %v899 = vsel %vm898, %v894, inf
      %900 = vmin.xlane.f32.xlu0 %v899
      %v901 = vpop.xlane.xlu0 %900
      %v902 = vcvt.f32.s32 %v901
      %v903 = vcvt.f32.s32 %v897
      %v904 = vshll.u32 %v903, 16
      %v905 = vadd.s32 %v904, %v902
      %v906 = vand.u32 %v705, 65535
      %v907 = vshra.s32 %v705, 16
      %v908 = vcvt.s32.f32 %v906
      %v909 = vcvt.s32.f32 %v907
      %910 = vmin.xlane.f32.xlu0 %v909
      %v911 = vpop.xlane.xlu0 %910
      %vm912 = vcmp.eq.f32.partialorder %v909, %v911
      %v913 = vsel %vm912, %v908, inf
      %914 = vmin.xlane.f32.xlu0 %v913
      %v915 = vpop.xlane.xlu0 %914
      %v916 = vcvt.f32.s32 %v915
      %v917 = vcvt.f32.s32 %v911
      %v918 = vshll.u32 %v917, 16
      %v919 = vadd.s32 %v918, %v916
      %v920 = vand.u32 %v706, 65535
      %v921 = vshra.s32 %v706, 16
      %v922 = vcvt.s32.f32 %v920
      %v923 = vcvt.s32.f32 %v921
      %924 = vmin.xlane.f32.xlu0 %v923
      %v925 = vpop.xlane.xlu0 %924
      %vm926 = vcmp.eq.f32.partialorder %v923, %v925
      %v927 = vsel %vm926, %v922, inf
      %928 = vmin.xlane.f32.xlu0 %v927
      %v929 = vpop.xlane.xlu0 %928
      %v930 = vcvt.f32.s32 %v929
      %v931 = vcvt.f32.s32 %v925
      %v932 = vshll.u32 %v931, 16
      %v933 = vadd.s32 %v932, %v930
      %v934 = vand.u32 %v707, 65535
      %v935 = vshra.s32 %v707, 16
      %v936 = vcvt.s32.f32 %v934
      %v937 = vcvt.s32.f32 %v935
      %938 = vmin.xlane.f32.xlu0 %v937
      %v939 = vpop.xlane.xlu0 %938
      %vm940 = vcmp.eq.f32.partialorder %v937, %v939
      %v941 = vsel %vm940, %v936, inf
      %942 = vmin.xlane.f32.xlu0 %v941
      %v943 = vpop.xlane.xlu0 %942
      %v944 = vcvt.f32.s32 %v943
      %v945 = vcvt.f32.s32 %v939
      %v946 = vshll.u32 %v945, 16
      %v947 = vadd.s32 %v946, %v944
      %v948 = vand.u32 %v708, 65535
      %v949 = vshra.s32 %v708, 16
      %v950 = vcvt.s32.f32 %v948
      %v951 = vcvt.s32.f32 %v949
      %952 = vmin.xlane.f32.xlu0 %v951
      %v953 = vpop.xlane.xlu0 %952
      %vm954 = vcmp.eq.f32.partialorder %v951, %v953
      %v955 = vsel %vm954, %v950, inf
      %956 = vmin.xlane.f32.xlu0 %v955
      %v957 = vpop.xlane.xlu0 %956
      %v958 = vcvt.f32.s32 %v957
      %v959 = vcvt.f32.s32 %v953
      %v960 = vshll.u32 %v959, 16
      %v961 = vadd.s32 %v960, %v958
      %v962 = vand.u32 %v709, 65535
      %v963 = vshra.s32 %v709, 16
      %v964 = vcvt.s32.f32 %v962
      %v965 = vcvt.s32.f32 %v963
      %966 = vmin.xlane.f32.xlu0 %v965
      %v967 = vpop.xlane.xlu0 %966
      %vm968 = vcmp.eq.f32.partialorder %v965, %v967
      %v969 = vsel %vm968, %v964, inf
      %970 = vmin.xlane.f32.xlu0 %v969
      %v971 = vpop.xlane.xlu0 %970
      %v972 = vcvt.f32.s32 %v971
      %v973 = vcvt.f32.s32 %v967
      %v974 = vshll.u32 %v973, 16
      %v975 = vadd.s32 %v974, %v972
      %v976 = vand.u32 %v710, 65535
      %v977 = vshra.s32 %v710, 16
      %v978 = vcvt.s32.f32 %v976
      %v979 = vcvt.s32.f32 %v977
      %980 = vmin.xlane.f32.xlu0 %v979
      %v981 = vpop.xlane.xlu0 %980
      %vm982 = vcmp.eq.f32.partialorder %v979, %v981
      %v983 = vsel %vm982, %v978, inf
      %984 = vmin.xlane.f32.xlu0 %v983
      %v985 = vpop.xlane.xlu0 %984
      %v986 = vcvt.f32.s32 %v985
      %v987 = vcvt.f32.s32 %v981
      %v988 = vshll.u32 %v987, 16
      %v989 = vadd.s32 %v988, %v986
      %v990 = vand.u32 %v711, 65535
      %v991 = vshra.s32 %v711, 16
      %v992 = vcvt.s32.f32 %v990
      %v993 = vcvt.s32.f32 %v991
      %994 = vmin.xlane.f32.xlu0 %v993
      %v995 = vpop.xlane.xlu0 %994
      %vm996 = vcmp.eq.f32.partialorder %v993, %v995
      %v997 = vsel %vm996, %v992, inf
      %998 = vmin.xlane.f32.xlu0 %v997
      %v999 = vpop.xlane.xlu0 %998
      %v1000 = vcvt.f32.s32 %v999
      %v1001 = vcvt.f32.s32 %v995
      %v1002 = vshll.u32 %v1001, 16
      %v1003 = vadd.s32 %v1002, %v1000
      %v1004 = vand.u32 %v712, 65535
      %v1005 = vshra.s32 %v712, 16
      %v1006 = vcvt.s32.f32 %v1004
      %v1007 = vcvt.s32.f32 %v1005
      %1008 = vmin.xlane.f32.xlu0 %v1007
      %v1009 = vpop.xlane.xlu0 %1008
      %vm1010 = vcmp.eq.f32.partialorder %v1007, %v1009
      %v1011 = vsel %vm1010, %v1006, inf
      %1012 = vmin.xlane.f32.xlu0 %v1011
      %v1013 = vpop.xlane.xlu0 %1012
      %v1014 = vcvt.f32.s32 %v1013
      %v1015 = vcvt.f32.s32 %v1009
      %v1016 = vshll.u32 %v1015, 16
      %v1017 = vadd.s32 %v1016, %v1014
      %v1018 = vand.u32 %v713, 65535
      %v1019 = vshra.s32 %v713, 16
      %v1020 = vcvt.s32.f32 %v1018
      %v1021 = vcvt.s32.f32 %v1019
      %1022 = vmin.xlane.f32.xlu0 %v1021
      %v1023 = vpop.xlane.xlu0 %1022
      %vm1024 = vcmp.eq.f32.partialorder %v1021, %v1023
      %v1025 = vsel %vm1024, %v1020, inf
      %1026 = vmin.xlane.f32.xlu0 %v1025
      %v1027 = vpop.xlane.xlu0 %1026
      %v1028 = vcvt.f32.s32 %v1027
      %v1029 = vcvt.f32.s32 %v1023
      %v1030 = vshll.u32 %v1029, 16
      %v1031 = vadd.s32 %v1030, %v1028
      %v1032 = vand.u32 %v714, 65535
      %v1033 = vshra.s32 %v714, 16
      %v1034 = vcvt.s32.f32 %v1032
      %v1035 = vcvt.s32.f32 %v1033
      %1036 = vmin.xlane.f32.xlu0 %v1035
      %v1037 = vpop.xlane.xlu0 %1036
      %vm1038 = vcmp.eq.f32.partialorder %v1035, %v1037
      %v1039 = vsel %vm1038, %v1034, inf
      %1040 = vmin.xlane.f32.xlu0 %v1039
      %v1041 = vpop.xlane.xlu0 %1040
      %v1042 = vcvt.f32.s32 %v1041
      %v1043 = vcvt.f32.s32 %v1037
      %v1044 = vshll.u32 %v1043, 16
      %v1045 = vadd.s32 %v1044, %v1042
      %v1046 = vand.u32 %v715, 65535
      %v1047 = vshra.s32 %v715, 16
      %v1048 = vcvt.s32.f32 %v1046
      %v1049 = vcvt.s32.f32 %v1047
      %1050 = vmin.xlane.f32.xlu0 %v1049
      %v1051 = vpop.xlane.xlu0 %1050
      %vm1052 = vcmp.eq.f32.partialorder %v1049, %v1051
      %v1053 = vsel %vm1052, %v1048, inf
      %1054 = vmin.xlane.f32.xlu0 %v1053
      %v1055 = vpop.xlane.xlu0 %1054
      %v1056 = vcvt.f32.s32 %v1055
      %v1057 = vcvt.f32.s32 %v1051
      %v1058 = vshll.u32 %v1057, 16
      %v1059 = vadd.s32 %v1058, %v1056
      %v1060 = vand.u32 %v716, 65535
      %v1061 = vshra.s32 %v716, 16
      %v1062 = vcvt.s32.f32 %v1060
      %v1063 = vcvt.s32.f32 %v1061
      %1064 = vmin.xlane.f32.xlu0 %v1063
      %v1065 = vpop.xlane.xlu0 %1064
      %vm1066 = vcmp.eq.f32.partialorder %v1063, %v1065
      %v1067 = vsel %vm1066, %v1062, inf
      %1068 = vmin.xlane.f32.xlu0 %v1067
      %v1069 = vpop.xlane.xlu0 %1068
      %v1070 = vcvt.f32.s32 %v1069
      %v1071 = vcvt.f32.s32 %v1065
      %v1072 = vshll.u32 %v1071, 16
      %v1073 = vadd.s32 %v1072, %v1070
      %v1074 = vand.u32 %v717, 65535
      %v1075 = vshra.s32 %v717, 16
      %v1076 = vcvt.s32.f32 %v1074
      %v1077 = vcvt.s32.f32 %v1075
      %1078 = vmin.xlane.f32.xlu0 %v1077
      %v1079 = vpop.xlane.xlu0 %1078
      %vm1080 = vcmp.eq.f32.partialorder %v1077, %v1079
      %v1081 = vsel %vm1080, %v1076, inf
      %1082 = vmin.xlane.f32.xlu0 %v1081
      %v1083 = vpop.xlane.xlu0 %1082
      %v1084 = vcvt.f32.s32 %v1083
      %v1085 = vcvt.f32.s32 %v1079
      %v1086 = vshll.u32 %v1085, 16
      %v1087 = vadd.s32 %v1086, %v1084
      %v1088 = vand.u32 %v718, 65535
      %v1089 = vshra.s32 %v718, 16
      %v1090 = vcvt.s32.f32 %v1088
      %v1091 = vcvt.s32.f32 %v1089
      %1092 = vmin.xlane.f32.xlu0 %v1091
      %v1093 = vpop.xlane.xlu0 %1092
      %vm1094 = vcmp.eq.f32.partialorder %v1091, %v1093
      %v1095 = vsel %vm1094, %v1090, inf
      %1096 = vmin.xlane.f32.xlu0 %v1095
      %v1097 = vpop.xlane.xlu0 %1096
      %v1098 = vcvt.f32.s32 %v1097
      %v1099 = vcvt.f32.s32 %v1093
      %v1100 = vshll.u32 %v1099, 16
      %v1101 = vadd.s32 %v1100, %v1098
      %v1102 = vand.u32 %v719, 65535
      %v1103 = vshra.s32 %v719, 16
      %v1104 = vcvt.s32.f32 %v1102
      %v1105 = vcvt.s32.f32 %v1103
      %1106 = vmin.xlane.f32.xlu0 %v1105
      %v1107 = vpop.xlane.xlu0 %1106
      %vm1108 = vcmp.eq.f32.partialorder %v1105, %v1107
      %v1109 = vsel %vm1108, %v1104, inf
      %1110 = vmin.xlane.f32.xlu0 %v1109
      %v1111 = vpop.xlane.xlu0 %1110
      %v1112 = vcvt.f32.s32 %v1111
      %v1113 = vcvt.f32.s32 %v1107
      %v1114 = vshll.u32 %v1113, 16
      %v1115 = vadd.s32 %v1114, %v1112
      %v1116 = vand.u32 %v720, 65535
      %v1117 = vshra.s32 %v720, 16
      %v1118 = vcvt.s32.f32 %v1116
      %v1119 = vcvt.s32.f32 %v1117
      %1120 = vmin.xlane.f32.xlu0 %v1119
      %v1121 = vpop.xlane.xlu0 %1120
      %vm1122 = vcmp.eq.f32.partialorder %v1119, %v1121
      %v1123 = vsel %vm1122, %v1118, inf
      %1124 = vmin.xlane.f32.xlu0 %v1123
      %v1125 = vpop.xlane.xlu0 %1124
      %v1126 = vcvt.f32.s32 %v1125
      %v1127 = vcvt.f32.s32 %v1121
      %v1128 = vshll.u32 %v1127, 16
      %v1129 = vadd.s32 %v1128, %v1126
      %v1130 = vand.u32 %v721, 65535
      %v1131 = vshra.s32 %v721, 16
      %v1132 = vcvt.s32.f32 %v1130
      %v1133 = vcvt.s32.f32 %v1131
      %1134 = vmin.xlane.f32.xlu0 %v1133
      %v1135 = vpop.xlane.xlu0 %1134
      %vm1136 = vcmp.eq.f32.partialorder %v1133, %v1135
      %v1137 = vsel %vm1136, %v1132, inf
      %1138 = vmin.xlane.f32.xlu0 %v1137
      %v1139 = vpop.xlane.xlu0 %1138
      %v1140 = vcvt.f32.s32 %v1139
      %v1141 = vcvt.f32.s32 %v1135
      %v1142 = vshll.u32 %v1141, 16
      %v1143 = vadd.s32 %v1142, %v1140
      %v1144 = vand.u32 %v722, 65535
      %v1145 = vshra.s32 %v722, 16
      %v1146 = vcvt.s32.f32 %v1144
      %v1147 = vcvt.s32.f32 %v1145
      %1148 = vmin.xlane.f32.xlu0 %v1147
      %v1149 = vpop.xlane.xlu0 %1148
      %vm1150 = vcmp.eq.f32.partialorder %v1147, %v1149
      %v1151 = vsel %vm1150, %v1146, inf
      %1152 = vmin.xlane.f32.xlu0 %v1151
      %v1153 = vpop.xlane.xlu0 %1152
      %v1154 = vcvt.f32.s32 %v1153
      %v1155 = vcvt.f32.s32 %v1149
      %v1156 = vshll.u32 %v1155, 16
      %v1157 = vadd.s32 %v1156, %v1154
      %v1158 = vand.u32 %v723, 65535
      %v1159 = vshra.s32 %v723, 16
      %v1160 = vcvt.s32.f32 %v1158
      %v1161 = vcvt.s32.f32 %v1159
      %1162 = vmin.xlane.f32.xlu0 %v1161
      %v1163 = vpop.xlane.xlu0 %1162
      %vm1164 = vcmp.eq.f32.partialorder %v1161, %v1163
      %v1165 = vsel %vm1164, %v1160, inf
      %1166 = vmin.xlane.f32.xlu0 %v1165
      %v1167 = vpop.xlane.xlu0 %1166
      %v1168 = vcvt.f32.s32 %v1167
      %v1169 = vcvt.f32.s32 %v1163
      %v1170 = vshll.u32 %v1169, 16
      %v1171 = vadd.s32 %v1170, %v1168
      %s1172 = smul.u32 %s17, 256
      %v1173 = vlaneseq
      %v1174 = vshrl.u32 %v1173, 7
      %v1175 = vadd.s32 %v1174, 8
      %v1176 = vadd.s32 %v1174, 16
      %v1177 = vadd.s32 %v1174, 24
      %v1178 = vadd.s32 %v1174, 32
      %v1179 = vadd.s32 %v1174, 40
      %v1180 = vadd.s32 %v1174, 48
      %v1181 = vadd.s32 %v1174, 56
      %v1182 = vadd.s32 %v1174, 64
      %v1183 = vadd.s32 %v1174, 72
      %v1184 = vadd.s32 %v1174, 80
      %v1185 = vadd.s32 %v1174, 88
      %v1186 = vadd.s32 %v1174, 96
      %v1187 = vadd.s32 %v1174, 104
      %v1188 = vadd.s32 %v1174, 112
      %v1189 = vadd.s32 %v1174, 120
      %v1190 = vadd.s32 %v1174, 128
      %v1191 = vadd.s32 %v1174, 136
      %v1192 = vadd.s32 %v1174, 144
      %v1193 = vadd.s32 %v1174, 152
      %v1194 = vadd.s32 %v1174, 160
      %v1195 = vadd.s32 %v1174, 168
      %v1196 = vadd.s32 %v1174, 176
      %v1197 = vadd.s32 %v1174, 184
      %v1198 = vadd.s32 %v1174, 192
      %v1199 = vadd.s32 %v1174, 200
      %v1200 = vadd.s32 %v1174, 208
      %v1201 = vadd.s32 %v1174, 216
      %v1202 = vadd.s32 %v1174, 224
      %v1203 = vadd.s32 %v1174, 232
      %v1204 = vadd.s32 %v1174, 240
      %v1205 = vadd.s32 %v1174, 248
      %v1206 = vstv %s1172
      %v1207 = vadd.s32 %v1206, %v1174
      %v1208 = vadd.s32 %v1206, %v1175
      %v1209 = vadd.s32 %v1206, %v1176
      %v1210 = vadd.s32 %v1206, %v1177
      %v1211 = vadd.s32 %v1206, %v1178
      %v1212 = vadd.s32 %v1206, %v1179
      %v1213 = vadd.s32 %v1206, %v1180
      %v1214 = vadd.s32 %v1206, %v1181
      %v1215 = vadd.s32 %v1206, %v1182
      %v1216 = vadd.s32 %v1206, %v1183
      %v1217 = vadd.s32 %v1206, %v1184
      %v1218 = vadd.s32 %v1206, %v1185
      %v1219 = vadd.s32 %v1206, %v1186
      %v1220 = vadd.s32 %v1206, %v1187
      %v1221 = vadd.s32 %v1206, %v1188
      %v1222 = vadd.s32 %v1206, %v1189
      %v1223 = vadd.s32 %v1206, %v1190
      %v1224 = vadd.s32 %v1206, %v1191
      %v1225 = vadd.s32 %v1206, %v1192
      %v1226 = vadd.s32 %v1206, %v1193
      %v1227 = vadd.s32 %v1206, %v1194
      %v1228 = vadd.s32 %v1206, %v1195
      %v1229 = vadd.s32 %v1206, %v1196
      %v1230 = vadd.s32 %v1206, %v1197
      %v1231 = vadd.s32 %v1206, %v1198
      %v1232 = vadd.s32 %v1206, %v1199
      %v1233 = vadd.s32 %v1206, %v1200
      %v1234 = vadd.s32 %v1206, %v1201
      %v1235 = vadd.s32 %v1206, %v1202
      %v1236 = vadd.s32 %v1206, %v1203
      %v1237 = vadd.s32 %v1206, %v1204
      %v1238 = vadd.s32 %v1206, %v1205
      %vm1239 = vcmp.lt.s32.totalorder %v1207, 512
      %vm1240 = vcmp.lt.s32.totalorder %v1208, 512
      %vm1241 = vcmp.lt.s32.totalorder %v1209, 512
      %vm1242 = vcmp.lt.s32.totalorder %v1210, 512
      %vm1243 = vcmp.lt.s32.totalorder %v1211, 512
      %vm1244 = vcmp.lt.s32.totalorder %v1212, 512
      %vm1245 = vcmp.lt.s32.totalorder %v1213, 512
      %vm1246 = vcmp.lt.s32.totalorder %v1214, 512
      %vm1247 = vcmp.lt.s32.totalorder %v1215, 512
      %vm1248 = vcmp.lt.s32.totalorder %v1216, 512
      %vm1249 = vcmp.lt.s32.totalorder %v1217, 512
      %vm1250 = vcmp.lt.s32.totalorder %v1218, 512
      %vm1251 = vcmp.lt.s32.totalorder %v1219, 512
      %vm1252 = vcmp.lt.s32.totalorder %v1220, 512
      %vm1253 = vcmp.lt.s32.totalorder %v1221, 512
      %vm1254 = vcmp.lt.s32.totalorder %v1222, 512
      %vm1255 = vcmp.lt.s32.totalorder %v1223, 512
      %vm1256 = vcmp.lt.s32.totalorder %v1224, 512
      %vm1257 = vcmp.lt.s32.totalorder %v1225, 512
      %vm1258 = vcmp.lt.s32.totalorder %v1226, 512
      %vm1259 = vcmp.lt.s32.totalorder %v1227, 512
      %vm1260 = vcmp.lt.s32.totalorder %v1228, 512
      %vm1261 = vcmp.lt.s32.totalorder %v1229, 512
      %vm1262 = vcmp.lt.s32.totalorder %v1230, 512
      %vm1263 = vcmp.lt.s32.totalorder %v1231, 512
      %vm1264 = vcmp.lt.s32.totalorder %v1232, 512
      %vm1265 = vcmp.lt.s32.totalorder %v1233, 512
      %vm1266 = vcmp.lt.s32.totalorder %v1234, 512
      %vm1267 = vcmp.lt.s32.totalorder %v1235, 512
      %vm1268 = vcmp.lt.s32.totalorder %v1236, 512
      %vm1269 = vcmp.lt.s32.totalorder %v1237, 512
      %vm1270 = vcmp.lt.s32.totalorder %v1238, 512
      %vm1271 = vcmp.eq.s32.totalorder %v659, %v737
      %vm1272 = vcmp.eq.s32.totalorder %v659, %v751
      %vm1273 = vcmp.eq.s32.totalorder %v659, %v765
      %vm1274 = vcmp.eq.s32.totalorder %v659, %v779
      %vm1275 = vcmp.eq.s32.totalorder %v659, %v793
      %vm1276 = vcmp.eq.s32.totalorder %v659, %v807
      %vm1277 = vcmp.eq.s32.totalorder %v659, %v821
      %vm1278 = vcmp.eq.s32.totalorder %v659, %v835
      %vm1279 = vcmp.eq.s32.totalorder %v659, %v849
      %vm1280 = vcmp.eq.s32.totalorder %v659, %v863
      %vm1281 = vcmp.eq.s32.totalorder %v659, %v877
      %vm1282 = vcmp.eq.s32.totalorder %v659, %v891
      %vm1283 = vcmp.eq.s32.totalorder %v659, %v905
      %vm1284 = vcmp.eq.s32.totalorder %v659, %v919
      %vm1285 = vcmp.eq.s32.totalorder %v659, %v933
      %vm1286 = vcmp.eq.s32.totalorder %v659, %v947
      %vm1287 = vcmp.eq.s32.totalorder %v659, %v961
      %vm1288 = vcmp.eq.s32.totalorder %v659, %v975
      %vm1289 = vcmp.eq.s32.totalorder %v659, %v989
      %vm1290 = vcmp.eq.s32.totalorder %v659, %v1003
      %vm1291 = vcmp.eq.s32.totalorder %v659, %v1017
      %vm1292 = vcmp.eq.s32.totalorder %v659, %v1031
      %vm1293 = vcmp.eq.s32.totalorder %v659, %v1045
      %vm1294 = vcmp.eq.s32.totalorder %v659, %v1059
      %vm1295 = vcmp.eq.s32.totalorder %v659, %v1073
      %vm1296 = vcmp.eq.s32.totalorder %v659, %v1087
      %vm1297 = vcmp.eq.s32.totalorder %v659, %v1101
      %vm1298 = vcmp.eq.s32.totalorder %v659, %v1115
      %vm1299 = vcmp.eq.s32.totalorder %v659, %v1129
      %vm1300 = vcmp.eq.s32.totalorder %v659, %v1143
      %vm1301 = vcmp.eq.s32.totalorder %v659, %v1157
      %vm1302 = vcmp.eq.s32.totalorder %v659, %v1171
      %v1303 = vsel %vm1239, 1, 0
      %v1304 = vsel %vm1240, 1, 0
      %v1305 = vsel %vm1241, 1, 0
      %v1306 = vsel %vm1242, 1, 0
      %v1307 = vsel %vm1243, 1, 0
      %v1308 = vsel %vm1244, 1, 0
      %v1309 = vsel %vm1245, 1, 0
      %v1310 = vsel %vm1246, 1, 0
      %v1311 = vsel %vm1247, 1, 0
      %v1312 = vsel %vm1248, 1, 0
      %v1313 = vsel %vm1249, 1, 0
      %v1314 = vsel %vm1250, 1, 0
      %v1315 = vsel %vm1251, 1, 0
      %v1316 = vsel %vm1252, 1, 0
      %v1317 = vsel %vm1253, 1, 0
      %v1318 = vsel %vm1254, 1, 0
      %v1319 = vsel %vm1255, 1, 0
      %v1320 = vsel %vm1256, 1, 0
      %v1321 = vsel %vm1257, 1, 0
      %v1322 = vsel %vm1258, 1, 0
      %v1323 = vsel %vm1259, 1, 0
      %v1324 = vsel %vm1260, 1, 0
      %v1325 = vsel %vm1261, 1, 0
      %v1326 = vsel %vm1262, 1, 0
      %v1327 = vsel %vm1263, 1, 0
      %v1328 = vsel %vm1264, 1, 0
      %v1329 = vsel %vm1265, 1, 0
      %v1330 = vsel %vm1266, 1, 0
      %v1331 = vsel %vm1267, 1, 0
      %v1332 = vsel %vm1268, 1, 0
      %v1333 = vsel %vm1269, 1, 0
      %v1334 = vsel %vm1270, 1, 0
      %vm1335 = vcmp.eq.s32.totalorder %v1303, 1
      %vm1336 = vcmp.eq.s32.totalorder %v1304, 1
      %vm1337 = vcmp.eq.s32.totalorder %v1305, 1
      %vm1338 = vcmp.eq.s32.totalorder %v1306, 1
      %vm1339 = vcmp.eq.s32.totalorder %v1307, 1
      %vm1340 = vcmp.eq.s32.totalorder %v1308, 1
      %vm1341 = vcmp.eq.s32.totalorder %v1309, 1
      %vm1342 = vcmp.eq.s32.totalorder %v1310, 1
      %vm1343 = vcmp.eq.s32.totalorder %v1311, 1
      %vm1344 = vcmp.eq.s32.totalorder %v1312, 1
      %vm1345 = vcmp.eq.s32.totalorder %v1313, 1
      %vm1346 = vcmp.eq.s32.totalorder %v1314, 1
      %vm1347 = vcmp.eq.s32.totalorder %v1315, 1
      %vm1348 = vcmp.eq.s32.totalorder %v1316, 1
      %vm1349 = vcmp.eq.s32.totalorder %v1317, 1
      %vm1350 = vcmp.eq.s32.totalorder %v1318, 1
      %vm1351 = vcmp.eq.s32.totalorder %v1319, 1
      %vm1352 = vcmp.eq.s32.totalorder %v1320, 1
      %vm1353 = vcmp.eq.s32.totalorder %v1321, 1
      %vm1354 = vcmp.eq.s32.totalorder %v1322, 1
      %vm1355 = vcmp.eq.s32.totalorder %v1323, 1
      %vm1356 = vcmp.eq.s32.totalorder %v1324, 1
      %vm1357 = vcmp.eq.s32.totalorder %v1325, 1
      %vm1358 = vcmp.eq.s32.totalorder %v1326, 1
      %vm1359 = vcmp.eq.s32.totalorder %v1327, 1
      %vm1360 = vcmp.eq.s32.totalorder %v1328, 1
      %vm1361 = vcmp.eq.s32.totalorder %v1329, 1
      %vm1362 = vcmp.eq.s32.totalorder %v1330, 1
      %vm1363 = vcmp.eq.s32.totalorder %v1331, 1
      %vm1364 = vcmp.eq.s32.totalorder %v1332, 1
      %vm1365 = vcmp.eq.s32.totalorder %v1333, 1
      %vm1366 = vcmp.eq.s32.totalorder %v1334, 1
      %vm1367 = vmand %vm1271, %vm1335
      %vm1368 = vmand %vm1272, %vm1336
      %vm1369 = vmand %vm1273, %vm1337
      %vm1370 = vmand %vm1274, %vm1338
      %vm1371 = vmand %vm1275, %vm1339
      %vm1372 = vmand %vm1276, %vm1340
      %vm1373 = vmand %vm1277, %vm1341
      %vm1374 = vmand %vm1278, %vm1342
      %vm1375 = vmand %vm1279, %vm1343
      %vm1376 = vmand %vm1280, %vm1344
      %vm1377 = vmand %vm1281, %vm1345
      %vm1378 = vmand %vm1282, %vm1346
      %vm1379 = vmand %vm1283, %vm1347
      %vm1380 = vmand %vm1284, %vm1348
      %vm1381 = vmand %vm1285, %vm1349
      %vm1382 = vmand %vm1286, %vm1350
      %vm1383 = vmand %vm1287, %vm1351
      %vm1384 = vmand %vm1288, %vm1352
      %vm1385 = vmand %vm1289, %vm1353
      %vm1386 = vmand %vm1290, %vm1354
      %vm1387 = vmand %vm1291, %vm1355
      %vm1388 = vmand %vm1292, %vm1356
      %vm1389 = vmand %vm1293, %vm1357
      %vm1390 = vmand %vm1294, %vm1358
      %vm1391 = vmand %vm1295, %vm1359
      %vm1392 = vmand %vm1296, %vm1360
      %vm1393 = vmand %vm1297, %vm1361
      %vm1394 = vmand %vm1298, %vm1362
      %vm1395 = vmand %vm1299, %vm1363
      %vm1396 = vmand %vm1300, %vm1364
      %vm1397 = vmand %vm1301, %vm1365
      %vm1398 = vmand %vm1302, %vm1366
      %v1399 = vsel %vm1367, 1.0, 0.0
      %v1400 = vsel %vm1368, 1.0, 0.0
      %v1401 = vsel %vm1369, 1.0, 0.0
      %v1402 = vsel %vm1370, 1.0, 0.0
      %v1403 = vsel %vm1371, 1.0, 0.0
      %v1404 = vsel %vm1372, 1.0, 0.0
      %v1405 = vsel %vm1373, 1.0, 0.0
      %v1406 = vsel %vm1374, 1.0, 0.0
      %v1407 = vsel %vm1375, 1.0, 0.0
      %v1408 = vsel %vm1376, 1.0, 0.0
      %v1409 = vsel %vm1377, 1.0, 0.0
      %v1410 = vsel %vm1378, 1.0, 0.0
      %v1411 = vsel %vm1379, 1.0, 0.0
      %v1412 = vsel %vm1380, 1.0, 0.0
      %v1413 = vsel %vm1381, 1.0, 0.0
      %v1414 = vsel %vm1382, 1.0, 0.0
      %v1415 = vsel %vm1383, 1.0, 0.0
      %v1416 = vsel %vm1384, 1.0, 0.0
      %v1417 = vsel %vm1385, 1.0, 0.0
      %v1418 = vsel %vm1386, 1.0, 0.0
      %v1419 = vsel %vm1387, 1.0, 0.0
      %v1420 = vsel %vm1388, 1.0, 0.0
      %v1421 = vsel %vm1389, 1.0, 0.0
      %v1422 = vsel %vm1390, 1.0, 0.0
      %v1423 = vsel %vm1391, 1.0, 0.0
      %v1424 = vsel %vm1392, 1.0, 0.0
      %v1425 = vsel %vm1393, 1.0, 0.0
      %v1426 = vsel %vm1394, 1.0, 0.0
      %v1427 = vsel %vm1395, 1.0, 0.0
      %v1428 = vsel %vm1396, 1.0, 0.0
      %v1429 = vsel %vm1397, 1.0, 0.0
      %v1430 = vsel %vm1398, 1.0, 0.0
      %1431 = vmatpush.msra.mxu0 %v299
      %1432 = vmatpush.msra.mxu0 %v298
      %1433 = vmatpush.msra.mxu0 %v297
      %1434 = vmatpush.msra.mxu0 %v296
      %1435 = vmatpush.msra.mxu0 %v295
      %1436 = vmatpush.msra.mxu0 %v294
      %1437 = vmatpush.msra.mxu0 %v293
      %1438 = vmatpush.msra.mxu0 %v292
      %1439 = vmatpush.msra.mxu0 %v291
      %1440 = vmatpush.msra.mxu0 %v290
      %1441 = vmatpush.msra.mxu0 %v289
      %1442 = vmatpush.msra.mxu0 %v288
      %1443 = vmatpush.msra.mxu0 %v287
      %1444 = vmatpush.msra.mxu0 %v286
      %1445 = vmatpush.msra.mxu0 %v285
      %1446 = vmatpush.msra.mxu0 %v284
      %1447 = vmatmul.f32.gmra.mxu0 %v1399
      %v1448 = vpop.f32.mrf.mxu0
      %v1449 = vadd.f32 0.0, %v1448
      %1450 = vmatmul.f32.gmra.mxu0 %v1400
      %v1451 = vpop.f32.mrf.mxu0
      %v1452 = vadd.f32 0.0, %v1451
      %1453 = vmatmul.f32.gmra.mxu0 %v1401
      %v1454 = vpop.f32.mrf.mxu0
      %v1455 = vadd.f32 0.0, %v1454
      %1456 = vmatmul.f32.gmra.mxu0 %v1402
      %v1457 = vpop.f32.mrf.mxu0
      %v1458 = vadd.f32 0.0, %v1457
      %1459 = vmatmul.f32.gmra.mxu0 %v1403
      %v1460 = vpop.f32.mrf.mxu0
      %v1461 = vadd.f32 0.0, %v1460
      %1462 = vmatmul.f32.gmra.mxu0 %v1404
      %v1463 = vpop.f32.mrf.mxu0
      %v1464 = vadd.f32 0.0, %v1463
      %1465 = vmatmul.f32.gmra.mxu0 %v1405
      %v1466 = vpop.f32.mrf.mxu0
      %v1467 = vadd.f32 0.0, %v1466
      %1468 = vmatmul.f32.gmra.mxu0 %v1406
      %v1469 = vpop.f32.mrf.mxu0
      %v1470 = vadd.f32 0.0, %v1469
      %1471 = vmatmul.f32.gmra.mxu0 %v1407
      %v1472 = vpop.f32.mrf.mxu0
      %v1473 = vadd.f32 0.0, %v1472
      %1474 = vmatmul.f32.gmra.mxu0 %v1408
      %v1475 = vpop.f32.mrf.mxu0
      %v1476 = vadd.f32 0.0, %v1475
      %1477 = vmatmul.f32.gmra.mxu0 %v1409
      %v1478 = vpop.f32.mrf.mxu0
      %v1479 = vadd.f32 0.0, %v1478
      %1480 = vmatmul.f32.gmra.mxu0 %v1410
      %v1481 = vpop.f32.mrf.mxu0
      %v1482 = vadd.f32 0.0, %v1481
      %1483 = vmatmul.f32.gmra.mxu0 %v1411
      %v1484 = vpop.f32.mrf.mxu0
      %v1485 = vadd.f32 0.0, %v1484
      %1486 = vmatmul.f32.gmra.mxu0 %v1412
      %v1487 = vpop.f32.mrf.mxu0
      %v1488 = vadd.f32 0.0, %v1487
      %1489 = vmatmul.f32.gmra.mxu0 %v1413
      %v1490 = vpop.f32.mrf.mxu0
      %v1491 = vadd.f32 0.0, %v1490
      %1492 = vmatmul.f32.gmra.mxu0 %v1414
      %v1493 = vpop.f32.mrf.mxu0
      %v1494 = vadd.f32 0.0, %v1493
      %1495 = vmatmul.f32.gmra.mxu0 %v1415
      %v1496 = vpop.f32.mrf.mxu0
      %v1497 = vadd.f32 0.0, %v1496
      %1498 = vmatmul.f32.gmra.mxu0 %v1416
      %v1499 = vpop.f32.mrf.mxu0
      %v1500 = vadd.f32 0.0, %v1499
      %1501 = vmatmul.f32.gmra.mxu0 %v1417
      %v1502 = vpop.f32.mrf.mxu0
      %v1503 = vadd.f32 0.0, %v1502
      %1504 = vmatmul.f32.gmra.mxu0 %v1418
      %v1505 = vpop.f32.mrf.mxu0
      %v1506 = vadd.f32 0.0, %v1505
      %1507 = vmatmul.f32.gmra.mxu0 %v1419
      %v1508 = vpop.f32.mrf.mxu0
      %v1509 = vadd.f32 0.0, %v1508
      %1510 = vmatmul.f32.gmra.mxu0 %v1420
      %v1511 = vpop.f32.mrf.mxu0
      %v1512 = vadd.f32 0.0, %v1511
      %1513 = vmatmul.f32.gmra.mxu0 %v1421
      %v1514 = vpop.f32.mrf.mxu0
      %v1515 = vadd.f32 0.0, %v1514
      %1516 = vmatmul.f32.gmra.mxu0 %v1422
      %v1517 = vpop.f32.mrf.mxu0
      %v1518 = vadd.f32 0.0, %v1517
      %1519 = vmatmul.f32.gmra.mxu0 %v1423
      %v1520 = vpop.f32.mrf.mxu0
      %v1521 = vadd.f32 0.0, %v1520
      %1522 = vmatmul.f32.gmra.mxu0 %v1424
      %v1523 = vpop.f32.mrf.mxu0
      %v1524 = vadd.f32 0.0, %v1523
      %1525 = vmatmul.f32.gmra.mxu0 %v1425
      %v1526 = vpop.f32.mrf.mxu0
      %v1527 = vadd.f32 0.0, %v1526
      %1528 = vmatmul.f32.gmra.mxu0 %v1426
      %v1529 = vpop.f32.mrf.mxu0
      %v1530 = vadd.f32 0.0, %v1529
      %1531 = vmatmul.f32.gmra.mxu0 %v1427
      %v1532 = vpop.f32.mrf.mxu0
      %v1533 = vadd.f32 0.0, %v1532
      %1534 = vmatmul.f32.gmra.mxu0 %v1428
      %v1535 = vpop.f32.mrf.mxu0
      %v1536 = vadd.f32 0.0, %v1535
      %1537 = vmatmul.f32.gmra.mxu0 %v1429
      %v1538 = vpop.f32.mrf.mxu0
      %v1539 = vadd.f32 0.0, %v1538
      %1540 = vmatmul.f32.gmra.mxu0 %v1430
      %v1541 = vpop.f32.mrf.mxu0
      %v1542 = vadd.f32 0.0, %v1541
      %1543 = vdwg.mxu0
      %1544 = vst.msk [vmem:[%s240] sm:$0xff] %vm301, %v1449
      %1545 = vst.msk [vmem:[%s240 + $0x8] sm:$0xff] %vm301, %v1452
      %1546 = vst.msk [vmem:[%s240 + $0x10] sm:$0xff] %vm301, %v1455
      %1547 = vst.msk [vmem:[%s240 + $0x18] sm:$0xff] %vm301, %v1458
      %1548 = vst.msk [vmem:[%s240 + $0x20] sm:$0xff] %vm301, %v1461
      %1549 = vst.msk [vmem:[%s240 + $0x28] sm:$0xff] %vm301, %v1464
      %1550 = vst.msk [vmem:[%s240 + $0x30] sm:$0xff] %vm301, %v1467
      %1551 = vst.msk [vmem:[%s240 + $0x38] sm:$0xff] %vm301, %v1470
      %1552 = vst.msk [vmem:[%s240 + $0x40] sm:$0xff] %vm301, %v1473
      %1553 = vst.msk [vmem:[%s240 + $0x48] sm:$0xff] %vm301, %v1476
      %1554 = vst.msk [vmem:[%s240 + $0x50] sm:$0xff] %vm301, %v1479
      %1555 = vst.msk [vmem:[%s240 + $0x58] sm:$0xff] %vm301, %v1482
      %1556 = vst.msk [vmem:[%s240 + $0x60] sm:$0xff] %vm301, %v1485
      %1557 = vst.msk [vmem:[%s240 + $0x68] sm:$0xff] %vm301, %v1488
      %1558 = vst.msk [vmem:[%s240 + $0x70] sm:$0xff] %vm301, %v1491
      %1559 = vst.msk [vmem:[%s240 + $0x78] sm:$0xff] %vm301, %v1494
      %1560 = vst.msk [vmem:[%s240 + $0x80] sm:$0xff] %vm301, %v1497
      %1561 = vst.msk [vmem:[%s240 + $0x88] sm:$0xff] %vm301, %v1500
      %1562 = vst.msk [vmem:[%s240 + $0x90] sm:$0xff] %vm301, %v1503
      %1563 = vst.msk [vmem:[%s240 + $0x98] sm:$0xff] %vm301, %v1506
      %1564 = vst.msk [vmem:[%s240 + $0xa0] sm:$0xff] %vm301, %v1509
      %1565 = vst.msk [vmem:[%s240 + $0xa8] sm:$0xff] %vm301, %v1512
      %1566 = vst.msk [vmem:[%s240 + $0xb0] sm:$0xff] %vm301, %v1515
      %1567 = vst.msk [vmem:[%s240 + $0xb8] sm:$0xff] %vm301, %v1518
      %1568 = vst.msk [vmem:[%s240 + $0xc0] sm:$0xff] %vm301, %v1521
      %1569 = vst.msk [vmem:[%s240 + $0xc8] sm:$0xff] %vm301, %v1524
      %1570 = vst.msk [vmem:[%s240 + $0xd0] sm:$0xff] %vm301, %v1527
      %1571 = vst.msk [vmem:[%s240 + $0xd8] sm:$0xff] %vm301, %v1530
      %1572 = vst.msk [vmem:[%s240 + $0xe0] sm:$0xff] %vm301, %v1533
      %1573 = vst.msk [vmem:[%s240 + $0xe8] sm:$0xff] %vm301, %v1536
      %1574 = vst.msk [vmem:[%s240 + $0xf0] sm:$0xff] %vm301, %v1539
      %1575 = vst.msk [vmem:[%s240 + $0xf8] sm:$0xff] %vm301, %v1542
      %vm1576 = vcmask 7168
      %1577 = vst.msk [vmem:[%s246] sm:$0xff] %vm1576, %v737
      %1578 = vst.msk [vmem:[%s246 + $0x8] sm:$0xff] %vm1576, %v751
      %1579 = vst.msk [vmem:[%s246 + $0x10] sm:$0xff] %vm1576, %v765
      %1580 = vst.msk [vmem:[%s246 + $0x18] sm:$0xff] %vm1576, %v779
      %1581 = vst.msk [vmem:[%s246 + $0x20] sm:$0xff] %vm1576, %v793
      %1582 = vst.msk [vmem:[%s246 + $0x28] sm:$0xff] %vm1576, %v807
      %1583 = vst.msk [vmem:[%s246 + $0x30] sm:$0xff] %vm1576, %v821
      %1584 = vst.msk [vmem:[%s246 + $0x38] sm:$0xff] %vm1576, %v835
      %1585 = vst.msk [vmem:[%s246 + $0x40] sm:$0xff] %vm1576, %v849
      %1586 = vst.msk [vmem:[%s246 + $0x48] sm:$0xff] %vm1576, %v863
      %1587 = vst.msk [vmem:[%s246 + $0x50] sm:$0xff] %vm1576, %v877
      %1588 = vst.msk [vmem:[%s246 + $0x58] sm:$0xff] %vm1576, %v891
      %1589 = vst.msk [vmem:[%s246 + $0x60] sm:$0xff] %vm1576, %v905
      %1590 = vst.msk [vmem:[%s246 + $0x68] sm:$0xff] %vm1576, %v919
      %1591 = vst.msk [vmem:[%s246 + $0x70] sm:$0xff] %vm1576, %v933
      %1592 = vst.msk [vmem:[%s246 + $0x78] sm:$0xff] %vm1576, %v947
      %1593 = vst.msk [vmem:[%s246 + $0x80] sm:$0xff] %vm1576, %v961
      %1594 = vst.msk [vmem:[%s246 + $0x88] sm:$0xff] %vm1576, %v975
      %1595 = vst.msk [vmem:[%s246 + $0x90] sm:$0xff] %vm1576, %v989
      %1596 = vst.msk [vmem:[%s246 + $0x98] sm:$0xff] %vm1576, %v1003
      %1597 = vst.msk [vmem:[%s246 + $0xa0] sm:$0xff] %vm1576, %v1017
      %1598 = vst.msk [vmem:[%s246 + $0xa8] sm:$0xff] %vm1576, %v1031
      %1599 = vst.msk [vmem:[%s246 + $0xb0] sm:$0xff] %vm1576, %v1045
      %1600 = vst.msk [vmem:[%s246 + $0xb8] sm:$0xff] %vm1576, %v1059
      %1601 = vst.msk [vmem:[%s246 + $0xc0] sm:$0xff] %vm1576, %v1073
      %1602 = vst.msk [vmem:[%s246 + $0xc8] sm:$0xff] %vm1576, %v1087
      %1603 = vst.msk [vmem:[%s246 + $0xd0] sm:$0xff] %vm1576, %v1101
      %1604 = vst.msk [vmem:[%s246 + $0xd8] sm:$0xff] %vm1576, %v1115
      %1605 = vst.msk [vmem:[%s246 + $0xe0] sm:$0xff] %vm1576, %v1129
      %1606 = vst.msk [vmem:[%s246 + $0xe8] sm:$0xff] %vm1576, %v1143
      %1607 = vst.msk [vmem:[%s246 + $0xf0] sm:$0xff] %vm1576, %v1157
      %1608 = vst.msk [vmem:[%s246 + $0xf8] sm:$0xff] %vm1576, %v1171
      %v1609 = vsub.f32 %v1449, %v252
      %v1610 = vsub.f32 %v1452, %v253
      %v1611 = vsub.f32 %v1455, %v254
      %v1612 = vsub.f32 %v1458, %v255
      %v1613 = vsub.f32 %v1461, %v256
      %v1614 = vsub.f32 %v1464, %v257
      %v1615 = vsub.f32 %v1467, %v258
      %v1616 = vsub.f32 %v1470, %v259
      %v1617 = vsub.f32 %v1473, %v260
      %v1618 = vsub.f32 %v1476, %v261
      %v1619 = vsub.f32 %v1479, %v262
      %v1620 = vsub.f32 %v1482, %v263
      %v1621 = vsub.f32 %v1485, %v264
      %v1622 = vsub.f32 %v1488, %v265
      %v1623 = vsub.f32 %v1491, %v266
      %v1624 = vsub.f32 %v1494, %v267
      %v1625 = vsub.f32 %v1497, %v268
      %v1626 = vsub.f32 %v1500, %v269
      %v1627 = vsub.f32 %v1503, %v270
      %v1628 = vsub.f32 %v1506, %v271
      %v1629 = vsub.f32 %v1509, %v272
      %v1630 = vsub.f32 %v1512, %v273
      %v1631 = vsub.f32 %v1515, %v274
      %v1632 = vsub.f32 %v1518, %v275
      %v1633 = vsub.f32 %v1521, %v276
      %v1634 = vsub.f32 %v1524, %v277
      %v1635 = vsub.f32 %v1527, %v278
      %v1636 = vsub.f32 %v1530, %v279
      %v1637 = vsub.f32 %v1533, %v280
      %v1638 = vsub.f32 %v1536, %v281
      %v1639 = vsub.f32 %v1539, %v282
      %v1640 = vsub.f32 %v1542, %v283
      %v1641 = vmul.f32 %v1609, %v1609
      %v1642 = vmul.f32 %v1610, %v1610
      %v1643 = vmul.f32 %v1611, %v1611
      %v1644 = vmul.f32 %v1612, %v1612
      %v1645 = vmul.f32 %v1613, %v1613
      %v1646 = vmul.f32 %v1614, %v1614
      %v1647 = vmul.f32 %v1615, %v1615
      %v1648 = vmul.f32 %v1616, %v1616
      %v1649 = vmul.f32 %v1617, %v1617
      %v1650 = vmul.f32 %v1618, %v1618
      %v1651 = vmul.f32 %v1619, %v1619
      %v1652 = vmul.f32 %v1620, %v1620
      %v1653 = vmul.f32 %v1621, %v1621
      %v1654 = vmul.f32 %v1622, %v1622
      %v1655 = vmul.f32 %v1623, %v1623
      %v1656 = vmul.f32 %v1624, %v1624
      %v1657 = vmul.f32 %v1625, %v1625
      %v1658 = vmul.f32 %v1626, %v1626
      %v1659 = vmul.f32 %v1627, %v1627
      %v1660 = vmul.f32 %v1628, %v1628
      %v1661 = vmul.f32 %v1629, %v1629
      %v1662 = vmul.f32 %v1630, %v1630
      %v1663 = vmul.f32 %v1631, %v1631
      %v1664 = vmul.f32 %v1632, %v1632
      %v1665 = vmul.f32 %v1633, %v1633
      %v1666 = vmul.f32 %v1634, %v1634
      %v1667 = vmul.f32 %v1635, %v1635
      %v1668 = vmul.f32 %v1636, %v1636
      %v1669 = vmul.f32 %v1637, %v1637
      %v1670 = vmul.f32 %v1638, %v1638
      %v1671 = vmul.f32 %v1639, %v1639
      %v1672 = vmul.f32 %v1640, %v1640
      %v1673 = vsel %vm301, %v1641, 0.0
      %v1674 = vsel %vm301, %v1642, 0.0
      %v1675 = vadd.f32 %v1673, %v1674
      %v1676 = vsel %vm301, %v1643, 0.0
      %v1677 = vadd.f32 %v1675, %v1676
      %v1678 = vsel %vm301, %v1644, 0.0
      %v1679 = vadd.f32 %v1677, %v1678
      %v1680 = vsel %vm301, %v1645, 0.0
      %v1681 = vadd.f32 %v1679, %v1680
      %v1682 = vsel %vm301, %v1646, 0.0
      %v1683 = vadd.f32 %v1681, %v1682
      %v1684 = vsel %vm301, %v1647, 0.0
      %v1685 = vadd.f32 %v1683, %v1684
      %v1686 = vsel %vm301, %v1648, 0.0
      %v1687 = vadd.f32 %v1685, %v1686
      %v1688 = vsel %vm301, %v1649, 0.0
      %v1689 = vadd.f32 %v1687, %v1688
      %v1690 = vsel %vm301, %v1650, 0.0
      %v1691 = vadd.f32 %v1689, %v1690
      %v1692 = vsel %vm301, %v1651, 0.0
      %v1693 = vadd.f32 %v1691, %v1692
      %v1694 = vsel %vm301, %v1652, 0.0
      %v1695 = vadd.f32 %v1693, %v1694
      %v1696 = vsel %vm301, %v1653, 0.0
      %v1697 = vadd.f32 %v1695, %v1696
      %v1698 = vsel %vm301, %v1654, 0.0
      %v1699 = vadd.f32 %v1697, %v1698
      %v1700 = vsel %vm301, %v1655, 0.0
      %v1701 = vadd.f32 %v1699, %v1700
      %v1702 = vsel %vm301, %v1656, 0.0
      %v1703 = vadd.f32 %v1701, %v1702
      %v1704 = vsel %vm301, %v1657, 0.0
      %v1705 = vadd.f32 %v1703, %v1704
      %v1706 = vsel %vm301, %v1658, 0.0
      %v1707 = vadd.f32 %v1705, %v1706
      %v1708 = vsel %vm301, %v1659, 0.0
      %v1709 = vadd.f32 %v1707, %v1708
      %v1710 = vsel %vm301, %v1660, 0.0
      %v1711 = vadd.f32 %v1709, %v1710
      %v1712 = vsel %vm301, %v1661, 0.0
      %v1713 = vadd.f32 %v1711, %v1712
      %v1714 = vsel %vm301, %v1662, 0.0
      %v1715 = vadd.f32 %v1713, %v1714
      %v1716 = vsel %vm301, %v1663, 0.0
      %v1717 = vadd.f32 %v1715, %v1716
      %v1718 = vsel %vm301, %v1664, 0.0
      %v1719 = vadd.f32 %v1717, %v1718
      %v1720 = vsel %vm301, %v1665, 0.0
      %v1721 = vadd.f32 %v1719, %v1720
      %v1722 = vsel %vm301, %v1666, 0.0
      %v1723 = vadd.f32 %v1721, %v1722
      %v1724 = vsel %vm301, %v1667, 0.0
      %v1725 = vadd.f32 %v1723, %v1724
      %v1726 = vsel %vm301, %v1668, 0.0
      %v1727 = vadd.f32 %v1725, %v1726
      %v1728 = vsel %vm301, %v1669, 0.0
      %v1729 = vadd.f32 %v1727, %v1728
      %v1730 = vsel %vm301, %v1670, 0.0
      %v1731 = vadd.f32 %v1729, %v1730
      %v1732 = vsel %vm301, %v1671, 0.0
      %v1733 = vadd.f32 %v1731, %v1732
      %v1734 = vsel %vm301, %v1672, 0.0
      %v1735 = vadd.f32 %v1733, %v1734
      %1736 = vadd.xlane.f32.xlu0 %v1735
      %v1737 = vpop.xlane.xlu0 %1736
      %v1738 = vrot.slane %v1737, 4
      %v1739 = vadd.f32 %v1737, %v1738
      %v1740 = vrot.slane %v1739, 2
      %v1741 = vadd.f32 %v1739, %v1740
      %v1742 = vrot.slane %v1741, 1
      %v1743 = vadd.f32 %v1741, %v1742
      %s1744 = vtos %v1743
      %v1745 = vadd.f32 %v1399, %v1400
      %v1746 = vadd.f32 %v1745, %v1401
      %v1747 = vadd.f32 %v1746, %v1402
      %v1748 = vadd.f32 %v1747, %v1403
      %v1749 = vadd.f32 %v1748, %v1404
      %v1750 = vadd.f32 %v1749, %v1405
      %v1751 = vadd.f32 %v1750, %v1406
      %v1752 = vadd.f32 %v1751, %v1407
      %v1753 = vadd.f32 %v1752, %v1408
      %v1754 = vadd.f32 %v1753, %v1409
      %v1755 = vadd.f32 %v1754, %v1410
      %v1756 = vadd.f32 %v1755, %v1411
      %v1757 = vadd.f32 %v1756, %v1412
      %v1758 = vadd.f32 %v1757, %v1413
      %v1759 = vadd.f32 %v1758, %v1414
      %v1760 = vadd.f32 %v1759, %v1415
      %v1761 = vadd.f32 %v1760, %v1416
      %v1762 = vadd.f32 %v1761, %v1417
      %v1763 = vadd.f32 %v1762, %v1418
      %v1764 = vadd.f32 %v1763, %v1419
      %v1765 = vadd.f32 %v1764, %v1420
      %v1766 = vadd.f32 %v1765, %v1421
      %v1767 = vadd.f32 %v1766, %v1422
      %v1768 = vadd.f32 %v1767, %v1423
      %v1769 = vadd.f32 %v1768, %v1424
      %v1770 = vadd.f32 %v1769, %v1425
      %v1771 = vadd.f32 %v1770, %v1426
      %v1772 = vadd.f32 %v1771, %v1427
      %v1773 = vadd.f32 %v1772, %v1428
      %v1774 = vadd.f32 %v1773, %v1429
      %v1775 = vadd.f32 %v1774, %v1430
      %v1776 = vrot.slane %v1775, 4
      %v1777 = vadd.f32 %v1775, %v1776
      %v1778 = vrot.slane %v1777, 2
      %v1779 = vadd.f32 %v1777, %v1778
      %v1780 = vrot.slane %v1779, 1
      %v1781 = vadd.f32 %v1779, %v1780
      %vm1782 = vcmp.eq.s32.totalorder %v1174, 0
      %v1783 = vsel %vm1782, %v1781, 0.0
      %vm1784 = vcmp.eq.s32.totalorder %v1174, 1
      %vm1785 = vcmp.eq.s32.totalorder %v659, 0
      %vm1786 = vmand %vm1784, %vm1785
      %v1787 = vstv %s1744
      %v1788 = vsel %vm1786, %v1787, %v1783
      %1789 = vst [vmem:[%s251] sm:$0xff] %v1788
      %s1790 = smul.u32 32, %s17
      %p1791 = scmp.lt.s32.totalorder %s1790, 63
      %s1792 = scalar_select %p1791, %s1790, 63
      %s1793 = smul.addr %s1792, 8
      %s1794 = scalar_lea.vmem %s3, %s1793
      %s1795 = smul.u32 32, %s17
      %p1796 = scmp.lt.s32.totalorder %s1795, 63
      %s1797 = scalar_select %p1796, %s1795, 63
      %s1798 = smul.addr %s1797, 8
      %s1799 = scalar_lea.vmem %s4, %s1798
      %p1800 = scmp.lt.s32.totalorder %s17, 1
      %s1801 = scalar_select %p1800, %s17, 1
      %s1802 = smul.addr %s1801, 8
      %s1803 = scalar_lea.vmem %s5, %s1802
      // Predicated region
      $region33: #{_forward_impl.1} parent=31 // pred_check
        %p1804 = pneg %p103
      $region34: #{_forward_impl.1} parent=31 // pred_check_branch
        %1806 = sbr.rel (%p1804) target = $region36
      $region35: #{_forward_impl.1} parent=31 // pred_region
        %s1807 = smul.u32 32, %s17
      $region36: #{_forward_impl.1} parent=31 // pred_fallthru
        _
      // Predicated region
      $region37: #{_forward_impl.1} parent=31 // pred_check
        %p1808 = pneg %p129
      $region38: #{_forward_impl.1} parent=31 // pred_check_branch
        %1810 = sbr.rel (%p1808) target = $region40
      $region39: #{_forward_impl.1} parent=31 // pred_region
        %s1811 = smul.u32 32, %s17
      $region40: #{_forward_impl.1} parent=31 // pred_fallthru
        _
      // Predicated region
      $region41: #{_forward_impl.1} parent=31 // pred_check
        %p1812 = pneg %p155
      $region42: #{_forward_impl.1} parent=31 // pred_check_branch
        %1814 = sbr.rel (%p1812) target = $region44
      $region43: #{_forward_impl.1} parent=31 // pred_region
        _
      $region44: #{_forward_impl.1} parent=31 // pred_fallthru
        _
    $region32: #{_forward_impl.1} parent=5 // pred_fallthru
      _
    %p1815 = scmp.le.s32.totalorder 2, %s12
    // Predicated region
    $region45: #{_forward_impl.1} parent=5 // pred_check
      %p1816 = pneg %p1815
    $region46: #{_forward_impl.1} parent=5 // pred_check_branch
      %1818 = sbr.rel (%p1816) target = $region48
    $region47: #{_forward_impl.1} parent=5 // pred_region
      %s1819 = ssub.s32 %s12, 2
      // Predicated region
      $region49: #{_forward_impl.1} parent=47 // pred_check
        %p1820 = pneg %p109
      $region50: #{_forward_impl.1} parent=47 // pred_check_branch
        %1822 = sbr.rel (%p1820) target = $region52
      $region51: #{_forward_impl.1} parent=47 // pred_region
        %s1823 = smul.u32 32, %s18
        %p1824 = scmp.lt.s32.totalorder %s1823, 63
        %s1825 = scalar_select %p1824, %s1823, 63
        %s1826 = smul.addr %s1825, 8
        %s1827 = scalar_lea.vmem %s3, %s1826
      $region52: #{_forward_impl.1} parent=47 // pred_fallthru
        _
      // Predicated region
      $region53: #{_forward_impl.1} parent=47 // pred_check
        %p1828 = pneg %p135
      $region54: #{_forward_impl.1} parent=47 // pred_check_branch
        %1830 = sbr.rel (%p1828) target = $region56
      $region55: #{_forward_impl.1} parent=47 // pred_region
        %s1831 = smul.u32 32, %s18
        %p1832 = scmp.lt.s32.totalorder %s1831, 63
        %s1833 = scalar_select %p1832, %s1831, 63
        %s1834 = smul.addr %s1833, 8
        %s1835 = scalar_lea.vmem %s4, %s1834
      $region56: #{_forward_impl.1} parent=47 // pred_fallthru
        _
      // Predicated region
      $region57: #{_forward_impl.1} parent=47 // pred_check
        %p1836 = pneg %p161
      $region58: #{_forward_impl.1} parent=47 // pred_check_branch
        %1838 = sbr.rel (%p1836) target = $region60
      $region59: #{_forward_impl.1} parent=47 // pred_region
        %p1839 = scmp.lt.s32.totalorder %s18, 1
        %s1840 = scalar_select %p1839, %s18, 1
        %s1841 = smul.addr %s1840, 8
        %s1842 = scalar_lea.vmem %s5, %s1841
      $region60: #{_forward_impl.1} parent=47 // pred_fallthru
        _
    $region48: #{_forward_impl.1} parent=5 // pred_fallthru
      _
  $region6: #{_forward_impl.1} parent=0 // loop_footer
    %s16 = sadd.s32 1, %s12
  $region7: #{_forward_impl.1} parent=0 // loop_footer_branch
    %11 = sbr.rel target = $region3
  $region8: #{_forward_impl.1} parent=0 // loop_exit
    _

</llo_original>
